<compile_context>
chip_gen: v7x
topology: tpu7x:2x2x1
jax: 0.10.0
libtpu: 0.0.40
codegen_flags: <defaults>
</compile_context>

<pallas_src>
import jax
import jax.numpy as jnp
from jax import lax
from jax.experimental import pallas as pl
from jax.experimental.pallas import tpu as pltpu

C = 64   # fixed by the module definition (in_channels = out_channels = 64)
K = 3    # kernel size


def _round_up(x, m):
    return ((x + m - 1) // m) * m


def _residual_block_kernel(x_ref, w1_ref, w2_ref, out_ref, patch_ref, res_ref):
    """Fused conv3x3 -> ReLU -> conv3x3 -> +x for `bt` images per grid step.

    x_ref    : (bt, H, W, C)          input (also the residual source)
    w1_ref   : (3C, 3C)  bf16         conv1 weights, [kx*C+ci, ky*C+co]
    w2_ref   : (3C, 3C)  bf16         conv2 weights, same layout
    out_ref  : (bt, H, W, C)          output
    patch_ref: (H+2, Wq, 3C) bf16     persistent im2col patch (kx in channels)
    res_ref  : (H+2, Wq, 3C) f32      persistent matmul partial sums (ky in ch)
    """
    bt, H, W, _ = x_ref.shape
    Hp, Wq, C3 = patch_ref.shape
    bf16, f32 = jnp.bfloat16, jnp.float32

    # Zero the patch halo once per grid step.  The interior fills below never
    # touch these regions, so they stay valid for both convs and all images of
    # the step; re-zeroing every step keeps the kernel correct under any grid
    # sharding (megacore "parallel" splits) at negligible cost.
    patch_ref[0:1] = jnp.zeros((1, Wq, C3), bf16)                       # top pad row
    patch_ref[H + 1:Hp] = jnp.zeros((Hp - H - 1, Wq, C3), bf16)         # bottom pad row
    patch_ref[:, 0:1, 0:C] = jnp.zeros((Hp, 1, C), bf16)                # left pad, kx=0
    patch_ref[:, W - 1:W, 2 * C:3 * C] = jnp.zeros((Hp, 1, C), bf16)    # right pad, kx=2
    if Wq > W:                                                          # lane-tile padding cols
        patch_ref[:, W:Wq, :] = jnp.zeros((Hp, Wq - W, C3), bf16)

    def fill_patch(src):
        # src: (H, W, C) bf16 conv input.  patch[r, x, kx*C+ci] = src_pad[r, x+kx, ci]
        patch_ref[1:H + 1, 1:W, 0:C] = src[:, 0:W - 1]
        patch_ref[1:H + 1, 0:W, C:2 * C] = src
        patch_ref[1:H + 1, 0:W - 1, 2 * C:3 * C] = src[:, 1:W]

    def conv3x3(w_ref):
        # One K=192 x N=192 MXU matmul per row chunk (chunked to bound vreg
        # pressure), then three row-shifted f32 adds to recover the ky taps.
        w = w_ref[...]
        rows = max(1, 128 // Wq)
        for r0 in range(0, Hp, rows):
            r1 = min(r0 + rows, Hp)
            p2 = patch_ref[r0:r1].reshape((r1 - r0) * Wq, C3)
            res_ref[r0:r1] = jnp.dot(
                p2, w, preferred_element_type=f32).reshape(r1 - r0, Wq, C3)
        return (res_ref[0:H, 0:W, 0:C]
                + res_ref[1:H + 1, 0:W, C:2 * C]
                + res_ref[2:H + 2, 0:W, 2 * C:3 * C])

    for b in range(bt):                       # static unroll; bt is small
        fill_patch(x_ref[b].astype(bf16))                     # conv1 input (1 cast pass)
        y1 = conv3x3(w1_ref)                                  # f32
        fill_patch(jnp.maximum(y1, 0.0).astype(bf16))         # ReLU -> conv2 input
        y2 = conv3x3(w2_ref)                                  # f32
        out_ref[b] = (y2 + x_ref[b].astype(f32)).astype(out_ref.dtype)


def _vmem_limit_bytes():
    """~80% of the physical per-core VMEM (generation-aware, safe fallback)."""
    try:
        cap = int(pltpu.get_tpu_info().vmem_capacity_bytes)
    except Exception:
        cap = 0
    if cap <= 0:
        cap = 64 * 1024 * 1024        # conservative: v7x per-TensorCore VMEM
    return max(32 * 1024 * 1024, min(int(0.8 * cap), 110 * 1024 * 1024))


def _pick_batch_tile(B, H, W, itemsize, vmem_limit_bytes):
    """Images per grid step: fits the VMEM budget and keeps >= 2-4 grid steps."""
    Wq = _round_up(W, 16)
    img = H * W * C * itemsize
    per_image = 4 * img                                   # x + out blocks, double-buffered
    fixed = ((H + 2) * Wq * 3 * C * (2 + 4)               # bf16 patch + f32 res scratch
             + 4 * (3 * C) * (3 * C) * 2                  # both weight blocks, dbl-buffered
             + 10 * H * W * C * 4)                        # in-kernel value temporaries
    budget = int(0.7 * vmem_limit_bytes) - fixed
    bt = max(1, min(B, budget // max(per_image, 1), 8))
    if B >= 4:                                            # keep >= ~4 grid steps
        bt = min(bt, max(1, B // 4))
    elif B >= 2:                                          # at least 2 steps (v7x megacore)
        bt = 1
    while B % bt:
        bt -= 1
    return bt


def _prep_weights(w_oihw):
    # OIHW -> W2d[kx*C+ci, ky*C+co] = w[co, ci, ky, kx]; bf16 MXU operand.
    w = jnp.transpose(w_oihw, (3, 1, 2, 0)).reshape(K * C, K * C)
    return w.astype(jnp.bfloat16)


def residual_block_nhwc(x_nhwc, w1_oihw, w2_oihw):
    """Forward pass, NHWC in / NHWC out (preferred when stacking blocks)."""
    B, H, W, Cin = x_nhwc.shape
    assert Cin == C and W >= 2, x_nhwc.shape

    w1 = _prep_weights(w1_oihw)
    w2 = _prep_weights(w2_oihw)

    vmem_limit = _vmem_limit_bytes()
    bt = _pick_batch_tile(B, H, W, x_nhwc.dtype.itemsize, vmem_limit)
    Wq = _round_up(W, 16)

    return pl.pallas_call(
        _residual_block_kernel,
        out_shape=jax.ShapeDtypeStruct((B, H, W, C), x_nhwc.dtype),
        grid_spec=pltpu.PrefetchScalarGridSpec(
            num_scalar_prefetch=0,
            grid=(B // bt,),
            in_specs=[
                pl.BlockSpec((bt, H, W, C), lambda b: (b, 0, 0, 0)),
                pl.BlockSpec((K * C, K * C), lambda b: (0, 0)),
                pl.BlockSpec((K * C, K * C), lambda b: (0, 0)),
            ],
            out_specs=pl.BlockSpec((bt, H, W, C), lambda b: (b, 0, 0, 0)),
            scratch_shapes=[
                pltpu.VMEM((H + 2, Wq, K * C), jnp.bfloat16),   # im2col patch
                pltpu.VMEM((H + 2, Wq, K * C), jnp.float32),    # matmul partials
            ],
        ),
        compiler_params=pltpu.CompilerParams(
            dimension_semantics=("parallel",),
            vmem_limit_bytes=vmem_limit),
    )(x_nhwc, w1, w2)


def residual_block(x_nchw, w1_oihw, w2_oihw):
    """PyTorch-layout entry point: (B, 64, H, W) -> (B, 64, H, W).

    In a stacked network keep activations NHWC and call residual_block_nhwc
    directly; these two transposes should only live at the model boundary.
    """
    out_nhwc = residual_block_nhwc(jnp.transpose(x_nchw, (0, 2, 3, 1)),
                                   w1_oihw, w2_oihw)
    return jnp.transpose(out_nhwc, (0, 3, 1, 2))


def _reference(x_nchw, w1_oihw, w2_oihw):
    dn = ("NCHW", "OIHW", "NCHW")
    y = lax.conv_general_dilated(x_nchw, w1_oihw, (1, 1), "SAME",
                                 dimension_numbers=dn)
    y = jnp.maximum(y, 0.0)
    y = lax.conv_general_dilated(y, w2_oihw, (1, 1), "SAME",
                                 dimension_numbers=dn)
    return y + x_nchw


if __name__ == "__main__":
    key = jax.random.PRNGKey(0)
    kx_, kw1, kw2 = jax.random.split(key, 3)

    B, H, W = 2, 16, 16
    x = jax.random.normal(kx_, (B, C, H, W), jnp.float32)
    # deterministic synthetic weights (PyTorch shape: (out_ch, in_ch, 3, 3))
    w1 = jax.random.normal(kw1, (C, C, K, K), jnp.float32) * 0.05
    w2 = jax.random.normal(kw2, (C, C, K, K), jnp.float32) * 0.05

    out = jax.block_until_ready(residual_block(x, w1, w2))
    ref = jax.block_until_ready(_reference(x, w1, w2))

    assert out.shape == (B, C, H, W), out.shape
    # bf16 MXU operands with f32 accumulation; tolerance sized for bf16
    # operand rounding in two stacked convs vs the f32 XLA reference.
    max_err = float(jnp.max(jnp.abs(out - ref)))
    assert jnp.allclose(out, ref, atol=4e-2, rtol=4e-2), max_err
    print("KERNEL_OK")
</pallas_src>

<mosaic_0001>
module attributes {stable_mosaic.version = 11 : i64} {
  func.func @_residual_block_kernel(%arg0: i32, %arg1: memref<1x16x16x64xf32, #tpu.memory_space<vmem>>, %arg2: memref<192x192xbf16, #tpu.memory_space<vmem>>, %arg3: memref<192x192xbf16, #tpu.memory_space<vmem>>, %arg4: memref<1x16x16x64xf32, #tpu.memory_space<vmem>>, %arg5: memref<18x16x192xbf16, #tpu.memory_space<vmem>>, %arg6: memref<18x16x192xf32, #tpu.memory_space<vmem>>) attributes {dimension_semantics = [#tpu.dimension_semantics<parallel>], iteration_bounds = array<i64: 2>, scalar_prefetch = 0 : i64, scratch_operands = 2 : i64, tpu.core_type = #tpu.core_type<tc>, window_params = [{transform_indices = @transform_0, window_bounds = array<i64: 1, 16, 16, 64>}, {pipeline_mode = #tpu.pipeline_mode<synchronous>, transform_indices = @transform_1, window_bounds = array<i64: 192, 192>}, {pipeline_mode = #tpu.pipeline_mode<synchronous>, transform_indices = @transform_2, window_bounds = array<i64: 192, 192>}, {transform_indices = @transform_3, window_bounds = array<i64: 1, 16, 16, 64>}]} {
    %cst = arith.constant 0.000000e+00 : bf16
    %0 = vector.broadcast %cst : bf16 to vector<1x16x192xbf16>
    %c0 = arith.constant 0 : index
    %c0_0 = arith.constant 0 : index
    %c0_1 = arith.constant 0 : index
    %1 = vector.load %arg5[%c0, %c0_0, %c0_1] : memref<18x16x192xbf16, #tpu.memory_space<vmem>>, vector<1x16x192xbf16>
    tpu.vector_store %arg5[%c0, %c0_0, %c0_1], %0 {strides = array<i32>} : memref<18x16x192xbf16, #tpu.memory_space<vmem>>, vector<1x16x192xbf16>,
    %cst_2 = arith.constant 0.000000e+00 : bf16
    %2 = vector.broadcast %cst_2 : bf16 to vector<1x16x192xbf16>
    %c17 = arith.constant 17 : index
    %c0_3 = arith.constant 0 : index
    %c0_4 = arith.constant 0 : index
    %3 = vector.load %arg5[%c17, %c0_3, %c0_4] : memref<18x16x192xbf16, #tpu.memory_space<vmem>>, vector<1x16x192xbf16>
    tpu.vector_store %arg5[%c17, %c0_3, %c0_4], %2 {strides = array<i32>} : memref<18x16x192xbf16, #tpu.memory_space<vmem>>, vector<1x16x192xbf16>,
    %cst_5 = arith.constant 0.000000e+00 : bf16
    %4 = vector.broadcast %cst_5 : bf16 to vector<18x1x64xbf16>
    %c0_6 = arith.constant 0 : index
    %c0_7 = arith.constant 0 : index
    %c0_8 = arith.constant 0 : index
    %5 = vector.load %arg5[%c0_6, %c0_7, %c0_8] : memref<18x16x192xbf16, #tpu.memory_space<vmem>>, vector<18x1x64xbf16>
    tpu.vector_store %arg5[%c0_6, %c0_7, %c0_8], %4 {strides = array<i32>} : memref<18x16x192xbf16, #tpu.memory_space<vmem>>, vector<18x1x64xbf16>,
    %cst_9 = arith.constant 0.000000e+00 : bf16
    %6 = vector.broadcast %cst_9 : bf16 to vector<18x1x64xbf16>
    %c0_10 = arith.constant 0 : index
    %c15 = arith.constant 15 : index
    %c128 = arith.constant 128 : index
    %7 = vector.load %arg5[%c0_10, %c15, %c128] : memref<18x16x192xbf16, #tpu.memory_space<vmem>>, vector<18x1x64xbf16>
    tpu.vector_store %arg5[%c0_10, %c15, %c128], %6 {strides = array<i32>} : memref<18x16x192xbf16, #tpu.memory_space<vmem>>, vector<18x1x64xbf16>,
    %c0_11 = arith.constant 0 : index
    %c0_12 = arith.constant 0 : index
    %c0_13 = arith.constant 0 : index
    %c0_14 = arith.constant 0 : index
    %8 = vector.load %arg1[%c0_11, %c0_12, %c0_13, %c0_14] : memref<1x16x16x64xf32, #tpu.memory_space<vmem>>, vector<1x16x16x64xf32>
    %9 = vector.shape_cast %8 : vector<1x16x16x64xf32> to vector<16x16x64xf32>
    %10 = arith.truncf %9 : vector<16x16x64xf32> to vector<16x16x64xbf16>
    %11 = vector.extract_strided_slice %10 {offsets = [0, 0, 0], sizes = [16, 15, 64], strides = [1, 1, 1]} : vector<16x16x64xbf16> to vector<16x15x64xbf16>
    %c1 = arith.constant 1 : index
    %c1_15 = arith.constant 1 : index
    %c0_16 = arith.constant 0 : index
    %12 = vector.load %arg5[%c1, %c1_15, %c0_16] : memref<18x16x192xbf16, #tpu.memory_space<vmem>>, vector<16x15x64xbf16>
    tpu.vector_store %arg5[%c1, %c1_15, %c0_16], %11 {strides = array<i32>} : memref<18x16x192xbf16, #tpu.memory_space<vmem>>, vector<16x15x64xbf16>,
    %c1_17 = arith.constant 1 : index
    %c0_18 = arith.constant 0 : index
    %c64 = arith.constant 64 : index
    %13 = vector.load %arg5[%c1_17, %c0_18, %c64] : memref<18x16x192xbf16, #tpu.memory_space<vmem>>, vector<16x16x64xbf16>
    tpu.vector_store %arg5[%c1_17, %c0_18, %c64], %10 {strides = array<i32>} : memref<18x16x192xbf16, #tpu.memory_space<vmem>>, vector<16x16x64xbf16>,
    %14 = vector.extract_strided_slice %10 {offsets = [0, 1, 0], sizes = [16, 15, 64], strides = [1, 1, 1]} : vector<16x16x64xbf16> to vector<16x15x64xbf16>
    %c1_19 = arith.constant 1 : index
    %c0_20 = arith.constant 0 : index
    %c128_21 = arith.constant 128 : index
    %15 = vector.load %arg5[%c1_19, %c0_20, %c128_21] : memref<18x16x192xbf16, #tpu.memory_space<vmem>>, vector<16x15x64xbf16>
    tpu.vector_store %arg5[%c1_19, %c0_20, %c128_21], %14 {strides = array<i32>} : memref<18x16x192xbf16, #tpu.memory_space<vmem>>, vector<16x15x64xbf16>,
    %c0_22 = arith.constant 0 : index
    %c0_23 = arith.constant 0 : index
    %16 = vector.load %arg2[%c0_22, %c0_23] : memref<192x192xbf16, #tpu.memory_space<vmem>>, vector<192x192xbf16>
    %c0_24 = arith.constant 0 : index
    %c0_25 = arith.constant 0 : index
    %c0_26 = arith.constant 0 : index
    %17 = vector.load %arg5[%c0_24, %c0_25, %c0_26] : memref<18x16x192xbf16, #tpu.memory_space<vmem>>, vector<8x16x192xbf16>
    %18 = vector.shape_cast %17 : vector<8x16x192xbf16> to vector<128x192xbf16>
    %cst_27 = arith.constant dense<0.000000e+00> : vector<128x192xf32>
    %19 = tpu.matmul %18, %16, %cst_27 {dimension_numbers = #tpu.dot_dimension_numbers<[1], [0], [0], [1], [0, 0, 1, 1], [], []>} : vector<128x192xbf16>, vector<192x192xbf16>, vector<128x192xf32> -> vector<128x192xf32>
    %20 = vector.shape_cast %19 : vector<128x192xf32> to vector<8x16x192xf32>
    %c0_28 = arith.constant 0 : index
    %c0_29 = arith.constant 0 : index
    %c0_30 = arith.constant 0 : index
    %21 = vector.load %arg6[%c0_28, %c0_29, %c0_30] : memref<18x16x192xf32, #tpu.memory_space<vmem>>, vector<8x16x192xf32>
    tpu.vector_store %arg6[%c0_28, %c0_29, %c0_30], %20 {strides = array<i32>} : memref<18x16x192xf32, #tpu.memory_space<vmem>>, vector<8x16x192xf32>,
    %c8 = arith.constant 8 : index
    %c0_31 = arith.constant 0 : index
    %c0_32 = arith.constant 0 : index
    %22 = vector.load %arg5[%c8, %c0_31, %c0_32] : memref<18x16x192xbf16, #tpu.memory_space<vmem>>, vector<8x16x192xbf16>
    %23 = vector.shape_cast %22 : vector<8x16x192xbf16> to vector<128x192xbf16>
    %cst_33 = arith.constant dense<0.000000e+00> : vector<128x192xf32>
    %24 = tpu.matmul %23, %16, %cst_33 {dimension_numbers = #tpu.dot_dimension_numbers<[1], [0], [0], [1], [0, 0, 1, 1], [], []>} : vector<128x192xbf16>, vector<192x192xbf16>, vector<128x192xf32> -> vector<128x192xf32>
    %25 = vector.shape_cast %24 : vector<128x192xf32> to vector<8x16x192xf32>
    %c8_34 = arith.constant 8 : index
    %c0_35 = arith.constant 0 : index
    %c0_36 = arith.constant 0 : index
    %26 = vector.load %arg6[%c8_34, %c0_35, %c0_36] : memref<18x16x192xf32, #tpu.memory_space<vmem>>, vector<8x16x192xf32>
    tpu.vector_store %arg6[%c8_34, %c0_35, %c0_36], %25 {strides = array<i32>} : memref<18x16x192xf32, #tpu.memory_space<vmem>>, vector<8x16x192xf32>,
    %c16 = arith.constant 16 : index
    %c0_37 = arith.constant 0 : index
    %c0_38 = arith.constant 0 : index
    %27 = vector.load %arg5[%c16, %c0_37, %c0_38] : memref<18x16x192xbf16, #tpu.memory_space<vmem>>, vector<2x16x192xbf16>
    %28 = vector.shape_cast %27 : vector<2x16x192xbf16> to vector<32x192xbf16>
    %cst_39 = arith.constant dense<0.000000e+00> : vector<32x192xf32>
    %29 = tpu.matmul %28, %16, %cst_39 {dimension_numbers = #tpu.dot_dimension_numbers<[1], [0], [0], [1], [0, 0, 1, 1], [], []>} : vector<32x192xbf16>, vector<192x192xbf16>, vector<32x192xf32> -> vector<32x192xf32>
    %30 = vector.shape_cast %29 : vector<32x192xf32> to vector<2x16x192xf32>
    %c16_40 = arith.constant 16 : index
    %c0_41 = arith.constant 0 : index
    %c0_42 = arith.constant 0 : index
    %31 = vector.load %arg6[%c16_40, %c0_41, %c0_42] : memref<18x16x192xf32, #tpu.memory_space<vmem>>, vector<2x16x192xf32>
    tpu.vector_store %arg6[%c16_40, %c0_41, %c0_42], %30 {strides = array<i32>} : memref<18x16x192xf32, #tpu.memory_space<vmem>>, vector<2x16x192xf32>,
    %c0_43 = arith.constant 0 : index
    %c0_44 = arith.constant 0 : index
    %c0_45 = arith.constant 0 : index
    %32 = vector.load %arg6[%c0_43, %c0_44, %c0_45] : memref<18x16x192xf32, #tpu.memory_space<vmem>>, vector<16x16x64xf32>
    %c1_46 = arith.constant 1 : index
    %c0_47 = arith.constant 0 : index
    %c64_48 = arith.constant 64 : index
    %33 = vector.load %arg6[%c1_46, %c0_47, %c64_48] : memref<18x16x192xf32, #tpu.memory_space<vmem>>, vector<16x16x64xf32>
    %34 = arith.addf %32, %33 : vector<16x16x64xf32>
    %c2 = arith.constant 2 : index
    %c0_49 = arith.constant 0 : index
    %c128_50 = arith.constant 128 : index
    %35 = vector.load %arg6[%c2, %c0_49, %c128_50] : memref<18x16x192xf32, #tpu.memory_space<vmem>>, vector<16x16x64xf32>
    %36 = arith.addf %34, %35 : vector<16x16x64xf32>
    %cst_51 = arith.constant 0.000000e+00 : f32
    %37 = vector.broadcast %cst_51 : f32 to vector<16x16x64xf32>
    %38 = arith.maximumf %36, %37 : vector<16x16x64xf32>
    %39 = arith.truncf %38 : vector<16x16x64xf32> to vector<16x16x64xbf16>
    %40 = vector.extract_strided_slice %39 {offsets = [0, 0, 0], sizes = [16, 15, 64], strides = [1, 1, 1]} : vector<16x16x64xbf16> to vector<16x15x64xbf16>
    %c1_52 = arith.constant 1 : index
    %c1_53 = arith.constant 1 : index
    %c0_54 = arith.constant 0 : index
    %41 = vector.load %arg5[%c1_52, %c1_53, %c0_54] : memref<18x16x192xbf16, #tpu.memory_space<vmem>>, vector<16x15x64xbf16>
    tpu.vector_store %arg5[%c1_52, %c1_53, %c0_54], %40 {strides = array<i32>} : memref<18x16x192xbf16, #tpu.memory_space<vmem>>, vector<16x15x64xbf16>,
    %c1_55 = arith.constant 1 : index
    %c0_56 = arith.constant 0 : index
    %c64_57 = arith.constant 64 : index
    %42 = vector.load %arg5[%c1_55, %c0_56, %c64_57] : memref<18x16x192xbf16, #tpu.memory_space<vmem>>, vector<16x16x64xbf16>
    tpu.vector_store %arg5[%c1_55, %c0_56, %c64_57], %39 {strides = array<i32>} : memref<18x16x192xbf16, #tpu.memory_space<vmem>>, vector<16x16x64xbf16>,
    %43 = vector.extract_strided_slice %39 {offsets = [0, 1, 0], sizes = [16, 15, 64], strides = [1, 1, 1]} : vector<16x16x64xbf16> to vector<16x15x64xbf16>
    %c1_58 = arith.constant 1 : index
    %c0_59 = arith.constant 0 : index
    %c128_60 = arith.constant 128 : index
    %44 = vector.load %arg5[%c1_58, %c0_59, %c128_60] : memref<18x16x192xbf16, #tpu.memory_space<vmem>>, vector<16x15x64xbf16>
    tpu.vector_store %arg5[%c1_58, %c0_59, %c128_60], %43 {strides = array<i32>} : memref<18x16x192xbf16, #tpu.memory_space<vmem>>, vector<16x15x64xbf16>,
    %c0_61 = arith.constant 0 : index
    %c0_62 = arith.constant 0 : index
    %45 = vector.load %arg3[%c0_61, %c0_62] : memref<192x192xbf16, #tpu.memory_space<vmem>>, vector<192x192xbf16>
    %c0_63 = arith.constant 0 : index
    %c0_64 = arith.constant 0 : index
    %c0_65 = arith.constant 0 : index
    %46 = vector.load %arg5[%c0_63, %c0_64, %c0_65] : memref<18x16x192xbf16, #tpu.memory_space<vmem>>, vector<8x16x192xbf16>
    %47 = vector.shape_cast %46 : vector<8x16x192xbf16> to vector<128x192xbf16>
    %cst_66 = arith.constant dense<0.000000e+00> : vector<128x192xf32>
    %48 = tpu.matmul %47, %45, %cst_66 {dimension_numbers = #tpu.dot_dimension_numbers<[1], [0], [0], [1], [0, 0, 1, 1], [], []>} : vector<128x192xbf16>, vector<192x192xbf16>, vector<128x192xf32> -> vector<128x192xf32>
    %49 = vector.shape_cast %48 : vector<128x192xf32> to vector<8x16x192xf32>
    %c0_67 = arith.constant 0 : index
    %c0_68 = arith.constant 0 : index
    %c0_69 = arith.constant 0 : index
    %50 = vector.load %arg6[%c0_67, %c0_68, %c0_69] : memref<18x16x192xf32, #tpu.memory_space<vmem>>, vector<8x16x192xf32>
    tpu.vector_store %arg6[%c0_67, %c0_68, %c0_69], %49 {strides = array<i32>} : memref<18x16x192xf32, #tpu.memory_space<vmem>>, vector<8x16x192xf32>,
    %c8_70 = arith.constant 8 : index
    %c0_71 = arith.constant 0 : index
    %c0_72 = arith.constant 0 : index
    %51 = vector.load %arg5[%c8_70, %c0_71, %c0_72] : memref<18x16x192xbf16, #tpu.memory_space<vmem>>, vector<8x16x192xbf16>
    %52 = vector.shape_cast %51 : vector<8x16x192xbf16> to vector<128x192xbf16>
    %cst_73 = arith.constant dense<0.000000e+00> : vector<128x192xf32>
    %53 = tpu.matmul %52, %45, %cst_73 {dimension_numbers = #tpu.dot_dimension_numbers<[1], [0], [0], [1], [0, 0, 1, 1], [], []>} : vector<128x192xbf16>, vector<192x192xbf16>, vector<128x192xf32> -> vector<128x192xf32>
    %54 = vector.shape_cast %53 : vector<128x192xf32> to vector<8x16x192xf32>
    %c8_74 = arith.constant 8 : index
    %c0_75 = arith.constant 0 : index
    %c0_76 = arith.constant 0 : index
    %55 = vector.load %arg6[%c8_74, %c0_75, %c0_76] : memref<18x16x192xf32, #tpu.memory_space<vmem>>, vector<8x16x192xf32>
    tpu.vector_store %arg6[%c8_74, %c0_75, %c0_76], %54 {strides = array<i32>} : memref<18x16x192xf32, #tpu.memory_space<vmem>>, vector<8x16x192xf32>,
    %c16_77 = arith.constant 16 : index
    %c0_78 = arith.constant 0 : index
    %c0_79 = arith.constant 0 : index
    %56 = vector.load %arg5[%c16_77, %c0_78, %c0_79] : memref<18x16x192xbf16, #tpu.memory_space<vmem>>, vector<2x16x192xbf16>
    %57 = vector.shape_cast %56 : vector<2x16x192xbf16> to vector<32x192xbf16>
    %cst_80 = arith.constant dense<0.000000e+00> : vector<32x192xf32>
    %58 = tpu.matmul %57, %45, %cst_80 {dimension_numbers = #tpu.dot_dimension_numbers<[1], [0], [0], [1], [0, 0, 1, 1], [], []>} : vector<32x192xbf16>, vector<192x192xbf16>, vector<32x192xf32> -> vector<32x192xf32>
    %59 = vector.shape_cast %58 : vector<32x192xf32> to vector<2x16x192xf32>
    %c16_81 = arith.constant 16 : index
    %c0_82 = arith.constant 0 : index
    %c0_83 = arith.constant 0 : index
    %60 = vector.load %arg6[%c16_81, %c0_82, %c0_83] : memref<18x16x192xf32, #tpu.memory_space<vmem>>, vector<2x16x192xf32>
    tpu.vector_store %arg6[%c16_81, %c0_82, %c0_83], %59 {strides = array<i32>} : memref<18x16x192xf32, #tpu.memory_space<vmem>>, vector<2x16x192xf32>,
    %c0_84 = arith.constant 0 : index
    %c0_85 = arith.constant 0 : index
    %c0_86 = arith.constant 0 : index
    %61 = vector.load %arg6[%c0_84, %c0_85, %c0_86] : memref<18x16x192xf32, #tpu.memory_space<vmem>>, vector<16x16x64xf32>
    %c1_87 = arith.constant 1 : index
    %c0_88 = arith.constant 0 : index
    %c64_89 = arith.constant 64 : index
    %62 = vector.load %arg6[%c1_87, %c0_88, %c64_89] : memref<18x16x192xf32, #tpu.memory_space<vmem>>, vector<16x16x64xf32>
    %63 = arith.addf %61, %62 : vector<16x16x64xf32>
    %c2_90 = arith.constant 2 : index
    %c0_91 = arith.constant 0 : index
    %c128_92 = arith.constant 128 : index
    %64 = vector.load %arg6[%c2_90, %c0_91, %c128_92] : memref<18x16x192xf32, #tpu.memory_space<vmem>>, vector<16x16x64xf32>
    %65 = arith.addf %63, %64 : vector<16x16x64xf32>
    %c0_93 = arith.constant 0 : index
    %c0_94 = arith.constant 0 : index
    %c0_95 = arith.constant 0 : index
    %c0_96 = arith.constant 0 : index
    %66 = vector.load %arg1[%c0_93, %c0_94, %c0_95, %c0_96] : memref<1x16x16x64xf32, #tpu.memory_space<vmem>>, vector<1x16x16x64xf32>
    %67 = vector.shape_cast %66 : vector<1x16x16x64xf32> to vector<16x16x64xf32>
    %68 = arith.addf %65, %67 : vector<16x16x64xf32>
    %c0_97 = arith.constant 0 : index
    %c0_98 = arith.constant 0 : index
    %c0_99 = arith.constant 0 : index
    %c0_100 = arith.constant 0 : index
    %69 = vector.load %arg4[%c0_97, %c0_98, %c0_99, %c0_100] : memref<1x16x16x64xf32, #tpu.memory_space<vmem>>, vector<1x16x16x64xf32>
    %70 = vector.shape_cast %69 : vector<1x16x16x64xf32> to vector<16x16x64xf32>
    %71 = vector.shape_cast %68 : vector<16x16x64xf32> to vector<1x16x16x64xf32>
    tpu.vector_store %arg4[%c0_97, %c0_98, %c0_99, %c0_100], %71 {strides = array<i32>} : memref<1x16x16x64xf32, #tpu.memory_space<vmem>>, vector<1x16x16x64xf32>,
    return
  }
  func.func @transform_0(%arg0: i32) -> (i32, i32, i32, i32) {
    %c0_i32 = arith.constant 0 : i32
    %c0_i32_0 = arith.constant 0 : i32
    %c0_i32_1 = arith.constant 0 : i32
    %c0_i32_2 = arith.constant 0 : i32
    return %arg0, %c0_i32, %c0_i32_0, %c0_i32_1 : i32, i32, i32, i32
  }
  func.func @transform_1(%arg0: i32) -> (i32, i32) {
    %c0_i32 = arith.constant 0 : i32
    %c0_i32_0 = arith.constant 0 : i32
    %c0_i32_1 = arith.constant 0 : i32
    return %c0_i32, %c0_i32_0 : i32, i32
  }
  func.func @transform_2(%arg0: i32) -> (i32, i32) {
    %c0_i32 = arith.constant 0 : i32
    %c0_i32_0 = arith.constant 0 : i32
    %c0_i32_1 = arith.constant 0 : i32
    return %c0_i32, %c0_i32_0 : i32, i32
  }
  func.func @transform_3(%arg0: i32) -> (i32, i32, i32, i32) {
    %c0_i32 = arith.constant 0 : i32
    %c0_i32_0 = arith.constant 0 : i32
    %c0_i32_1 = arith.constant 0 : i32
    %c0_i32_2 = arith.constant 0 : i32
    return %arg0, %c0_i32, %c0_i32_0, %c0_i32_1 : i32, i32, i32, i32
  }
}

</mosaic_0001>

<llo_original>
// kernel: tpu_custom_call.1
$region0: #{tpu_custom_call.1}
  #allocation0 [shape = 'u32[]', space=smem, size = 0x4, offset = 0x4, fixed_abs, tag = 'smem constant byte address 0x4 - core index']
  #allocation1 [shape = 'u32[144,128]{1,0:T(1,128)}', space=vmem, size = 0x12000, scoped, tag = 'internal scratch']
  #allocation2 [shape = 'bf16[18,16,192]{2,1,0:T(16,128)(2,1)}', space=vmem, size = 0x24000, scoped, tag = 'scratch operand']
  #allocation3 [shape = 'f32[18,16,192]{2,1,0:T(8,128)}', space=vmem, size = 0x48000, scoped, tag = 'scratch operand']
  %s0 = inlined_call_operand.hbm [shape: f32[2,16,16,64], index: 0, kind: input, shape index: {}]
  %s1 = inlined_call_operand.hbm [shape: bf16[192,192], index: 1, kind: input, shape index: {}]
  %s2 = inlined_call_operand.hbm [shape: bf16[192,192], index: 2, kind: input, shape index: {}]
  %s3 = inlined_call_operand.hbm [shape: f32[2,16,16,64], index: 3, kind: output, shape index: {}]
  %s4 = sld [smem:[#allocation0]]
  $region57: #{tpu_custom_call.1} parent=0
    _
  %s6 = ssub.s32 1, %s4
  %s7 = scalar_select 0, %s6, %s4
  $region1: #{tpu_custom_call.1} parent=0
    #allocation4 [shape = 'u8[262144]{0}', space=vmem, size = 0x40000, scoped, tag = 'input window, operand 0']
    #allocation5 [shape = 's32[2]{0}', space=sflag, size = 0x8, scoped, tag = 'scoped memory for tpu_custom_call.1']
    #allocation6 [shape = 's32[2]{0}', space=sflag, size = 0x8, scoped, tag = 'scoped memory for tpu_custom_call.1']
    #allocation7 [shape = 'u8[98304]{0}', space=vmem, size = 0x18000, scoped, tag = 'input window, operand 1, single buffered']
    #allocation8 [shape = 's32[1]{0}', space=sflag, size = 0x4, scoped, tag = 'scoped memory for tpu_custom_call.1']
    #allocation9 [shape = 'u8[98304]{0}', space=vmem, size = 0x18000, scoped, tag = 'input window, operand 2, single buffered']
    #allocation10 [shape = 'u8[262144]{0}', space=vmem, size = 0x40000, scoped, tag = 'output window, operand 0']
    %8 = vsyncpa [#allocation5], 0
    %s9 = scalar_lea.sflag [#allocation5], 1
    %10 = vsyncpa %s9, 0
    %11 = vsyncpa [#allocation8], 0
    %12 = vsyncpa [#allocation6], 0
    %s13 = scalar_lea.sflag [#allocation6], 1
    %14 = vsyncpa %s13, 0
    loop: start=0, step=1, limit=4
    $region2: #{tpu_custom_call.1} parent=1 // loop_pre_header
      _
    $region3: #{tpu_custom_call.1} parent=1 // loop_header
      %s16 = sphi 0, %s20
      %p17 = scmp.ge.s32.totalorder %s16, 4
      %s26 = sphi 0, %s28
      %s29 = sphi 0, %s26
      %s30 = sphi 0, %s29
      %s46 = sphi 0, %s30
      %s50 = sphi 0, %s50
      %s52 = sphi 0, %s50
      %s53 = sphi 0, %s52
      %s67 = sphi 0, %s53
      %s71 = sphi 0, %s71
      %s73 = sphi 0, %s71
      %s74 = sphi 0, %s73
      %s88 = sphi 0, %s74
      %s94 = sphi 0, %s96
      %s97 = sphi 0, %s94
      %s98 = sphi 0, %s97
      %s114 = sphi 0, %s98
    $region4: #{tpu_custom_call.1} parent=1 // loop_header_branch
      %19 = sbr.rel (%p17) target = $region8
    $region5: #{tpu_custom_call.1} parent=1 // loop_body
      %s21 = ssub.s32 %s16, 1
      %s22 = ssub.s32 %s16, 2
      %s23 = sadd.s32 %s16, 1
      %s24 = ssub.s32 %s16, %s23
      %p25 = scmp.eq.s32.totalorder %s24, 0
      %s27 = sadd.s32 %s26, 1
      %s28 = scalar_select %p25, %s26, %s27
      %p31 = pneg %p25
      %p32 = scmp.eq.s32.totalorder %s16, 1
      %p33 = por %p31, %p32
      %p34 = scmp.ne.s32.totalorder %s26, %s29
      %p35 = scmp.eq.s32.totalorder %s16, 0
      %p36 = por %p34, %p35
      %p37 = scmp.ne.s32.totalorder %s26, %s29
      %p38 = scmp.eq.s32.totalorder %s21, 1
      %p39 = por %p37, %p38
      %p40 = scmp.ne.s32.totalorder %s29, %s30
      %p41 = scmp.eq.s32.totalorder %s21, 0
      %p42 = por %p40, %p41
      %p43 = scmp.ne.s32.totalorder %s29, %s30
      %p44 = scmp.eq.s32.totalorder %s22, 1
      %p45 = por %p43, %p44
      %p47 = scmp.ne.s32.totalorder %s30, %s46
      %p48 = scmp.eq.s32.totalorder %s22, 0
      %p49 = por %p47, %p48
      %s51 = sadd.s32 %s50, 1
      %p54 = scmp.eq.s32.totalorder %s16, 1
      %p55 = scmp.ne.s32.totalorder %s50, %s52
      %p56 = scmp.eq.s32.totalorder %s16, 0
      %p57 = por %p55, %p56
      %p58 = scmp.ne.s32.totalorder %s50, %s52
      %p59 = scmp.eq.s32.totalorder %s21, 1
      %p60 = por %p58, %p59
      %p61 = scmp.ne.s32.totalorder %s52, %s53
      %p62 = scmp.eq.s32.totalorder %s21, 0
      %p63 = por %p61, %p62
      %p64 = scmp.ne.s32.totalorder %s52, %s53
      %p65 = scmp.eq.s32.totalorder %s22, 1
      %p66 = por %p64, %p65
      %p68 = scmp.ne.s32.totalorder %s53, %s67
      %p69 = scmp.eq.s32.totalorder %s22, 0
      %p70 = por %p68, %p69
      %s72 = sadd.s32 %s71, 1
      %p75 = scmp.eq.s32.totalorder %s16, 1
      %p76 = scmp.ne.s32.totalorder %s71, %s73
      %p77 = scmp.eq.s32.totalorder %s16, 0
      %p78 = por %p76, %p77
      %p79 = scmp.ne.s32.totalorder %s71, %s73
      %p80 = scmp.eq.s32.totalorder %s21, 1
      %p81 = por %p79, %p80
      %p82 = scmp.ne.s32.totalorder %s73, %s74
      %p83 = scmp.eq.s32.totalorder %s21, 0
      %p84 = por %p82, %p83
      %p85 = scmp.ne.s32.totalorder %s73, %s74
      %p86 = scmp.eq.s32.totalorder %s22, 1
      %p87 = por %p85, %p86
      %p89 = scmp.ne.s32.totalorder %s74, %s88
      %p90 = scmp.eq.s32.totalorder %s22, 0
      %p91 = por %p89, %p90
      %s92 = ssub.s32 %s16, %s23
      %p93 = scmp.eq.s32.totalorder %s92, 0
      %s95 = sadd.s32 %s94, 1
      %s96 = scalar_select %p93, %s94, %s95
      %p99 = pneg %p93
      %p100 = scmp.eq.s32.totalorder %s16, 1
      %p101 = por %p99, %p100
      %p102 = scmp.ne.s32.totalorder %s94, %s97
      %p103 = scmp.eq.s32.totalorder %s16, 0
      %p104 = por %p102, %p103
      %p105 = scmp.ne.s32.totalorder %s94, %s97
      %p106 = scmp.eq.s32.totalorder %s21, 1
      %p107 = por %p105, %p106
      %p108 = scmp.ne.s32.totalorder %s97, %s98
      %p109 = scmp.eq.s32.totalorder %s21, 0
      %p110 = por %p108, %p109
      %p111 = scmp.ne.s32.totalorder %s97, %s98
      %p112 = scmp.eq.s32.totalorder %s22, 1
      %p113 = por %p111, %p112
      %p115 = scmp.ne.s32.totalorder %s98, %s114
      %p116 = scmp.eq.s32.totalorder %s22, 0
      %p117 = por %p115, %p116
      %p118 = scmp.le.s32.totalorder 1, %s16
      %p119 = scmp.lt.s32.totalorder %s16, 3
      %p120 = pnand %p118, %p119
      %p121 = pneg %p120
      // Predicated region
      $region9: #{tpu_custom_call.1} parent=5 // pred_check
        _
      $region10: #{tpu_custom_call.1} parent=5 // pred_check_branch
        %123 = sbr.rel (%p120) target = $region12
      $region11: #{tpu_custom_call.1} parent=5 // pred_region
        %s124 = ssub.s32 %s16, 1
        // Predicated region
        $region13: #{tpu_custom_call.1} parent=11 // pred_check
          %p125 = pneg %p63
        $region14: #{tpu_custom_call.1} parent=11 // pred_check_branch
          %127 = sbr.rel (%p125) target = $region16
        $region15: #{tpu_custom_call.1} parent=11 // pred_region
          %s129 = ssub.s32 3072, 3072
          %130 = vsyncadd [#allocation8], %s129
          %s131 = sshll.u32 [#allocation7], 4
          %s132 = int_to_ptr.vmem [resolvable:$true] %s131
          %137 = dma.hbm_to_vmem [thread:$0]  %s1, 3072, %s132, [#allocation8], 128, 128, 8
        $region16: #{tpu_custom_call.1} parent=11 // pred_fallthru
          _
        // Predicated region
        $region17: #{tpu_custom_call.1} parent=11 // pred_check
          %p138 = pneg %p84
        $region18: #{tpu_custom_call.1} parent=11 // pred_check_branch
          %140 = sbr.rel (%p138) target = $region20
        $region19: #{tpu_custom_call.1} parent=11 // pred_region
          %s142 = ssub.s32 3072, 3072
          %143 = vsyncadd [#allocation8], %s142
          %s144 = sshll.u32 [#allocation9], 4
          %s145 = int_to_ptr.vmem [resolvable:$true] %s144
          %150 = dma.hbm_to_vmem [thread:$0]  %s2, 3072, %s145, [#allocation8], 128, 128, 8
        $region20: #{tpu_custom_call.1} parent=11 // pred_fallthru
          _
      $region12: #{tpu_custom_call.1} parent=5 // pred_fallthru
        _
      %p151 = scmp.lt.s32.totalorder %s16, 2
      // Predicated region
      $region21: #{tpu_custom_call.1} parent=5 // pred_check
        %p152 = pneg %p151
      $region22: #{tpu_custom_call.1} parent=5 // pred_check_branch
        %154 = sbr.rel (%p152) target = $region24
      $region23: #{tpu_custom_call.1} parent=5 // pred_region
        // Predicated region
        $region25: #{tpu_custom_call.1} parent=23 // pred_check
          %p155 = pneg %p36
        $region26: #{tpu_custom_call.1} parent=23 // pred_check_branch
          %157 = sbr.rel (%p155) target = $region28
        $region27: #{tpu_custom_call.1} parent=23 // pred_region
          %s158 = sand.u32 %s26, 1
          %s159 = scalar_lea.sflag [#allocation5], %s158
          %s160 = sand.u32 %s26, 1
          %s161 = smul.addr %s160, 256
          %s162 = scalar_lea.vmem [#allocation4], %s161
          %s164 = ssub.s32 4096, 4096
          %165 = vsyncadd %s159, %s164
          %s166 = smul.addr %s16, 32
          %s167 = smul.addr %s166, 128
          %s168 = scalar_lea.hbm %s0, %s167
          %s169 = sshll.u32 %s162, 4
          %s170 = int_to_ptr.vmem [resolvable:$true] %s169
          %175 = dma.hbm_to_vmem [thread:$0]  %s168, 4096, %s170, %s159, 128, 128, 8
        $region28: #{tpu_custom_call.1} parent=23 // pred_fallthru
          _
      $region24: #{tpu_custom_call.1} parent=5 // pred_fallthru
        _
      %p176 = scmp.le.s32.totalorder 1, %s16
      %p177 = scmp.lt.s32.totalorder %s16, 3
      %p178 = pnand %p176, %p177
      %p179 = pneg %p178
      // Predicated region
      $region29: #{tpu_custom_call.1} parent=5 // pred_check
        _
      $region30: #{tpu_custom_call.1} parent=5 // pred_check_branch
        %181 = sbr.rel (%p178) target = $region32
      $region31: #{tpu_custom_call.1} parent=5 // pred_region
        %s182 = ssub.s32 %s16, 1
        %s183 = sand.u32 %s29, 1
        %s184 = scalar_lea.sflag [#allocation5], %s183
        %s185 = sand.u32 %s29, 1
        %s186 = smul.addr %s185, 256
        %s187 = scalar_lea.vmem [#allocation4], %s186
        // Predicated region
        $region33: #{tpu_custom_call.1} parent=31 // pred_check
          %p188 = pneg %p42
        $region34: #{tpu_custom_call.1} parent=31 // pred_check_branch
          %190 = sbr.rel (%p188) target = $region36
        $region35: #{tpu_custom_call.1} parent=31 // pred_region
          %191 = dma.done %s184, 4096
        $region36: #{tpu_custom_call.1} parent=31 // pred_fallthru
          _
        // Predicated region
        $region37: #{tpu_custom_call.1} parent=31 // pred_check
          %p192 = pneg %p63
        $region38: #{tpu_custom_call.1} parent=31 // pred_check_branch
          %194 = sbr.rel (%p192) target = $region40
        $region39: #{tpu_custom_call.1} parent=31 // pred_region
          %195 = dma.done [#allocation8], 3072
        $region40: #{tpu_custom_call.1} parent=31 // pred_fallthru
          _
        // Predicated region
        $region41: #{tpu_custom_call.1} parent=31 // pred_check
          %p196 = pneg %p84
        $region42: #{tpu_custom_call.1} parent=31 // pred_check_branch
          %198 = sbr.rel (%p196) target = $region44
        $region43: #{tpu_custom_call.1} parent=31 // pred_region
          %199 = dma.done [#allocation8], 3072
        $region44: #{tpu_custom_call.1} parent=31 // pred_fallthru
          _
        %s200 = sand.u32 %s29, 1
        %s201 = scalar_lea.sflag [#allocation5], %s200
        %s202 = sand.u32 %s29, 1
        %s203 = smul.addr %s202, 256
        %s204 = scalar_lea.vmem [#allocation4], %s203
        %p205 = pneg %p42
        %p206 = pneg %p39
        %p207 = pneg %p63
        %p208 = pneg %p60
        %p209 = pneg %p84
        %p210 = pneg %p81
        %p211 = pneg %p110
        %p212 = pneg %p107
        %s213 = sand.u32 %s97, 1
        %s214 = scalar_lea.sflag [#allocation6], %s213
        %s215 = sand.u32 %s97, 1
        %s216 = smul.addr %s215, 256
        %s217 = scalar_lea.vmem [#allocation10], %s216
        %219 = vst [vmem:[#allocation2] sm:$0xff] 0
        %vm220 = vcmask 523264
        %221 = vst.msk [vmem:[#allocation2 + $0x8] sm:$0xff] %vm220, 0
        %s222 = scalar_lea.vmem [#allocation2], 272
        %223 = vst [vmem:[%s222] sm:$0xff] 0
        %224 = vst.msk [vmem:[%s222 + $0x8] sm:$0xff] %vm220, 0
        %vm225 = vcmask 516096
        %vm226 = vsmask.f32 256
        %vm227 = vmand %vm225, %vm226
        %v228 = vld [vmem:[#allocation2] sm:$0x1]
        %v229 = vsel %vm227, 0, %v228
        %230 = vst [vmem:[#allocation2] sm:$0x1] %v229
        %v231 = vld [vmem:[#allocation2 + $0x10] sm:$0x1]
        %v232 = vsel %vm227, 0, %v231
        %233 = vst [vmem:[#allocation2 + $0x10] sm:$0x1] %v232
        %v234 = vld [vmem:[#allocation2 + $0x20] sm:$0x1]
        %v235 = vsel %vm227, 0, %v234
        %236 = vst [vmem:[#allocation2 + $0x20] sm:$0x1] %v235
        %v237 = vld [vmem:[#allocation2 + $0x30] sm:$0x1]
        %v238 = vsel %vm227, 0, %v237
        %239 = vst [vmem:[#allocation2 + $0x30] sm:$0x1] %v238
        %v240 = vld [vmem:[#allocation2 + $0x40] sm:$0x1]
        %v241 = vsel %vm227, 0, %v240
        %242 = vst [vmem:[#allocation2 + $0x40] sm:$0x1] %v241
        %v243 = vld [vmem:[#allocation2 + $0x50] sm:$0x1]
        %v244 = vsel %vm227, 0, %v243
        %245 = vst [vmem:[#allocation2 + $0x50] sm:$0x1] %v244
        %v246 = vld [vmem:[#allocation2 + $0x60] sm:$0x1]
        %v247 = vsel %vm227, 0, %v246
        %248 = vst [vmem:[#allocation2 + $0x60] sm:$0x1] %v247
        %v249 = vld [vmem:[#allocation2 + $0x70] sm:$0x1]
        %v250 = vsel %vm227, 0, %v249
        %251 = vst [vmem:[#allocation2 + $0x70] sm:$0x1] %v250
        %v252 = vld [vmem:[#allocation2 + $0x80] sm:$0x1]
        %v253 = vsel %vm227, 0, %v252
        %254 = vst [vmem:[#allocation2 + $0x80] sm:$0x1] %v253
        %v255 = vld [vmem:[#allocation2 + $0x90] sm:$0x1]
        %v256 = vsel %vm227, 0, %v255
        %257 = vst [vmem:[#allocation2 + $0x90] sm:$0x1] %v256
        %v258 = vld [vmem:[#allocation2 + $0xa0] sm:$0x1]
        %v259 = vsel %vm227, 0, %v258
        %260 = vst [vmem:[#allocation2 + $0xa0] sm:$0x1] %v259
        %v261 = vld [vmem:[#allocation2 + $0xb0] sm:$0x1]
        %v262 = vsel %vm227, 0, %v261
        %263 = vst [vmem:[#allocation2 + $0xb0] sm:$0x1] %v262
        %v264 = vld [vmem:[#allocation2 + $0xc0] sm:$0x1]
        %v265 = vsel %vm227, 0, %v264
        %266 = vst [vmem:[#allocation2 + $0xc0] sm:$0x1] %v265
        %v267 = vld [vmem:[#allocation2 + $0xd0] sm:$0x1]
        %v268 = vsel %vm227, 0, %v267
        %269 = vst [vmem:[#allocation2 + $0xd0] sm:$0x1] %v268
        %v270 = vld [vmem:[#allocation2 + $0xe0] sm:$0x1]
        %v271 = vsel %vm227, 0, %v270
        %272 = vst [vmem:[#allocation2 + $0xe0] sm:$0x1] %v271
        %v273 = vld [vmem:[#allocation2 + $0xf0] sm:$0x1]
        %v274 = vsel %vm227, 0, %v273
        %275 = vst [vmem:[#allocation2 + $0xf0] sm:$0x1] %v274
        %v276 = vld [vmem:[#allocation2 + $0x100] sm:$0x1]
        %v277 = vsel %vm227, 0, %v276
        %278 = vst [vmem:[#allocation2 + $0x100] sm:$0x1] %v277
        %v279 = vld [vmem:[#allocation2 + $0x110] sm:$0x1]
        %v280 = vsel %vm227, 0, %v279
        %281 = vst [vmem:[#allocation2 + $0x110] sm:$0x1] %v280
        %vm282 = vcmask 523271
        %vm283 = vsmask.f32 7966
        %vm284 = vmand %vm282, %vm283
        %v285 = vld [vmem:[#allocation2 + $0x8] sm:$0x80]
        %v286 = vsel %vm284, 0, %v285
        %287 = vst [vmem:[#allocation2 + $0x8] sm:$0x80] %v286
        %v288 = vld [vmem:[#allocation2 + $0x18] sm:$0x80]
        %v289 = vsel %vm284, 0, %v288
        %290 = vst [vmem:[#allocation2 + $0x18] sm:$0x80] %v289
        %v291 = vld [vmem:[#allocation2 + $0x28] sm:$0x80]
        %v292 = vsel %vm284, 0, %v291
        %293 = vst [vmem:[#allocation2 + $0x28] sm:$0x80] %v292
        %v294 = vld [vmem:[#allocation2 + $0x38] sm:$0x80]
        %v295 = vsel %vm284, 0, %v294
        %296 = vst [vmem:[#allocation2 + $0x38] sm:$0x80] %v295
        %v297 = vld [vmem:[#allocation2 + $0x48] sm:$0x80]
        %v298 = vsel %vm284, 0, %v297
        %299 = vst [vmem:[#allocation2 + $0x48] sm:$0x80] %v298
        %v300 = vld [vmem:[#allocation2 + $0x58] sm:$0x80]
        %v301 = vsel %vm284, 0, %v300
        %302 = vst [vmem:[#allocation2 + $0x58] sm:$0x80] %v301
        %v303 = vld [vmem:[#allocation2 + $0x68] sm:$0x80]
        %v304 = vsel %vm284, 0, %v303
        %305 = vst [vmem:[#allocation2 + $0x68] sm:$0x80] %v304
        %v306 = vld [vmem:[#allocation2 + $0x78] sm:$0x80]
        %v307 = vsel %vm284, 0, %v306
        %308 = vst [vmem:[#allocation2 + $0x78] sm:$0x80] %v307
        %v309 = vld [vmem:[#allocation2 + $0x88] sm:$0x80]
        %v310 = vsel %vm284, 0, %v309
        %311 = vst [vmem:[#allocation2 + $0x88] sm:$0x80] %v310
        %v312 = vld [vmem:[#allocation2 + $0x98] sm:$0x80]
        %v313 = vsel %vm284, 0, %v312
        %314 = vst [vmem:[#allocation2 + $0x98] sm:$0x80] %v313
        %v315 = vld [vmem:[#allocation2 + $0xa8] sm:$0x80]
        %v316 = vsel %vm284, 0, %v315
        %317 = vst [vmem:[#allocation2 + $0xa8] sm:$0x80] %v316
        %v318 = vld [vmem:[#allocation2 + $0xb8] sm:$0x80]
        %v319 = vsel %vm284, 0, %v318
        %320 = vst [vmem:[#allocation2 + $0xb8] sm:$0x80] %v319
        %v321 = vld [vmem:[#allocation2 + $0xc8] sm:$0x80]
        %v322 = vsel %vm284, 0, %v321
        %323 = vst [vmem:[#allocation2 + $0xc8] sm:$0x80] %v322
        %v324 = vld [vmem:[#allocation2 + $0xd8] sm:$0x80]
        %v325 = vsel %vm284, 0, %v324
        %326 = vst [vmem:[#allocation2 + $0xd8] sm:$0x80] %v325
        %v327 = vld [vmem:[#allocation2 + $0xe8] sm:$0x80]
        %v328 = vsel %vm284, 0, %v327
        %329 = vst [vmem:[#allocation2 + $0xe8] sm:$0x80] %v328
        %v330 = vld [vmem:[#allocation2 + $0xf8] sm:$0x80]
        %v331 = vsel %vm284, 0, %v330
        %332 = vst [vmem:[#allocation2 + $0xf8] sm:$0x80] %v331
        %v333 = vld [vmem:[#allocation2 + $0x108] sm:$0x80]
        %v334 = vsel %vm284, 0, %v333
        %335 = vst [vmem:[#allocation2 + $0x108] sm:$0x80] %v334
        %v336 = vld [vmem:[#allocation2 + $0x118] sm:$0x80]
        %v337 = vsel %vm284, 0, %v336
        %338 = vst [vmem:[#allocation2 + $0x118] sm:$0x80] %v337
        %v339 = vld [vmem:[%s187] sm:$0xff]
        %v340 = vld [vmem:[%s187 + $0x8] sm:$0xff]
        %v341 = vld [vmem:[%s187 + $0x10] sm:$0xff]
        %v342 = vld [vmem:[%s187 + $0x18] sm:$0xff]
        %v343 = vld [vmem:[%s187 + $0x20] sm:$0xff]
        %v344 = vld [vmem:[%s187 + $0x28] sm:$0xff]
        %v345 = vld [vmem:[%s187 + $0x30] sm:$0xff]
        %v346 = vld [vmem:[%s187 + $0x38] sm:$0xff]
        %v347 = vld [vmem:[%s187 + $0x40] sm:$0xff]
        %v348 = vld [vmem:[%s187 + $0x48] sm:$0xff]
        %v349 = vld [vmem:[%s187 + $0x50] sm:$0xff]
        %v350 = vld [vmem:[%s187 + $0x58] sm:$0xff]
        %v351 = vld [vmem:[%s187 + $0x60] sm:$0xff]
        %v352 = vld [vmem:[%s187 + $0x68] sm:$0xff]
        %v353 = vld [vmem:[%s187 + $0x70] sm:$0xff]
        %v354 = vld [vmem:[%s187 + $0x78] sm:$0xff]
        %v355 = vld [vmem:[%s187 + $0x80] sm:$0xff]
        %v356 = vld [vmem:[%s187 + $0x88] sm:$0xff]
        %v357 = vld [vmem:[%s187 + $0x90] sm:$0xff]
        %v358 = vld [vmem:[%s187 + $0x98] sm:$0xff]
        %v359 = vld [vmem:[%s187 + $0xa0] sm:$0xff]
        %v360 = vld [vmem:[%s187 + $0xa8] sm:$0xff]
        %v361 = vld [vmem:[%s187 + $0xb0] sm:$0xff]
        %v362 = vld [vmem:[%s187 + $0xb8] sm:$0xff]
        %v363 = vld [vmem:[%s187 + $0xc0] sm:$0xff]
        %v364 = vld [vmem:[%s187 + $0xc8] sm:$0xff]
        %v365 = vld [vmem:[%s187 + $0xd0] sm:$0xff]
        %v366 = vld [vmem:[%s187 + $0xd8] sm:$0xff]
        %v367 = vld [vmem:[%s187 + $0xe0] sm:$0xff]
        %v368 = vld [vmem:[%s187 + $0xe8] sm:$0xff]
        %v369 = vld [vmem:[%s187 + $0xf0] sm:$0xff]
        %v370 = vld [vmem:[%s187 + $0xf8] sm:$0xff]
        %v371 = vpack.c.bf16 %v340, %v339
        %v372 = vpack.c.bf16 %v342, %v341
        %v373 = vpack.c.bf16 %v344, %v343
        %v374 = vpack.c.bf16 %v346, %v345
        %v375 = vpack.c.bf16 %v348, %v347
        %v376 = vpack.c.bf16 %v350, %v349
        %v377 = vpack.c.bf16 %v352, %v351
        %v378 = vpack.c.bf16 %v354, %v353
        %v379 = vpack.c.bf16 %v356, %v355
        %v380 = vpack.c.bf16 %v358, %v357
        %v381 = vpack.c.bf16 %v360, %v359
        %v382 = vpack.c.bf16 %v362, %v361
        %v383 = vpack.c.bf16 %v364, %v363
        %v384 = vpack.c.bf16 %v366, %v365
        %v385 = vpack.c.bf16 %v368, %v367
        %v386 = vpack.c.bf16 %v370, %v369
        %v388 = vshrl.u32 %v371, 16
        %v390 = vrot.slane %v388, 7
        %v391 = vshll.u32 %v371, 16
        %v393 = vor.u32 %v390, %v391
        %v395 = vshrl.u32 %v372, 16
        %v397 = vrot.slane %v395, 7
        %v398 = vshll.u32 %v372, 16
        %v400 = vor.u32 %v397, %v398
        %v402 = vshrl.u32 %v373, 16
        %v404 = vrot.slane %v402, 7
        %v405 = vshll.u32 %v373, 16
        %v407 = vor.u32 %v404, %v405
        %v409 = vshrl.u32 %v374, 16
        %v411 = vrot.slane %v409, 7
        %v412 = vshll.u32 %v374, 16
        %v414 = vor.u32 %v411, %v412
        %v416 = vshrl.u32 %v375, 16
        %v418 = vrot.slane %v416, 7
        %v419 = vshll.u32 %v375, 16
        %v421 = vor.u32 %v418, %v419
        %v423 = vshrl.u32 %v376, 16
        %v425 = vrot.slane %v423, 7
        %v426 = vshll.u32 %v376, 16
        %v428 = vor.u32 %v425, %v426
        %v430 = vshrl.u32 %v377, 16
        %v432 = vrot.slane %v430, 7
        %v433 = vshll.u32 %v377, 16
        %v435 = vor.u32 %v432, %v433
        %v437 = vshrl.u32 %v378, 16
        %v439 = vrot.slane %v437, 7
        %v440 = vshll.u32 %v378, 16
        %v442 = vor.u32 %v439, %v440
        %v444 = vshrl.u32 %v379, 16
        %v446 = vrot.slane %v444, 7
        %v447 = vshll.u32 %v379, 16
        %v449 = vor.u32 %v446, %v447
        %v451 = vshrl.u32 %v380, 16
        %v453 = vrot.slane %v451, 7
        %v454 = vshll.u32 %v380, 16
        %v456 = vor.u32 %v453, %v454
        %v458 = vshrl.u32 %v381, 16
        %v460 = vrot.slane %v458, 7
        %v461 = vshll.u32 %v381, 16
        %v463 = vor.u32 %v460, %v461
        %v465 = vshrl.u32 %v382, 16
        %v467 = vrot.slane %v465, 7
        %v468 = vshll.u32 %v382, 16
        %v470 = vor.u32 %v467, %v468
        %v472 = vshrl.u32 %v383, 16
        %v474 = vrot.slane %v472, 7
        %v475 = vshll.u32 %v383, 16
        %v477 = vor.u32 %v474, %v475
        %v479 = vshrl.u32 %v384, 16
        %v481 = vrot.slane %v479, 7
        %v482 = vshll.u32 %v384, 16
        %v484 = vor.u32 %v481, %v482
        %v486 = vshrl.u32 %v385, 16
        %v488 = vrot.slane %v486, 7
        %v489 = vshll.u32 %v385, 16
        %v491 = vor.u32 %v488, %v489
        %v493 = vshrl.u32 %v386, 16
        %v495 = vrot.slane %v493, 7
        %v496 = vshll.u32 %v386, 16
        %v498 = vor.u32 %v495, %v496
        %s515 = scalar_lea.vmem [#allocation2], 16
        %vm516 = vcmask 523264
        %vm517 = vsmask.f32 7938
        %vm518 = vmand %vm516, %vm517
        %v519 = vld [vmem:[%s515] sm:$0xff]
        %v520 = vsel %vm518, %v393, %v519
        %521 = vst [vmem:[%s515] sm:$0xff] %v520
        %v522 = vld [vmem:[%s515 + $0x10] sm:$0xff]
        %v523 = vsel %vm518, %v400, %v522
        %524 = vst [vmem:[%s515 + $0x10] sm:$0xff] %v523
        %v525 = vld [vmem:[%s515 + $0x20] sm:$0xff]
        %v526 = vsel %vm518, %v407, %v525
        %527 = vst [vmem:[%s515 + $0x20] sm:$0xff] %v526
        %v528 = vld [vmem:[%s515 + $0x30] sm:$0xff]
        %v529 = vsel %vm518, %v414, %v528
        %530 = vst [vmem:[%s515 + $0x30] sm:$0xff] %v529
        %v531 = vld [vmem:[%s515 + $0x40] sm:$0xff]
        %v532 = vsel %vm518, %v421, %v531
        %533 = vst [vmem:[%s515 + $0x40] sm:$0xff] %v532
        %v534 = vld [vmem:[%s515 + $0x50] sm:$0xff]
        %v535 = vsel %vm518, %v428, %v534
        %536 = vst [vmem:[%s515 + $0x50] sm:$0xff] %v535
        %v537 = vld [vmem:[%s515 + $0x60] sm:$0xff]
        %v538 = vsel %vm518, %v435, %v537
        %539 = vst [vmem:[%s515 + $0x60] sm:$0xff] %v538
        %v540 = vld [vmem:[%s515 + $0x70] sm:$0xff]
        %v541 = vsel %vm518, %v442, %v540
        %542 = vst [vmem:[%s515 + $0x70] sm:$0xff] %v541
        %v543 = vld [vmem:[%s515 + $0x80] sm:$0xff]
        %v544 = vsel %vm518, %v449, %v543
        %545 = vst [vmem:[%s515 + $0x80] sm:$0xff] %v544
        %v546 = vld [vmem:[%s515 + $0x90] sm:$0xff]
        %v547 = vsel %vm518, %v456, %v546
        %548 = vst [vmem:[%s515 + $0x90] sm:$0xff] %v547
        %v549 = vld [vmem:[%s515 + $0xa0] sm:$0xff]
        %v550 = vsel %vm518, %v463, %v549
        %551 = vst [vmem:[%s515 + $0xa0] sm:$0xff] %v550
        %v552 = vld [vmem:[%s515 + $0xb0] sm:$0xff]
        %v553 = vsel %vm518, %v470, %v552
        %554 = vst [vmem:[%s515 + $0xb0] sm:$0xff] %v553
        %v555 = vld [vmem:[%s515 + $0xc0] sm:$0xff]
        %v556 = vsel %vm518, %v477, %v555
        %557 = vst [vmem:[%s515 + $0xc0] sm:$0xff] %v556
        %v558 = vld [vmem:[%s515 + $0xd0] sm:$0xff]
        %v559 = vsel %vm518, %v484, %v558
        %560 = vst [vmem:[%s515 + $0xd0] sm:$0xff] %v559
        %v561 = vld [vmem:[%s515 + $0xe0] sm:$0xff]
        %v562 = vsel %vm518, %v491, %v561
        %563 = vst [vmem:[%s515 + $0xe0] sm:$0xff] %v562
        %v564 = vld [vmem:[%s515 + $0xf0] sm:$0xff]
        %v565 = vsel %vm518, %v498, %v564
        %566 = vst [vmem:[%s515 + $0xf0] sm:$0xff] %v565
        %583 = vrot.lane.b32.xlu0 %v371, 64
        %v584 = vpop.permute.xlu0 %583
        %585 = vrot.lane.b32.xlu0 %v372, 64
        %v586 = vpop.permute.xlu0 %585
        %587 = vrot.lane.b32.xlu0 %v373, 64
        %v588 = vpop.permute.xlu0 %587
        %589 = vrot.lane.b32.xlu0 %v374, 64
        %v590 = vpop.permute.xlu0 %589
        %591 = vrot.lane.b32.xlu0 %v375, 64
        %v592 = vpop.permute.xlu0 %591
        %593 = vrot.lane.b32.xlu0 %v376, 64
        %v594 = vpop.permute.xlu0 %593
        %595 = vrot.lane.b32.xlu0 %v377, 64
        %v596 = vpop.permute.xlu0 %595
        %597 = vrot.lane.b32.xlu0 %v378, 64
        %v598 = vpop.permute.xlu0 %597
        %599 = vrot.lane.b32.xlu0 %v379, 64
        %v600 = vpop.permute.xlu0 %599
        %601 = vrot.lane.b32.xlu0 %v380, 64
        %v602 = vpop.permute.xlu0 %601
        %603 = vrot.lane.b32.xlu0 %v381, 64
        %v604 = vpop.permute.xlu0 %603
        %605 = vrot.lane.b32.xlu0 %v382, 64
        %v606 = vpop.permute.xlu0 %605
        %607 = vrot.lane.b32.xlu0 %v383, 64
        %v608 = vpop.permute.xlu0 %607
        %609 = vrot.lane.b32.xlu0 %v384, 64
        %v610 = vpop.permute.xlu0 %609
        %611 = vrot.lane.b32.xlu0 %v385, 64
        %v612 = vpop.permute.xlu0 %611
        %613 = vrot.lane.b32.xlu0 %v386, 64
        %v614 = vpop.permute.xlu0 %613
        %vm631 = vcmask 1048064
        %632 = vst.msk [vmem:[%s515] sm:$0xff] %vm631, %v584
        %633 = vst.msk [vmem:[%s515 + $0x10] sm:$0xff] %vm631, %v586
        %634 = vst.msk [vmem:[%s515 + $0x20] sm:$0xff] %vm631, %v588
        %635 = vst.msk [vmem:[%s515 + $0x30] sm:$0xff] %vm631, %v590
        %636 = vst.msk [vmem:[%s515 + $0x40] sm:$0xff] %vm631, %v592
        %637 = vst.msk [vmem:[%s515 + $0x50] sm:$0xff] %vm631, %v594
        %638 = vst.msk [vmem:[%s515 + $0x60] sm:$0xff] %vm631, %v596
        %639 = vst.msk [vmem:[%s515 + $0x70] sm:$0xff] %vm631, %v598
        %640 = vst.msk [vmem:[%s515 + $0x80] sm:$0xff] %vm631, %v600
        %641 = vst.msk [vmem:[%s515 + $0x90] sm:$0xff] %vm631, %v602
        %642 = vst.msk [vmem:[%s515 + $0xa0] sm:$0xff] %vm631, %v604
        %643 = vst.msk [vmem:[%s515 + $0xb0] sm:$0xff] %vm631, %v606
        %644 = vst.msk [vmem:[%s515 + $0xc0] sm:$0xff] %vm631, %v608
        %645 = vst.msk [vmem:[%s515 + $0xd0] sm:$0xff] %vm631, %v610
        %646 = vst.msk [vmem:[%s515 + $0xe0] sm:$0xff] %vm631, %v612
        %647 = vst.msk [vmem:[%s515 + $0xf0] sm:$0xff] %vm631, %v614
        %v648 = vrot.slane %v391, 1
        %v649 = vor.u32 %v388, %v648
        %v650 = vrot.slane %v398, 1
        %v651 = vor.u32 %v395, %v650
        %v652 = vrot.slane %v405, 1
        %v653 = vor.u32 %v402, %v652
        %v654 = vrot.slane %v412, 1
        %v655 = vor.u32 %v409, %v654
        %v656 = vrot.slane %v419, 1
        %v657 = vor.u32 %v416, %v656
        %v658 = vrot.slane %v426, 1
        %v659 = vor.u32 %v423, %v658
        %v660 = vrot.slane %v433, 1
        %v661 = vor.u32 %v430, %v660
        %v662 = vrot.slane %v440, 1
        %v663 = vor.u32 %v437, %v662
        %v664 = vrot.slane %v447, 1
        %v665 = vor.u32 %v444, %v664
        %v666 = vrot.slane %v454, 1
        %v667 = vor.u32 %v451, %v666
        %v668 = vrot.slane %v461, 1
        %v669 = vor.u32 %v458, %v668
        %v670 = vrot.slane %v468, 1
        %v671 = vor.u32 %v465, %v670
        %v672 = vrot.slane %v475, 1
        %v673 = vor.u32 %v472, %v672
        %v674 = vrot.slane %v482, 1
        %v675 = vor.u32 %v479, %v674
        %v676 = vrot.slane %v489, 1
        %v677 = vor.u32 %v486, %v676
        %v678 = vrot.slane %v496, 1
        %v679 = vor.u32 %v493, %v678
        %vm696 = vsmask.f32 7424
        %vm697 = vmand %vm516, %vm696
        %v698 = vld [vmem:[%s515 + $0x8] sm:$0xff]
        %v699 = vsel %vm697, %v649, %v698
        %700 = vst [vmem:[%s515 + $0x8] sm:$0xff] %v699
        %v701 = vld [vmem:[%s515 + $0x18] sm:$0xff]
        %v702 = vsel %vm697, %v651, %v701
        %703 = vst [vmem:[%s515 + $0x18] sm:$0xff] %v702
        %v704 = vld [vmem:[%s515 + $0x28] sm:$0xff]
        %v705 = vsel %vm697, %v653, %v704
        %706 = vst [vmem:[%s515 + $0x28] sm:$0xff] %v705
        %v707 = vld [vmem:[%s515 + $0x38] sm:$0xff]
        %v708 = vsel %vm697, %v655, %v707
        %709 = vst [vmem:[%s515 + $0x38] sm:$0xff] %v708
        %v710 = vld [vmem:[%s515 + $0x48] sm:$0xff]
        %v711 = vsel %vm697, %v657, %v710
        %712 = vst [vmem:[%s515 + $0x48] sm:$0xff] %v711
        %v713 = vld [vmem:[%s515 + $0x58] sm:$0xff]
        %v714 = vsel %vm697, %v659, %v713
        %715 = vst [vmem:[%s515 + $0x58] sm:$0xff] %v714
        %v716 = vld [vmem:[%s515 + $0x68] sm:$0xff]
        %v717 = vsel %vm697, %v661, %v716
        %718 = vst [vmem:[%s515 + $0x68] sm:$0xff] %v717
        %v719 = vld [vmem:[%s515 + $0x78] sm:$0xff]
        %v720 = vsel %vm697, %v663, %v719
        %721 = vst [vmem:[%s515 + $0x78] sm:$0xff] %v720
        %v722 = vld [vmem:[%s515 + $0x88] sm:$0xff]
        %v723 = vsel %vm697, %v665, %v722
        %724 = vst [vmem:[%s515 + $0x88] sm:$0xff] %v723
        %v725 = vld [vmem:[%s515 + $0x98] sm:$0xff]
        %v726 = vsel %vm697, %v667, %v725
        %727 = vst [vmem:[%s515 + $0x98] sm:$0xff] %v726
        %v728 = vld [vmem:[%s515 + $0xa8] sm:$0xff]
        %v729 = vsel %vm697, %v669, %v728
        %730 = vst [vmem:[%s515 + $0xa8] sm:$0xff] %v729
        %v731 = vld [vmem:[%s515 + $0xb8] sm:$0xff]
        %v732 = vsel %vm697, %v671, %v731
        %733 = vst [vmem:[%s515 + $0xb8] sm:$0xff] %v732
        %v734 = vld [vmem:[%s515 + $0xc8] sm:$0xff]
        %v735 = vsel %vm697, %v673, %v734
        %736 = vst [vmem:[%s515 + $0xc8] sm:$0xff] %v735
        %v737 = vld [vmem:[%s515 + $0xd8] sm:$0xff]
        %v738 = vsel %vm697, %v675, %v737
        %739 = vst [vmem:[%s515 + $0xd8] sm:$0xff] %v738
        %v740 = vld [vmem:[%s515 + $0xe8] sm:$0xff]
        %v741 = vsel %vm697, %v677, %v740
        %742 = vst [vmem:[%s515 + $0xe8] sm:$0xff] %v741
        %v743 = vld [vmem:[%s515 + $0xf8] sm:$0xff]
        %v744 = vsel %vm697, %v679, %v743
        %745 = vst [vmem:[%s515 + $0xf8] sm:$0xff] %v744
        %v746 = vld [vmem:[#allocation7] sm:$0xff]
        %v747 = vld [vmem:[#allocation7 + $0x8] sm:$0xff]
        %v748 = vld [vmem:[#allocation7 + $0x10] sm:$0xff]
        %v749 = vld [vmem:[#allocation7 + $0x18] sm:$0xff]
        %v750 = vld [vmem:[#allocation7 + $0x20] sm:$0xff]
        %v751 = vld [vmem:[#allocation7 + $0x28] sm:$0xff]
        %v752 = vld [vmem:[#allocation7 + $0x30] sm:$0xff]
        %v753 = vld [vmem:[#allocation7 + $0x38] sm:$0xff]
        %v754 = vld [vmem:[#allocation7 + $0x40] sm:$0xff]
        %v755 = vld [vmem:[#allocation7 + $0x48] sm:$0xff]
        %v756 = vld [vmem:[#allocation7 + $0x50] sm:$0xff]
        %v757 = vld [vmem:[#allocation7 + $0x58] sm:$0xff]
        %v758 = vld [vmem:[#allocation7 + $0x60] sm:$0xff]
        %v759 = vld [vmem:[#allocation7 + $0x68] sm:$0xff]
        %v760 = vld [vmem:[#allocation7 + $0x70] sm:$0xff]
        %v761 = vld [vmem:[#allocation7 + $0x78] sm:$0xff]
        %v762 = vld [vmem:[#allocation7 + $0x80] sm:$0xff]
        %v763 = vld [vmem:[#allocation7 + $0x88] sm:$0xff]
        %v764 = vld [vmem:[#allocation7 + $0x90] sm:$0xff]
        %v765 = vld [vmem:[#allocation7 + $0x98] sm:$0xff]
        %v766 = vld [vmem:[#allocation7 + $0xa0] sm:$0xff]
        %v767 = vld [vmem:[#allocation7 + $0xa8] sm:$0xff]
        %v768 = vld [vmem:[#allocation7 + $0xb0] sm:$0xff]
        %v769 = vld [vmem:[#allocation7 + $0xb8] sm:$0xff]
        %v770 = vld [vmem:[#allocation2] sm:$0xff]
        %v771 = vld [vmem:[#allocation2 + $0x8] sm:$0xff]
        %v772 = vld [vmem:[#allocation2 + $0x10] sm:$0xff]
        %v773 = vld [vmem:[#allocation2 + $0x18] sm:$0xff]
        %v774 = vld [vmem:[#allocation2 + $0x20] sm:$0xff]
        %v775 = vld [vmem:[#allocation2 + $0x28] sm:$0xff]
        %v776 = vld [vmem:[#allocation2 + $0x30] sm:$0xff]
        %v777 = vld [vmem:[#allocation2 + $0x38] sm:$0xff]
        %v778 = vld [vmem:[#allocation2 + $0x40] sm:$0xff]
        %v779 = vld [vmem:[#allocation2 + $0x48] sm:$0xff]
        %v780 = vld [vmem:[#allocation2 + $0x50] sm:$0xff]
        %v781 = vld [vmem:[#allocation2 + $0x58] sm:$0xff]
        %v782 = vld [vmem:[#allocation2 + $0x60] sm:$0xff]
        %v783 = vld [vmem:[#allocation2 + $0x68] sm:$0xff]
        %v784 = vld [vmem:[#allocation2 + $0x70] sm:$0xff]
        %v785 = vld [vmem:[#allocation2 + $0x78] sm:$0xff]
        %v810 = vunpack.c.l.b16 %v746
        %v811 = vunpack.c.h.b16 %v746
        %v812 = vunpack.c.l.b16 %v747
        %v813 = vunpack.c.h.b16 %v747
        %v814 = vunpack.c.l.b16 %v748
        %v815 = vunpack.c.h.b16 %v748
        %v816 = vunpack.c.l.b16 %v749
        %v817 = vunpack.c.h.b16 %v749
        %v818 = vunpack.c.l.b16 %v750
        %v819 = vunpack.c.h.b16 %v750
        %v820 = vunpack.c.l.b16 %v751
        %v821 = vunpack.c.h.b16 %v751
        %v822 = vunpack.c.l.b16 %v752
        %v823 = vunpack.c.h.b16 %v752
        %v824 = vunpack.c.l.b16 %v753
        %v825 = vunpack.c.h.b16 %v753
        %v826 = vunpack.c.l.b16 %v754
        %v827 = vunpack.c.h.b16 %v754
        %v828 = vunpack.c.l.b16 %v755
        %v829 = vunpack.c.h.b16 %v755
        %v830 = vunpack.c.l.b16 %v756
        %v831 = vunpack.c.h.b16 %v756
        %v832 = vunpack.c.l.b16 %v757
        %v833 = vunpack.c.h.b16 %v757
        %v834 = vunpack.c.l.b16 %v758
        %v835 = vunpack.c.h.b16 %v758
        %v836 = vunpack.c.l.b16 %v759
        %v837 = vunpack.c.h.b16 %v759
        %v838 = vunpack.c.l.b16 %v760
        %v839 = vunpack.c.h.b16 %v760
        %v840 = vunpack.c.l.b16 %v761
        %v841 = vunpack.c.h.b16 %v761
        %v842 = vunpack.c.l.b16 %v762
        %v843 = vunpack.c.h.b16 %v762
        %v844 = vunpack.c.l.b16 %v763
        %v845 = vunpack.c.h.b16 %v763
        %v846 = vunpack.c.l.b16 %v764
        %v847 = vunpack.c.h.b16 %v764
        %v848 = vunpack.c.l.b16 %v765
        %v849 = vunpack.c.h.b16 %v765
        %v850 = vunpack.c.l.b16 %v766
        %v851 = vunpack.c.h.b16 %v766
        %v852 = vunpack.c.l.b16 %v767
        %v853 = vunpack.c.h.b16 %v767
        %v854 = vunpack.c.l.b16 %v768
        %v855 = vunpack.c.h.b16 %v768
        %v856 = vunpack.c.l.b16 %v769
        %v857 = vunpack.c.h.b16 %v769
        %v858 = vpack.c.b16 %v812, %v810
        %v859 = vpack.c.b16 %v813, %v811
        %v860 = vpack.c.b16 %v816, %v814
        %v861 = vpack.c.b16 %v817, %v815
        %v862 = vpack.c.b16 %v820, %v818
        %v863 = vpack.c.b16 %v821, %v819
        %v864 = vpack.c.b16 %v824, %v822
        %v865 = vpack.c.b16 %v825, %v823
        %v866 = vpack.c.b16 %v828, %v826
        %v867 = vpack.c.b16 %v829, %v827
        %v868 = vpack.c.b16 %v832, %v830
        %v869 = vpack.c.b16 %v833, %v831
        %v870 = vpack.c.b16 %v836, %v834
        %v871 = vpack.c.b16 %v837, %v835
        %v872 = vpack.c.b16 %v840, %v838
        %v873 = vpack.c.b16 %v841, %v839
        %v874 = vpack.c.b16 %v844, %v842
        %v875 = vpack.c.b16 %v845, %v843
        %v876 = vpack.c.b16 %v848, %v846
        %v877 = vpack.c.b16 %v849, %v847
        %v878 = vpack.c.b16 %v852, %v850
        %v879 = vpack.c.b16 %v853, %v851
        %v880 = vpack.c.b16 %v856, %v854
        %v881 = vpack.c.b16 %v857, %v855
        %v907 = vsel %vm220, %v771, 0
        %v910 = vsel %vm220, %v773, 0
        %v913 = vsel %vm220, %v775, 0
        %v916 = vsel %vm220, %v777, 0
        %v919 = vsel %vm220, %v779, 0
        %v922 = vsel %vm220, %v781, 0
        %v925 = vsel %vm220, %v783, 0
        %v928 = vsel %vm220, %v785, 0
        %930 = vmatprep.subr.bf16.mxu0 %v859
        %931 = vmatpush1.bf16.msra.mxu0 %v858
        %932 = vmatprep.subr.bf16.mxu0 %v861
        %933 = vmatpush1.bf16.msra.mxu0 %v860
        %934 = vmatprep.subr.bf16.mxu0 %v863
        %935 = vmatpush1.bf16.msra.mxu0 %v862
        %936 = vmatprep.subr.bf16.mxu0 %v865
        %937 = vmatpush1.bf16.msra.mxu0 %v864
        %938 = vmatprep.subr.bf16.mxu0 %v867
        %939 = vmatpush1.bf16.msra.mxu0 %v866
        %940 = vmatprep.subr.bf16.mxu0 %v869
        %941 = vmatpush1.bf16.msra.mxu0 %v868
        %942 = vmatprep.subr.bf16.mxu0 %v871
        %943 = vmatpush1.bf16.msra.mxu0 %v870
        %944 = vmatprep.subr.bf16.mxu0 %v873
        %945 = vmatpush1.bf16.msra.mxu0 %v872
        %946 = vmatprep.subr.bf16.mxu0 %v875
        %947 = vmatpush1.bf16.msra.mxu0 %v874
        %948 = vmatprep.subr.bf16.mxu0 %v877
        %949 = vmatpush1.bf16.msra.mxu0 %v876
        %950 = vmatprep.subr.bf16.mxu0 %v879
        %951 = vmatpush1.bf16.msra.mxu0 %v878
        %952 = vmatprep.subr.bf16.mxu0 %v881
        %953 = vmatpush1.bf16.msra.mxu0 %v880
        %954 = vmatprep.subr.bf16.mxu0 0
        %955 = vmatpush1.bf16.msra.mxu0 0
        %956 = vmatprep.subr.bf16.mxu0 0
        %957 = vmatpush1.bf16.msra.mxu0 0
        %958 = vmatprep.subr.bf16.mxu0 0
        %959 = vmatpush1.bf16.msra.mxu0 0
        %960 = vmatprep.subr.bf16.mxu0 0
        %961 = vmatpush1.bf16.msra.mxu0 0
        %962 = vmatprep.mubr.bf16.mxu0 %v907
        %963 = vmatmul.mubr.bf16.gmra.mrb[0].mxu0 %v770
        %v964 = vpop.f32.mrb[0].mxu0
        %v965 = vadd.f32 0.0, %v964
        %v966 = vpop.f32.mrb[0].mxu0
        %v967 = vadd.f32 0.0, %v966
        %v968 = vpop.f32.mrb[0].mxu0
        %v969 = vadd.f32 0.0, %v968
        %v970 = vpop.f32.mrb[0].mxu0
        %v971 = vadd.f32 0.0, %v970
        %972 = vmatprep.mubr.bf16.mxu0 %v910
        %973 = vmatmul.mubr.bf16.gmra.mrb[0].mxu0 %v772
        %v974 = vpop.f32.mrb[0].mxu0
        %v975 = vadd.f32 0.0, %v974
        %v976 = vpop.f32.mrb[0].mxu0
        %v977 = vadd.f32 0.0, %v976
        %v978 = vpop.f32.mrb[0].mxu0
        %v979 = vadd.f32 0.0, %v978
        %v980 = vpop.f32.mrb[0].mxu0
        %v981 = vadd.f32 0.0, %v980
        %982 = vmatprep.mubr.bf16.mxu0 %v913
        %983 = vmatmul.mubr.bf16.gmra.mrb[0].mxu0 %v774
        %v984 = vpop.f32.mrb[0].mxu0
        %v985 = vadd.f32 0.0, %v984
        %v986 = vpop.f32.mrb[0].mxu0
        %v987 = vadd.f32 0.0, %v986
        %v988 = vpop.f32.mrb[0].mxu0
        %v989 = vadd.f32 0.0, %v988
        %v990 = vpop.f32.mrb[0].mxu0
        %v991 = vadd.f32 0.0, %v990
        %992 = vmatprep.mubr.bf16.mxu0 %v916
        %993 = vmatmul.mubr.bf16.gmra.mrb[0].mxu0 %v776
        %v994 = vpop.f32.mrb[0].mxu0
        %v995 = vadd.f32 0.0, %v994
        %v996 = vpop.f32.mrb[0].mxu0
        %v997 = vadd.f32 0.0, %v996
        %v998 = vpop.f32.mrb[0].mxu0
        %v999 = vadd.f32 0.0, %v998
        %v1000 = vpop.f32.mrb[0].mxu0
        %v1001 = vadd.f32 0.0, %v1000
        %1002 = vmatprep.mubr.bf16.mxu0 %v919
        %1003 = vmatmul.mubr.bf16.gmra.mrb[0].mxu0 %v778
        %v1004 = vpop.f32.mrb[0].mxu0
        %v1005 = vadd.f32 0.0, %v1004
        %v1006 = vpop.f32.mrb[0].mxu0
        %v1007 = vadd.f32 0.0, %v1006
        %v1008 = vpop.f32.mrb[0].mxu0
        %v1009 = vadd.f32 0.0, %v1008
        %v1010 = vpop.f32.mrb[0].mxu0
        %v1011 = vadd.f32 0.0, %v1010
        %1012 = vmatprep.mubr.bf16.mxu0 %v922
        %1013 = vmatmul.mubr.bf16.gmra.mrb[0].mxu0 %v780
        %v1014 = vpop.f32.mrb[0].mxu0
        %v1015 = vadd.f32 0.0, %v1014
        %v1016 = vpop.f32.mrb[0].mxu0
        %v1017 = vadd.f32 0.0, %v1016
        %v1018 = vpop.f32.mrb[0].mxu0
        %v1019 = vadd.f32 0.0, %v1018
        %v1020 = vpop.f32.mrb[0].mxu0
        %v1021 = vadd.f32 0.0, %v1020
        %1022 = vmatprep.mubr.bf16.mxu0 %v925
        %1023 = vmatmul.mubr.bf16.gmra.mrb[0].mxu0 %v782
        %v1024 = vpop.f32.mrb[0].mxu0
        %v1025 = vadd.f32 0.0, %v1024
        %v1026 = vpop.f32.mrb[0].mxu0
        %v1027 = vadd.f32 0.0, %v1026
        %v1028 = vpop.f32.mrb[0].mxu0
        %v1029 = vadd.f32 0.0, %v1028
        %v1030 = vpop.f32.mrb[0].mxu0
        %v1031 = vadd.f32 0.0, %v1030
        %1032 = vmatprep.mubr.bf16.mxu0 %v928
        %1033 = vmatmul.mubr.bf16.gmra.mrb[0].mxu0 %v784
        %v1034 = vpop.f32.mrb[0].mxu0
        %v1035 = vadd.f32 0.0, %v1034
        %v1036 = vpop.f32.mrb[0].mxu0
        %v1037 = vadd.f32 0.0, %v1036
        %v1038 = vpop.f32.mrb[0].mxu0
        %v1039 = vadd.f32 0.0, %v1038
        %v1040 = vpop.f32.mrb[0].mxu0
        %v1041 = vadd.f32 0.0, %v1040
        %1042 = vdwg.mxu0
        %1043 = vst [vmem:[#allocation3] sm:$0xff] %v965
        %1044 = vst.msk [vmem:[#allocation3 + $0x8] sm:$0xff] %vm220, %v967
        %1045 = vst [vmem:[#allocation3 + $0x10] sm:$0xff] %v969
        %1046 = vst.msk [vmem:[#allocation3 + $0x18] sm:$0xff] %vm220, %v971
        %1047 = vst [vmem:[#allocation3 + $0x20] sm:$0xff] %v975
        %1048 = vst.msk [vmem:[#allocation3 + $0x28] sm:$0xff] %vm220, %v977
        %1049 = vst [vmem:[#allocation3 + $0x30] sm:$0xff] %v979
        %1050 = vst.msk [vmem:[#allocation3 + $0x38] sm:$0xff] %vm220, %v981
        %1051 = vst [vmem:[#allocation3 + $0x40] sm:$0xff] %v985
        %1052 = vst.msk [vmem:[#allocation3 + $0x48] sm:$0xff] %vm220, %v987
        %1053 = vst [vmem:[#allocation3 + $0x50] sm:$0xff] %v989
        %1054 = vst.msk [vmem:[#allocation3 + $0x58] sm:$0xff] %vm220, %v991
        %1055 = vst [vmem:[#allocation3 + $0x60] sm:$0xff] %v995
        %1056 = vst.msk [vmem:[#allocation3 + $0x68] sm:$0xff] %vm220, %v997
        %1057 = vst [vmem:[#allocation3 + $0x70] sm:$0xff] %v999
        %1058 = vst.msk [vmem:[#allocation3 + $0x78] sm:$0xff] %vm220, %v1001
        %1059 = vst [vmem:[#allocation3 + $0x80] sm:$0xff] %v1005
        %1060 = vst.msk [vmem:[#allocation3 + $0x88] sm:$0xff] %vm220, %v1007
        %1061 = vst [vmem:[#allocation3 + $0x90] sm:$0xff] %v1009
        %1062 = vst.msk [vmem:[#allocation3 + $0x98] sm:$0xff] %vm220, %v1011
        %1063 = vst [vmem:[#allocation3 + $0xa0] sm:$0xff] %v1015
        %1064 = vst.msk [vmem:[#allocation3 + $0xa8] sm:$0xff] %vm220, %v1017
        %1065 = vst [vmem:[#allocation3 + $0xb0] sm:$0xff] %v1019
        %1066 = vst.msk [vmem:[#allocation3 + $0xb8] sm:$0xff] %vm220, %v1021
        %1067 = vst [vmem:[#allocation3 + $0xc0] sm:$0xff] %v1025
        %1068 = vst.msk [vmem:[#allocation3 + $0xc8] sm:$0xff] %vm220, %v1027
        %1069 = vst [vmem:[#allocation3 + $0xd0] sm:$0xff] %v1029
        %1070 = vst.msk [vmem:[#allocation3 + $0xd8] sm:$0xff] %vm220, %v1031
        %1071 = vst [vmem:[#allocation3 + $0xe0] sm:$0xff] %v1035
        %1072 = vst.msk [vmem:[#allocation3 + $0xe8] sm:$0xff] %vm220, %v1037
        %1073 = vst [vmem:[#allocation3 + $0xf0] sm:$0xff] %v1039
        %1074 = vst.msk [vmem:[#allocation3 + $0xf8] sm:$0xff] %vm220, %v1041
        %s1075 = scalar_lea.vmem [#allocation2], 128
        %v1076 = vld [vmem:[%s1075] sm:$0xff]
        %v1077 = vld [vmem:[%s1075 + $0x8] sm:$0xff]
        %v1078 = vld [vmem:[%s1075 + $0x10] sm:$0xff]
        %v1079 = vld [vmem:[%s1075 + $0x18] sm:$0xff]
        %v1080 = vld [vmem:[%s1075 + $0x20] sm:$0xff]
        %v1081 = vld [vmem:[%s1075 + $0x28] sm:$0xff]
        %v1082 = vld [vmem:[%s1075 + $0x30] sm:$0xff]
        %v1083 = vld [vmem:[%s1075 + $0x38] sm:$0xff]
        %v1084 = vld [vmem:[%s1075 + $0x40] sm:$0xff]
        %v1085 = vld [vmem:[%s1075 + $0x48] sm:$0xff]
        %v1086 = vld [vmem:[%s1075 + $0x50] sm:$0xff]
        %v1087 = vld [vmem:[%s1075 + $0x58] sm:$0xff]
        %v1088 = vld [vmem:[%s1075 + $0x60] sm:$0xff]
        %v1089 = vld [vmem:[%s1075 + $0x68] sm:$0xff]
        %v1090 = vld [vmem:[%s1075 + $0x70] sm:$0xff]
        %v1091 = vld [vmem:[%s1075 + $0x78] sm:$0xff]
        %v1093 = vsel %vm220, %v1077, 0
        %v1096 = vsel %vm220, %v1079, 0
        %v1099 = vsel %vm220, %v1081, 0
        %v1102 = vsel %vm220, %v1083, 0
        %v1105 = vsel %vm220, %v1085, 0
        %v1108 = vsel %vm220, %v1087, 0
        %v1111 = vsel %vm220, %v1089, 0
        %v1114 = vsel %vm220, %v1091, 0
        %1116 = vmatprep.subr.bf16.mxu0 %v859
        %1117 = vmatpush1.bf16.msra.mxu0 %v858
        %1118 = vmatprep.subr.bf16.mxu0 %v861
        %1119 = vmatpush1.bf16.msra.mxu0 %v860
        %1120 = vmatprep.subr.bf16.mxu0 %v863
        %1121 = vmatpush1.bf16.msra.mxu0 %v862
        %1122 = vmatprep.subr.bf16.mxu0 %v865
        %1123 = vmatpush1.bf16.msra.mxu0 %v864
        %1124 = vmatprep.subr.bf16.mxu0 %v867
        %1125 = vmatpush1.bf16.msra.mxu0 %v866
        %1126 = vmatprep.subr.bf16.mxu0 %v869
        %1127 = vmatpush1.bf16.msra.mxu0 %v868
        %1128 = vmatprep.subr.bf16.mxu0 %v871
        %1129 = vmatpush1.bf16.msra.mxu0 %v870
        %1130 = vmatprep.subr.bf16.mxu0 %v873
        %1131 = vmatpush1.bf16.msra.mxu0 %v872
        %1132 = vmatprep.subr.bf16.mxu0 %v875
        %1133 = vmatpush1.bf16.msra.mxu0 %v874
        %1134 = vmatprep.subr.bf16.mxu0 %v877
        %1135 = vmatpush1.bf16.msra.mxu0 %v876
        %1136 = vmatprep.subr.bf16.mxu0 %v879
        %1137 = vmatpush1.bf16.msra.mxu0 %v878
        %1138 = vmatprep.subr.bf16.mxu0 %v881
        %1139 = vmatpush1.bf16.msra.mxu0 %v880
        %1140 = vmatprep.subr.bf16.mxu0 0
        %1141 = vmatpush1.bf16.msra.mxu0 0
        %1142 = vmatprep.subr.bf16.mxu0 0
        %1143 = vmatpush1.bf16.msra.mxu0 0
        %1144 = vmatprep.subr.bf16.mxu0 0
        %1145 = vmatpush1.bf16.msra.mxu0 0
        %1146 = vmatprep.subr.bf16.mxu0 0
        %1147 = vmatpush1.bf16.msra.mxu0 0
        %1148 = vmatprep.mubr.bf16.mxu0 %v1093
        %1149 = vmatmul.mubr.bf16.gmra.mrb[0].mxu0 %v1076
        %v1150 = vpop.f32.mrb[0].mxu0
        %v1151 = vadd.f32 0.0, %v1150
        %v1152 = vpop.f32.mrb[0].mxu0
        %v1153 = vadd.f32 0.0, %v1152
        %v1154 = vpop.f32.mrb[0].mxu0
        %v1155 = vadd.f32 0.0, %v1154
        %v1156 = vpop.f32.mrb[0].mxu0
        %v1157 = vadd.f32 0.0, %v1156
        %1158 = vmatprep.mubr.bf16.mxu0 %v1096
        %1159 = vmatmul.mubr.bf16.gmra.mrb[0].mxu0 %v1078
        %v1160 = vpop.f32.mrb[0].mxu0
        %v1161 = vadd.f32 0.0, %v1160
        %v1162 = vpop.f32.mrb[0].mxu0
        %v1163 = vadd.f32 0.0, %v1162
        %v1164 = vpop.f32.mrb[0].mxu0
        %v1165 = vadd.f32 0.0, %v1164
        %v1166 = vpop.f32.mrb[0].mxu0
        %v1167 = vadd.f32 0.0, %v1166
        %1168 = vmatprep.mubr.bf16.mxu0 %v1099
        %1169 = vmatmul.mubr.bf16.gmra.mrb[0].mxu0 %v1080
        %v1170 = vpop.f32.mrb[0].mxu0
        %v1171 = vadd.f32 0.0, %v1170
        %v1172 = vpop.f32.mrb[0].mxu0
        %v1173 = vadd.f32 0.0, %v1172
        %v1174 = vpop.f32.mrb[0].mxu0
        %v1175 = vadd.f32 0.0, %v1174
        %v1176 = vpop.f32.mrb[0].mxu0
        %v1177 = vadd.f32 0.0, %v1176
        %1178 = vmatprep.mubr.bf16.mxu0 %v1102
        %1179 = vmatmul.mubr.bf16.gmra.mrb[0].mxu0 %v1082
        %v1180 = vpop.f32.mrb[0].mxu0
        %v1181 = vadd.f32 0.0, %v1180
        %v1182 = vpop.f32.mrb[0].mxu0
        %v1183 = vadd.f32 0.0, %v1182
        %v1184 = vpop.f32.mrb[0].mxu0
        %v1185 = vadd.f32 0.0, %v1184
        %v1186 = vpop.f32.mrb[0].mxu0
        %v1187 = vadd.f32 0.0, %v1186
        %1188 = vmatprep.mubr.bf16.mxu0 %v1105
        %1189 = vmatmul.mubr.bf16.gmra.mrb[0].mxu0 %v1084
        %v1190 = vpop.f32.mrb[0].mxu0
        %v1191 = vadd.f32 0.0, %v1190
        %v1192 = vpop.f32.mrb[0].mxu0
        %v1193 = vadd.f32 0.0, %v1192
        %v1194 = vpop.f32.mrb[0].mxu0
        %v1195 = vadd.f32 0.0, %v1194
        %v1196 = vpop.f32.mrb[0].mxu0
        %v1197 = vadd.f32 0.0, %v1196
        %1198 = vmatprep.mubr.bf16.mxu0 %v1108
        %1199 = vmatmul.mubr.bf16.gmra.mrb[0].mxu0 %v1086
        %v1200 = vpop.f32.mrb[0].mxu0
        %v1201 = vadd.f32 0.0, %v1200
        %v1202 = vpop.f32.mrb[0].mxu0
        %v1203 = vadd.f32 0.0, %v1202
        %v1204 = vpop.f32.mrb[0].mxu0
        %v1205 = vadd.f32 0.0, %v1204
        %v1206 = vpop.f32.mrb[0].mxu0
        %v1207 = vadd.f32 0.0, %v1206
        %1208 = vmatprep.mubr.bf16.mxu0 %v1111
        %1209 = vmatmul.mubr.bf16.gmra.mrb[0].mxu0 %v1088
        %v1210 = vpop.f32.mrb[0].mxu0
        %v1211 = vadd.f32 0.0, %v1210
        %v1212 = vpop.f32.mrb[0].mxu0
        %v1213 = vadd.f32 0.0, %v1212
        %v1214 = vpop.f32.mrb[0].mxu0
        %v1215 = vadd.f32 0.0, %v1214
        %v1216 = vpop.f32.mrb[0].mxu0
        %v1217 = vadd.f32 0.0, %v1216
        %1218 = vmatprep.mubr.bf16.mxu0 %v1114
        %1219 = vmatmul.mubr.bf16.gmra.mrb[0].mxu0 %v1090
        %v1220 = vpop.f32.mrb[0].mxu0
        %v1221 = vadd.f32 0.0, %v1220
        %v1222 = vpop.f32.mrb[0].mxu0
        %v1223 = vadd.f32 0.0, %v1222
        %v1224 = vpop.f32.mrb[0].mxu0
        %v1225 = vadd.f32 0.0, %v1224
        %v1226 = vpop.f32.mrb[0].mxu0
        %v1227 = vadd.f32 0.0, %v1226
        %1228 = vdwg.mxu0
        %s1229 = scalar_lea.vmem [#allocation3], 256
        %1230 = vst [vmem:[%s1229] sm:$0xff] %v1151
        %1231 = vst.msk [vmem:[%s1229 + $0x8] sm:$0xff] %vm220, %v1153
        %1232 = vst [vmem:[%s1229 + $0x10] sm:$0xff] %v1155
        %1233 = vst.msk [vmem:[%s1229 + $0x18] sm:$0xff] %vm220, %v1157
        %1234 = vst [vmem:[%s1229 + $0x20] sm:$0xff] %v1161
        %1235 = vst.msk [vmem:[%s1229 + $0x28] sm:$0xff] %vm220, %v1163
        %1236 = vst [vmem:[%s1229 + $0x30] sm:$0xff] %v1165
        %1237 = vst.msk [vmem:[%s1229 + $0x38] sm:$0xff] %vm220, %v1167
        %1238 = vst [vmem:[%s1229 + $0x40] sm:$0xff] %v1171
        %1239 = vst.msk [vmem:[%s1229 + $0x48] sm:$0xff] %vm220, %v1173
        %1240 = vst [vmem:[%s1229 + $0x50] sm:$0xff] %v1175
        %1241 = vst.msk [vmem:[%s1229 + $0x58] sm:$0xff] %vm220, %v1177
        %1242 = vst [vmem:[%s1229 + $0x60] sm:$0xff] %v1181
        %1243 = vst.msk [vmem:[%s1229 + $0x68] sm:$0xff] %vm220, %v1183
        %1244 = vst [vmem:[%s1229 + $0x70] sm:$0xff] %v1185
        %1245 = vst.msk [vmem:[%s1229 + $0x78] sm:$0xff] %vm220, %v1187
        %1246 = vst [vmem:[%s1229 + $0x80] sm:$0xff] %v1191
        %1247 = vst.msk [vmem:[%s1229 + $0x88] sm:$0xff] %vm220, %v1193
        %1248 = vst [vmem:[%s1229 + $0x90] sm:$0xff] %v1195
        %1249 = vst.msk [vmem:[%s1229 + $0x98] sm:$0xff] %vm220, %v1197
        %1250 = vst [vmem:[%s1229 + $0xa0] sm:$0xff] %v1201
        %1251 = vst.msk [vmem:[%s1229 + $0xa8] sm:$0xff] %vm220, %v1203
        %1252 = vst [vmem:[%s1229 + $0xb0] sm:$0xff] %v1205
        %1253 = vst.msk [vmem:[%s1229 + $0xb8] sm:$0xff] %vm220, %v1207
        %1254 = vst [vmem:[%s1229 + $0xc0] sm:$0xff] %v1211
        %1255 = vst.msk [vmem:[%s1229 + $0xc8] sm:$0xff] %vm220, %v1213
        %1256 = vst [vmem:[%s1229 + $0xd0] sm:$0xff] %v1215
        %1257 = vst.msk [vmem:[%s1229 + $0xd8] sm:$0xff] %vm220, %v1217
        %1258 = vst [vmem:[%s1229 + $0xe0] sm:$0xff] %v1221
        %1259 = vst.msk [vmem:[%s1229 + $0xe8] sm:$0xff] %vm220, %v1223
        %1260 = vst [vmem:[%s1229 + $0xf0] sm:$0xff] %v1225
        %1261 = vst.msk [vmem:[%s1229 + $0xf8] sm:$0xff] %vm220, %v1227
        %s1262 = scalar_lea.vmem [#allocation2], 256
        %v1263 = vld [vmem:[%s1262] sm:$0xff]
        %v1264 = vld [vmem:[%s1262 + $0x8] sm:$0xff]
        %v1265 = vld [vmem:[%s1262 + $0x10] sm:$0xff]
        %v1266 = vld [vmem:[%s1262 + $0x18] sm:$0xff]
        %v1268 = vsel %vm220, %v1264, 0
        %v1271 = vsel %vm220, %v1266, 0
        %1273 = vmatprep.subr.bf16.mxu0 %v859
        %1274 = vmatpush1.bf16.msra.mxu0 %v858
        %1275 = vmatprep.subr.bf16.mxu0 %v861
        %1276 = vmatpush1.bf16.msra.mxu0 %v860
        %1277 = vmatprep.subr.bf16.mxu0 %v863
        %1278 = vmatpush1.bf16.msra.mxu0 %v862
        %1279 = vmatprep.subr.bf16.mxu0 %v865
        %1280 = vmatpush1.bf16.msra.mxu0 %v864
        %1281 = vmatprep.subr.bf16.mxu0 %v867
        %1282 = vmatpush1.bf16.msra.mxu0 %v866
        %1283 = vmatprep.subr.bf16.mxu0 %v869
        %1284 = vmatpush1.bf16.msra.mxu0 %v868
        %1285 = vmatprep.subr.bf16.mxu0 %v871
        %1286 = vmatpush1.bf16.msra.mxu0 %v870
        %1287 = vmatprep.subr.bf16.mxu0 %v873
        %1288 = vmatpush1.bf16.msra.mxu0 %v872
        %1289 = vmatprep.subr.bf16.mxu0 %v875
        %1290 = vmatpush1.bf16.msra.mxu0 %v874
        %1291 = vmatprep.subr.bf16.mxu0 %v877
        %1292 = vmatpush1.bf16.msra.mxu0 %v876
        %1293 = vmatprep.subr.bf16.mxu0 %v879
        %1294 = vmatpush1.bf16.msra.mxu0 %v878
        %1295 = vmatprep.subr.bf16.mxu0 %v881
        %1296 = vmatpush1.bf16.msra.mxu0 %v880
        %1297 = vmatprep.subr.bf16.mxu0 0
        %1298 = vmatpush1.bf16.msra.mxu0 0
        %1299 = vmatprep.subr.bf16.mxu0 0
        %1300 = vmatpush1.bf16.msra.mxu0 0
        %1301 = vmatprep.subr.bf16.mxu0 0
        %1302 = vmatpush1.bf16.msra.mxu0 0
        %1303 = vmatprep.subr.bf16.mxu0 0
        %1304 = vmatpush1.bf16.msra.mxu0 0
        %1305 = vmatprep.mubr.bf16.mxu0 %v1268
        %1306 = vmatmul.mubr.bf16.gmra.mrb[0].mxu0 %v1263
        %v1307 = vpop.f32.mrb[0].mxu0
        %v1308 = vadd.f32 0.0, %v1307
        %v1309 = vpop.f32.mrb[0].mxu0
        %v1310 = vadd.f32 0.0, %v1309
        %v1311 = vpop.f32.mrb[0].mxu0
        %v1312 = vadd.f32 0.0, %v1311
        %v1313 = vpop.f32.mrb[0].mxu0
        %v1314 = vadd.f32 0.0, %v1313
        %1315 = vmatprep.mubr.bf16.mxu0 %v1271
        %1316 = vmatmul.mubr.bf16.gmra.mrb[0].mxu0 %v1265
        %v1317 = vpop.f32.mrb[0].mxu0
        %v1318 = vadd.f32 0.0, %v1317
        %v1319 = vpop.f32.mrb[0].mxu0
        %v1320 = vadd.f32 0.0, %v1319
        %v1321 = vpop.f32.mrb[0].mxu0
        %v1322 = vadd.f32 0.0, %v1321
        %v1323 = vpop.f32.mrb[0].mxu0
        %v1324 = vadd.f32 0.0, %v1323
        %1325 = vdwg.mxu0
        %s1326 = scalar_lea.vmem [#allocation3], 512
        %1327 = vst [vmem:[%s1326] sm:$0xff] %v1308
        %1328 = vst.msk [vmem:[%s1326 + $0x8] sm:$0xff] %vm220, %v1310
        %1329 = vst [vmem:[%s1326 + $0x10] sm:$0xff] %v1312
        %1330 = vst.msk [vmem:[%s1326 + $0x18] sm:$0xff] %vm220, %v1314
        %1331 = vst [vmem:[%s1326 + $0x20] sm:$0xff] %v1318
        %1332 = vst.msk [vmem:[%s1326 + $0x28] sm:$0xff] %vm220, %v1320
        %1333 = vst [vmem:[%s1326 + $0x30] sm:$0xff] %v1322
        %1334 = vst.msk [vmem:[%s1326 + $0x38] sm:$0xff] %vm220, %v1324
        %v1335 = vld [vmem:[#allocation3] sm:$0xff]
        %v1336 = vld [vmem:[#allocation3 + $0x10] sm:$0xff]
        %v1337 = vld [vmem:[#allocation3 + $0x20] sm:$0xff]
        %v1338 = vld [vmem:[#allocation3 + $0x30] sm:$0xff]
        %v1339 = vld [vmem:[#allocation3 + $0x40] sm:$0xff]
        %v1340 = vld [vmem:[#allocation3 + $0x50] sm:$0xff]
        %v1341 = vld [vmem:[#allocation3 + $0x60] sm:$0xff]
        %v1342 = vld [vmem:[#allocation3 + $0x70] sm:$0xff]
        %v1343 = vld [vmem:[#allocation3 + $0x80] sm:$0xff]
        %v1344 = vld [vmem:[#allocation3 + $0x90] sm:$0xff]
        %v1345 = vld [vmem:[#allocation3 + $0xa0] sm:$0xff]
        %v1346 = vld [vmem:[#allocation3 + $0xb0] sm:$0xff]
        %v1347 = vld [vmem:[#allocation3 + $0xc0] sm:$0xff]
        %v1348 = vld [vmem:[#allocation3 + $0xd0] sm:$0xff]
        %v1349 = vld [vmem:[#allocation3 + $0xe0] sm:$0xff]
        %v1350 = vld [vmem:[#allocation3 + $0xf0] sm:$0xff]
        %v1351 = vld [vmem:[#allocation3 + $0x100] sm:$0xff]
        %v1352 = vld [vmem:[#allocation3 + $0x110] sm:$0xff]
        %v1353 = vld [vmem:[#allocation3 + $0x120] sm:$0xff]
        %v1354 = vld [vmem:[#allocation3 + $0x130] sm:$0xff]
        %v1355 = vld [vmem:[#allocation3 + $0x140] sm:$0xff]
        %v1356 = vld [vmem:[#allocation3 + $0x150] sm:$0xff]
        %v1357 = vld [vmem:[#allocation3 + $0x160] sm:$0xff]
        %v1358 = vld [vmem:[#allocation3 + $0x170] sm:$0xff]
        %v1359 = vld [vmem:[#allocation3 + $0x180] sm:$0xff]
        %v1360 = vld [vmem:[#allocation3 + $0x190] sm:$0xff]
        %v1361 = vld [vmem:[#allocation3 + $0x1a0] sm:$0xff]
        %v1362 = vld [vmem:[#allocation3 + $0x1b0] sm:$0xff]
        %v1363 = vld [vmem:[#allocation3 + $0x1c0] sm:$0xff]
        %v1364 = vld [vmem:[#allocation3 + $0x1d0] sm:$0xff]
        %v1365 = vld [vmem:[#allocation3 + $0x1e0] sm:$0xff]
        %v1366 = vld [vmem:[#allocation3 + $0x1f0] sm:$0xff]
        %s1367 = scalar_lea.vmem [#allocation3], 32
        %v1368 = vld [vmem:[%s1367] sm:$0xff]
        %v1369 = vld [vmem:[%s1367 + $0x10] sm:$0xff]
        %v1370 = vld [vmem:[%s1367 + $0x20] sm:$0xff]
        %v1371 = vld [vmem:[%s1367 + $0x30] sm:$0xff]
        %v1372 = vld [vmem:[%s1367 + $0x40] sm:$0xff]
        %v1373 = vld [vmem:[%s1367 + $0x50] sm:$0xff]
        %v1374 = vld [vmem:[%s1367 + $0x60] sm:$0xff]
        %v1375 = vld [vmem:[%s1367 + $0x70] sm:$0xff]
        %v1376 = vld [vmem:[%s1367 + $0x80] sm:$0xff]
        %v1377 = vld [vmem:[%s1367 + $0x90] sm:$0xff]
        %v1378 = vld [vmem:[%s1367 + $0xa0] sm:$0xff]
        %v1379 = vld [vmem:[%s1367 + $0xb0] sm:$0xff]
        %v1380 = vld [vmem:[%s1367 + $0xc0] sm:$0xff]
        %v1381 = vld [vmem:[%s1367 + $0xd0] sm:$0xff]
        %v1382 = vld [vmem:[%s1367 + $0xe0] sm:$0xff]
        %v1383 = vld [vmem:[%s1367 + $0xf0] sm:$0xff]
        %v1384 = vld [vmem:[%s1367 + $0x100] sm:$0xff]
        %v1385 = vld [vmem:[%s1367 + $0x110] sm:$0xff]
        %v1386 = vld [vmem:[%s1367 + $0x120] sm:$0xff]
        %v1387 = vld [vmem:[%s1367 + $0x130] sm:$0xff]
        %v1388 = vld [vmem:[%s1367 + $0x140] sm:$0xff]
        %v1389 = vld [vmem:[%s1367 + $0x150] sm:$0xff]
        %v1390 = vld [vmem:[%s1367 + $0x160] sm:$0xff]
        %v1391 = vld [vmem:[%s1367 + $0x170] sm:$0xff]
        %v1392 = vld [vmem:[%s1367 + $0x180] sm:$0xff]
        %v1393 = vld [vmem:[%s1367 + $0x190] sm:$0xff]
        %v1394 = vld [vmem:[%s1367 + $0x1a0] sm:$0xff]
        %v1395 = vld [vmem:[%s1367 + $0x1b0] sm:$0xff]
        %v1396 = vld [vmem:[%s1367 + $0x1c0] sm:$0xff]
        %v1397 = vld [vmem:[%s1367 + $0x1d0] sm:$0xff]
        %v1398 = vld [vmem:[%s1367 + $0x1e0] sm:$0xff]
        %v1399 = vld [vmem:[%s1367 + $0x1f0] sm:$0xff]
        %1432 = vrot.lane.b32.xlu0 %v1368, 64
        %v1433 = vpop.permute.xlu0 %1432
        %1434 = vrot.lane.b32.xlu0 %v1369, 64
        %v1435 = vpop.permute.xlu0 %1434
        %1436 = vrot.lane.b32.xlu0 %v1370, 64
        %v1437 = vpop.permute.xlu0 %1436
        %1438 = vrot.lane.b32.xlu0 %v1371, 64
        %v1439 = vpop.permute.xlu0 %1438
        %1440 = vrot.lane.b32.xlu0 %v1372, 64
        %v1441 = vpop.permute.xlu0 %1440
        %1442 = vrot.lane.b32.xlu0 %v1373, 64
        %v1443 = vpop.permute.xlu0 %1442
        %1444 = vrot.lane.b32.xlu0 %v1374, 64
        %v1445 = vpop.permute.xlu0 %1444
        %1446 = vrot.lane.b32.xlu0 %v1375, 64
        %v1447 = vpop.permute.xlu0 %1446
        %1448 = vrot.lane.b32.xlu0 %v1376, 64
        %v1449 = vpop.permute.xlu0 %1448
        %1450 = vrot.lane.b32.xlu0 %v1377, 64
        %v1451 = vpop.permute.xlu0 %1450
        %1452 = vrot.lane.b32.xlu0 %v1378, 64
        %v1453 = vpop.permute.xlu0 %1452
        %1454 = vrot.lane.b32.xlu0 %v1379, 64
        %v1455 = vpop.permute.xlu0 %1454
        %1456 = vrot.lane.b32.xlu0 %v1380, 64
        %v1457 = vpop.permute.xlu0 %1456
        %1458 = vrot.lane.b32.xlu0 %v1381, 64
        %v1459 = vpop.permute.xlu0 %1458
        %1460 = vrot.lane.b32.xlu0 %v1382, 64
        %v1461 = vpop.permute.xlu0 %1460
        %1462 = vrot.lane.b32.xlu0 %v1383, 64
        %v1463 = vpop.permute.xlu0 %1462
        %1464 = vrot.lane.b32.xlu0 %v1384, 64
        %v1465 = vpop.permute.xlu0 %1464
        %1466 = vrot.lane.b32.xlu0 %v1385, 64
        %v1467 = vpop.permute.xlu0 %1466
        %1468 = vrot.lane.b32.xlu0 %v1386, 64
        %v1469 = vpop.permute.xlu0 %1468
        %1470 = vrot.lane.b32.xlu0 %v1387, 64
        %v1471 = vpop.permute.xlu0 %1470
        %1472 = vrot.lane.b32.xlu0 %v1388, 64
        %v1473 = vpop.permute.xlu0 %1472
        %1474 = vrot.lane.b32.xlu0 %v1389, 64
        %v1475 = vpop.permute.xlu0 %1474
        %1476 = vrot.lane.b32.xlu0 %v1390, 64
        %v1477 = vpop.permute.xlu0 %1476
        %1478 = vrot.lane.b32.xlu0 %v1391, 64
        %v1479 = vpop.permute.xlu0 %1478
        %1480 = vrot.lane.b32.xlu0 %v1392, 64
        %v1481 = vpop.permute.xlu0 %1480
        %1482 = vrot.lane.b32.xlu0 %v1393, 64
        %v1483 = vpop.permute.xlu0 %1482
        %1484 = vrot.lane.b32.xlu0 %v1394, 64
        %v1485 = vpop.permute.xlu0 %1484
        %1486 = vrot.lane.b32.xlu0 %v1395, 64
        %v1487 = vpop.permute.xlu0 %1486
        %1488 = vrot.lane.b32.xlu0 %v1396, 64
        %v1489 = vpop.permute.xlu0 %1488
        %1490 = vrot.lane.b32.xlu0 %v1397, 64
        %v1491 = vpop.permute.xlu0 %1490
        %1492 = vrot.lane.b32.xlu0 %v1398, 64
        %v1493 = vpop.permute.xlu0 %1492
        %1494 = vrot.lane.b32.xlu0 %v1399, 64
        %v1495 = vpop.permute.xlu0 %1494
        %v1528 = vadd.f32 %v1335, %v1433
        %v1529 = vadd.f32 %v1336, %v1435
        %v1530 = vadd.f32 %v1337, %v1437
        %v1531 = vadd.f32 %v1338, %v1439
        %v1532 = vadd.f32 %v1339, %v1441
        %v1533 = vadd.f32 %v1340, %v1443
        %v1534 = vadd.f32 %v1341, %v1445
        %v1535 = vadd.f32 %v1342, %v1447
        %v1536 = vadd.f32 %v1343, %v1449
        %v1537 = vadd.f32 %v1344, %v1451
        %v1538 = vadd.f32 %v1345, %v1453
        %v1539 = vadd.f32 %v1346, %v1455
        %v1540 = vadd.f32 %v1347, %v1457
        %v1541 = vadd.f32 %v1348, %v1459
        %v1542 = vadd.f32 %v1349, %v1461
        %v1543 = vadd.f32 %v1350, %v1463
        %v1544 = vadd.f32 %v1351, %v1465
        %v1545 = vadd.f32 %v1352, %v1467
        %v1546 = vadd.f32 %v1353, %v1469
        %v1547 = vadd.f32 %v1354, %v1471
        %v1548 = vadd.f32 %v1355, %v1473
        %v1549 = vadd.f32 %v1356, %v1475
        %v1550 = vadd.f32 %v1357, %v1477
        %v1551 = vadd.f32 %v1358, %v1479
        %v1552 = vadd.f32 %v1359, %v1481
        %v1553 = vadd.f32 %v1360, %v1483
        %v1554 = vadd.f32 %v1361, %v1485
        %v1555 = vadd.f32 %v1362, %v1487
        %v1556 = vadd.f32 %v1363, %v1489
        %v1557 = vadd.f32 %v1364, %v1491
        %v1558 = vadd.f32 %v1365, %v1493
        %v1559 = vadd.f32 %v1366, %v1495
        %s1560 = scalar_lea.vmem [#allocation3], 64
        %v1561 = vld [vmem:[%s1560 + $0x8] sm:$0xff]
        %v1562 = vld [vmem:[%s1560 + $0x18] sm:$0xff]
        %v1563 = vld [vmem:[%s1560 + $0x28] sm:$0xff]
        %v1564 = vld [vmem:[%s1560 + $0x38] sm:$0xff]
        %v1565 = vld [vmem:[%s1560 + $0x48] sm:$0xff]
        %v1566 = vld [vmem:[%s1560 + $0x58] sm:$0xff]
        %v1567 = vld [vmem:[%s1560 + $0x68] sm:$0xff]
        %v1568 = vld [vmem:[%s1560 + $0x78] sm:$0xff]
        %v1569 = vld [vmem:[%s1560 + $0x88] sm:$0xff]
        %v1570 = vld [vmem:[%s1560 + $0x98] sm:$0xff]
        %v1571 = vld [vmem:[%s1560 + $0xa8] sm:$0xff]
        %v1572 = vld [vmem:[%s1560 + $0xb8] sm:$0xff]
        %v1573 = vld [vmem:[%s1560 + $0xc8] sm:$0xff]
        %v1574 = vld [vmem:[%s1560 + $0xd8] sm:$0xff]
        %v1575 = vld [vmem:[%s1560 + $0xe8] sm:$0xff]
        %v1576 = vld [vmem:[%s1560 + $0xf8] sm:$0xff]
        %v1577 = vld [vmem:[%s1560 + $0x108] sm:$0xff]
        %v1578 = vld [vmem:[%s1560 + $0x118] sm:$0xff]
        %v1579 = vld [vmem:[%s1560 + $0x128] sm:$0xff]
        %v1580 = vld [vmem:[%s1560 + $0x138] sm:$0xff]
        %v1581 = vld [vmem:[%s1560 + $0x148] sm:$0xff]
        %v1582 = vld [vmem:[%s1560 + $0x158] sm:$0xff]
        %v1583 = vld [vmem:[%s1560 + $0x168] sm:$0xff]
        %v1584 = vld [vmem:[%s1560 + $0x178] sm:$0xff]
        %v1585 = vld [vmem:[%s1560 + $0x188] sm:$0xff]
        %v1586 = vld [vmem:[%s1560 + $0x198] sm:$0xff]
        %v1587 = vld [vmem:[%s1560 + $0x1a8] sm:$0xff]
        %v1588 = vld [vmem:[%s1560 + $0x1b8] sm:$0xff]
        %v1589 = vld [vmem:[%s1560 + $0x1c8] sm:$0xff]
        %v1590 = vld [vmem:[%s1560 + $0x1d8] sm:$0xff]
        %v1591 = vld [vmem:[%s1560 + $0x1e8] sm:$0xff]
        %v1592 = vld [vmem:[%s1560 + $0x1f8] sm:$0xff]
        %v1593 = vadd.f32 %v1528, %v1561
        %v1594 = vadd.f32 %v1529, %v1562
        %v1595 = vadd.f32 %v1530, %v1563
        %v1596 = vadd.f32 %v1531, %v1564
        %v1597 = vadd.f32 %v1532, %v1565
        %v1598 = vadd.f32 %v1533, %v1566
        %v1599 = vadd.f32 %v1534, %v1567
        %v1600 = vadd.f32 %v1535, %v1568
        %v1601 = vadd.f32 %v1536, %v1569
        %v1602 = vadd.f32 %v1537, %v1570
        %v1603 = vadd.f32 %v1538, %v1571
        %v1604 = vadd.f32 %v1539, %v1572
        %v1605 = vadd.f32 %v1540, %v1573
        %v1606 = vadd.f32 %v1541, %v1574
        %v1607 = vadd.f32 %v1542, %v1575
        %v1608 = vadd.f32 %v1543, %v1576
        %v1609 = vadd.f32 %v1544, %v1577
        %v1610 = vadd.f32 %v1545, %v1578
        %v1611 = vadd.f32 %v1546, %v1579
        %v1612 = vadd.f32 %v1547, %v1580
        %v1613 = vadd.f32 %v1548, %v1581
        %v1614 = vadd.f32 %v1549, %v1582
        %v1615 = vadd.f32 %v1550, %v1583
        %v1616 = vadd.f32 %v1551, %v1584
        %v1617 = vadd.f32 %v1552, %v1585
        %v1618 = vadd.f32 %v1553, %v1586
        %v1619 = vadd.f32 %v1554, %v1587
        %v1620 = vadd.f32 %v1555, %v1588
        %v1621 = vadd.f32 %v1556, %v1589
        %v1622 = vadd.f32 %v1557, %v1590
        %v1623 = vadd.f32 %v1558, %v1591
        %v1624 = vadd.f32 %v1559, %v1592
        %v1625 = vmax.f32 %v1593, 0.0
        %v1626 = vmax.f32 %v1594, 0.0
        %v1627 = vmax.f32 %v1595, 0.0
        %v1628 = vmax.f32 %v1596, 0.0
        %v1629 = vmax.f32 %v1597, 0.0
        %v1630 = vmax.f32 %v1598, 0.0
        %v1631 = vmax.f32 %v1599, 0.0
        %v1632 = vmax.f32 %v1600, 0.0
        %v1633 = vmax.f32 %v1601, 0.0
        %v1634 = vmax.f32 %v1602, 0.0
        %v1635 = vmax.f32 %v1603, 0.0
        %v1636 = vmax.f32 %v1604, 0.0
        %v1637 = vmax.f32 %v1605, 0.0
        %v1638 = vmax.f32 %v1606, 0.0
        %v1639 = vmax.f32 %v1607, 0.0
        %v1640 = vmax.f32 %v1608, 0.0
        %v1641 = vmax.f32 %v1609, 0.0
        %v1642 = vmax.f32 %v1610, 0.0
        %v1643 = vmax.f32 %v1611, 0.0
        %v1644 = vmax.f32 %v1612, 0.0
        %v1645 = vmax.f32 %v1613, 0.0
        %v1646 = vmax.f32 %v1614, 0.0
        %v1647 = vmax.f32 %v1615, 0.0
        %v1648 = vmax.f32 %v1616, 0.0
        %v1649 = vmax.f32 %v1617, 0.0
        %v1650 = vmax.f32 %v1618, 0.0
        %v1651 = vmax.f32 %v1619, 0.0
        %v1652 = vmax.f32 %v1620, 0.0
        %v1653 = vmax.f32 %v1621, 0.0
        %v1654 = vmax.f32 %v1622, 0.0
        %v1655 = vmax.f32 %v1623, 0.0
        %v1656 = vmax.f32 %v1624, 0.0
        %v1657 = vpack.c.bf16 %v1626, %v1625
        %v1658 = vpack.c.bf16 %v1628, %v1627
        %v1659 = vpack.c.bf16 %v1630, %v1629
        %v1660 = vpack.c.bf16 %v1632, %v1631
        %v1661 = vpack.c.bf16 %v1634, %v1633
        %v1662 = vpack.c.bf16 %v1636, %v1635
        %v1663 = vpack.c.bf16 %v1638, %v1637
        %v1664 = vpack.c.bf16 %v1640, %v1639
        %v1665 = vpack.c.bf16 %v1642, %v1641
        %v1666 = vpack.c.bf16 %v1644, %v1643
        %v1667 = vpack.c.bf16 %v1646, %v1645
        %v1668 = vpack.c.bf16 %v1648, %v1647
        %v1669 = vpack.c.bf16 %v1650, %v1649
        %v1670 = vpack.c.bf16 %v1652, %v1651
        %v1671 = vpack.c.bf16 %v1654, %v1653
        %v1672 = vpack.c.bf16 %v1656, %v1655
        %v1674 = vshrl.u32 %v1657, 16
        %v1676 = vrot.slane %v1674, 7
        %v1677 = vshll.u32 %v1657, 16
        %v1679 = vor.u32 %v1676, %v1677
        %v1681 = vshrl.u32 %v1658, 16
        %v1683 = vrot.slane %v1681, 7
        %v1684 = vshll.u32 %v1658, 16
        %v1686 = vor.u32 %v1683, %v1684
        %v1688 = vshrl.u32 %v1659, 16
        %v1690 = vrot.slane %v1688, 7
        %v1691 = vshll.u32 %v1659, 16
        %v1693 = vor.u32 %v1690, %v1691
        %v1695 = vshrl.u32 %v1660, 16
        %v1697 = vrot.slane %v1695, 7
        %v1698 = vshll.u32 %v1660, 16
        %v1700 = vor.u32 %v1697, %v1698
        %v1702 = vshrl.u32 %v1661, 16
        %v1704 = vrot.slane %v1702, 7
        %v1705 = vshll.u32 %v1661, 16
        %v1707 = vor.u32 %v1704, %v1705
        %v1709 = vshrl.u32 %v1662, 16
        %v1711 = vrot.slane %v1709, 7
        %v1712 = vshll.u32 %v1662, 16
        %v1714 = vor.u32 %v1711, %v1712
        %v1716 = vshrl.u32 %v1663, 16
        %v1718 = vrot.slane %v1716, 7
        %v1719 = vshll.u32 %v1663, 16
        %v1721 = vor.u32 %v1718, %v1719
        %v1723 = vshrl.u32 %v1664, 16
        %v1725 = vrot.slane %v1723, 7
        %v1726 = vshll.u32 %v1664, 16
        %v1728 = vor.u32 %v1725, %v1726
        %v1730 = vshrl.u32 %v1665, 16
        %v1732 = vrot.slane %v1730, 7
        %v1733 = vshll.u32 %v1665, 16
        %v1735 = vor.u32 %v1732, %v1733
        %v1737 = vshrl.u32 %v1666, 16
        %v1739 = vrot.slane %v1737, 7
        %v1740 = vshll.u32 %v1666, 16
        %v1742 = vor.u32 %v1739, %v1740
        %v1744 = vshrl.u32 %v1667, 16
        %v1746 = vrot.slane %v1744, 7
        %v1747 = vshll.u32 %v1667, 16
        %v1749 = vor.u32 %v1746, %v1747
        %v1751 = vshrl.u32 %v1668, 16
        %v1753 = vrot.slane %v1751, 7
        %v1754 = vshll.u32 %v1668, 16
        %v1756 = vor.u32 %v1753, %v1754
        %v1758 = vshrl.u32 %v1669, 16
        %v1760 = vrot.slane %v1758, 7
        %v1761 = vshll.u32 %v1669, 16
        %v1763 = vor.u32 %v1760, %v1761
        %v1765 = vshrl.u32 %v1670, 16
        %v1767 = vrot.slane %v1765, 7
        %v1768 = vshll.u32 %v1670, 16
        %v1770 = vor.u32 %v1767, %v1768
        %v1772 = vshrl.u32 %v1671, 16
        %v1774 = vrot.slane %v1772, 7
        %v1775 = vshll.u32 %v1671, 16
        %v1777 = vor.u32 %v1774, %v1775
        %v1779 = vshrl.u32 %v1672, 16
        %v1781 = vrot.slane %v1779, 7
        %v1782 = vshll.u32 %v1672, 16
        %v1784 = vor.u32 %v1781, %v1782
        %v1801 = vld [vmem:[%s515] sm:$0xff]
        %v1802 = vsel %vm518, %v1679, %v1801
        %1803 = vst [vmem:[%s515] sm:$0xff] %v1802
        %v1804 = vld [vmem:[%s515 + $0x10] sm:$0xff]
        %v1805 = vsel %vm518, %v1686, %v1804
        %1806 = vst [vmem:[%s515 + $0x10] sm:$0xff] %v1805
        %v1807 = vld [vmem:[%s515 + $0x20] sm:$0xff]
        %v1808 = vsel %vm518, %v1693, %v1807
        %1809 = vst [vmem:[%s515 + $0x20] sm:$0xff] %v1808
        %v1810 = vld [vmem:[%s515 + $0x30] sm:$0xff]
        %v1811 = vsel %vm518, %v1700, %v1810
        %1812 = vst [vmem:[%s515 + $0x30] sm:$0xff] %v1811
        %v1813 = vld [vmem:[%s515 + $0x40] sm:$0xff]
        %v1814 = vsel %vm518, %v1707, %v1813
        %1815 = vst [vmem:[%s515 + $0x40] sm:$0xff] %v1814
        %v1816 = vld [vmem:[%s515 + $0x50] sm:$0xff]
        %v1817 = vsel %vm518, %v1714, %v1816
        %1818 = vst [vmem:[%s515 + $0x50] sm:$0xff] %v1817
        %v1819 = vld [vmem:[%s515 + $0x60] sm:$0xff]
        %v1820 = vsel %vm518, %v1721, %v1819
        %1821 = vst [vmem:[%s515 + $0x60] sm:$0xff] %v1820
        %v1822 = vld [vmem:[%s515 + $0x70] sm:$0xff]
        %v1823 = vsel %vm518, %v1728, %v1822
        %1824 = vst [vmem:[%s515 + $0x70] sm:$0xff] %v1823
        %v1825 = vld [vmem:[%s515 + $0x80] sm:$0xff]
        %v1826 = vsel %vm518, %v1735, %v1825
        %1827 = vst [vmem:[%s515 + $0x80] sm:$0xff] %v1826
        %v1828 = vld [vmem:[%s515 + $0x90] sm:$0xff]
        %v1829 = vsel %vm518, %v1742, %v1828
        %1830 = vst [vmem:[%s515 + $0x90] sm:$0xff] %v1829
        %v1831 = vld [vmem:[%s515 + $0xa0] sm:$0xff]
        %v1832 = vsel %vm518, %v1749, %v1831
        %1833 = vst [vmem:[%s515 + $0xa0] sm:$0xff] %v1832
        %v1834 = vld [vmem:[%s515 + $0xb0] sm:$0xff]
        %v1835 = vsel %vm518, %v1756, %v1834
        %1836 = vst [vmem:[%s515 + $0xb0] sm:$0xff] %v1835
        %v1837 = vld [vmem:[%s515 + $0xc0] sm:$0xff]
        %v1838 = vsel %vm518, %v1763, %v1837
        %1839 = vst [vmem:[%s515 + $0xc0] sm:$0xff] %v1838
        %v1840 = vld [vmem:[%s515 + $0xd0] sm:$0xff]
        %v1841 = vsel %vm518, %v1770, %v1840
        %1842 = vst [vmem:[%s515 + $0xd0] sm:$0xff] %v1841
        %v1843 = vld [vmem:[%s515 + $0xe0] sm:$0xff]
        %v1844 = vsel %vm518, %v1777, %v1843
        %1845 = vst [vmem:[%s515 + $0xe0] sm:$0xff] %v1844
        %v1846 = vld [vmem:[%s515 + $0xf0] sm:$0xff]
        %v1847 = vsel %vm518, %v1784, %v1846
        %1848 = vst [vmem:[%s515 + $0xf0] sm:$0xff] %v1847
        %1865 = vrot.lane.b32.xlu0 %v1657, 64
        %v1866 = vpop.permute.xlu0 %1865
        %1867 = vrot.lane.b32.xlu0 %v1658, 64
        %v1868 = vpop.permute.xlu0 %1867
        %1869 = vrot.lane.b32.xlu0 %v1659, 64
        %v1870 = vpop.permute.xlu0 %1869
        %1871 = vrot.lane.b32.xlu0 %v1660, 64
        %v1872 = vpop.permute.xlu0 %1871
        %1873 = vrot.lane.b32.xlu0 %v1661, 64
        %v1874 = vpop.permute.xlu0 %1873
        %1875 = vrot.lane.b32.xlu0 %v1662, 64
        %v1876 = vpop.permute.xlu0 %1875
        %1877 = vrot.lane.b32.xlu0 %v1663, 64
        %v1878 = vpop.permute.xlu0 %1877
        %1879 = vrot.lane.b32.xlu0 %v1664, 64
        %v1880 = vpop.permute.xlu0 %1879
        %1881 = vrot.lane.b32.xlu0 %v1665, 64
        %v1882 = vpop.permute.xlu0 %1881
        %1883 = vrot.lane.b32.xlu0 %v1666, 64
        %v1884 = vpop.permute.xlu0 %1883
        %1885 = vrot.lane.b32.xlu0 %v1667, 64
        %v1886 = vpop.permute.xlu0 %1885
        %1887 = vrot.lane.b32.xlu0 %v1668, 64
        %v1888 = vpop.permute.xlu0 %1887
        %1889 = vrot.lane.b32.xlu0 %v1669, 64
        %v1890 = vpop.permute.xlu0 %1889
        %1891 = vrot.lane.b32.xlu0 %v1670, 64
        %v1892 = vpop.permute.xlu0 %1891
        %1893 = vrot.lane.b32.xlu0 %v1671, 64
        %v1894 = vpop.permute.xlu0 %1893
        %1895 = vrot.lane.b32.xlu0 %v1672, 64
        %v1896 = vpop.permute.xlu0 %1895
        %1913 = vst.msk [vmem:[%s515] sm:$0xff] %vm631, %v1866
        %1914 = vst.msk [vmem:[%s515 + $0x10] sm:$0xff] %vm631, %v1868
        %1915 = vst.msk [vmem:[%s515 + $0x20] sm:$0xff] %vm631, %v1870
        %1916 = vst.msk [vmem:[%s515 + $0x30] sm:$0xff] %vm631, %v1872
        %1917 = vst.msk [vmem:[%s515 + $0x40] sm:$0xff] %vm631, %v1874
        %1918 = vst.msk [vmem:[%s515 + $0x50] sm:$0xff] %vm631, %v1876
        %1919 = vst.msk [vmem:[%s515 + $0x60] sm:$0xff] %vm631, %v1878
        %1920 = vst.msk [vmem:[%s515 + $0x70] sm:$0xff] %vm631, %v1880
        %1921 = vst.msk [vmem:[%s515 + $0x80] sm:$0xff] %vm631, %v1882
        %1922 = vst.msk [vmem:[%s515 + $0x90] sm:$0xff] %vm631, %v1884
        %1923 = vst.msk [vmem:[%s515 + $0xa0] sm:$0xff] %vm631, %v1886
        %1924 = vst.msk [vmem:[%s515 + $0xb0] sm:$0xff] %vm631, %v1888
        %1925 = vst.msk [vmem:[%s515 + $0xc0] sm:$0xff] %vm631, %v1890
        %1926 = vst.msk [vmem:[%s515 + $0xd0] sm:$0xff] %vm631, %v1892
        %1927 = vst.msk [vmem:[%s515 + $0xe0] sm:$0xff] %vm631, %v1894
        %1928 = vst.msk [vmem:[%s515 + $0xf0] sm:$0xff] %vm631, %v1896
        %v1929 = vrot.slane %v1677, 1
        %v1930 = vor.u32 %v1674, %v1929
        %v1931 = vrot.slane %v1684, 1
        %v1932 = vor.u32 %v1681, %v1931
        %v1933 = vrot.slane %v1691, 1
        %v1934 = vor.u32 %v1688, %v1933
        %v1935 = vrot.slane %v1698, 1
        %v1936 = vor.u32 %v1695, %v1935
        %v1937 = vrot.slane %v1705, 1
        %v1938 = vor.u32 %v1702, %v1937
        %v1939 = vrot.slane %v1712, 1
        %v1940 = vor.u32 %v1709, %v1939
        %v1941 = vrot.slane %v1719, 1
        %v1942 = vor.u32 %v1716, %v1941
        %v1943 = vrot.slane %v1726, 1
        %v1944 = vor.u32 %v1723, %v1943
        %v1945 = vrot.slane %v1733, 1
        %v1946 = vor.u32 %v1730, %v1945
        %v1947 = vrot.slane %v1740, 1
        %v1948 = vor.u32 %v1737, %v1947
        %v1949 = vrot.slane %v1747, 1
        %v1950 = vor.u32 %v1744, %v1949
        %v1951 = vrot.slane %v1754, 1
        %v1952 = vor.u32 %v1751, %v1951
        %v1953 = vrot.slane %v1761, 1
        %v1954 = vor.u32 %v1758, %v1953
        %v1955 = vrot.slane %v1768, 1
        %v1956 = vor.u32 %v1765, %v1955
        %v1957 = vrot.slane %v1775, 1
        %v1958 = vor.u32 %v1772, %v1957
        %v1959 = vrot.slane %v1782, 1
        %v1960 = vor.u32 %v1779, %v1959
        %v1977 = vld [vmem:[%s515 + $0x8] sm:$0xff]
        %v1978 = vsel %vm697, %v1930, %v1977
        %1979 = vst [vmem:[%s515 + $0x8] sm:$0xff] %v1978
        %v1980 = vld [vmem:[%s515 + $0x18] sm:$0xff]
        %v1981 = vsel %vm697, %v1932, %v1980
        %1982 = vst [vmem:[%s515 + $0x18] sm:$0xff] %v1981
        %v1983 = vld [vmem:[%s515 + $0x28] sm:$0xff]
        %v1984 = vsel %vm697, %v1934, %v1983
        %1985 = vst [vmem:[%s515 + $0x28] sm:$0xff] %v1984
        %v1986 = vld [vmem:[%s515 + $0x38] sm:$0xff]
        %v1987 = vsel %vm697, %v1936, %v1986
        %1988 = vst [vmem:[%s515 + $0x38] sm:$0xff] %v1987
        %v1989 = vld [vmem:[%s515 + $0x48] sm:$0xff]
        %v1990 = vsel %vm697, %v1938, %v1989
        %1991 = vst [vmem:[%s515 + $0x48] sm:$0xff] %v1990
        %v1992 = vld [vmem:[%s515 + $0x58] sm:$0xff]
        %v1993 = vsel %vm697, %v1940, %v1992
        %1994 = vst [vmem:[%s515 + $0x58] sm:$0xff] %v1993
        %v1995 = vld [vmem:[%s515 + $0x68] sm:$0xff]
        %v1996 = vsel %vm697, %v1942, %v1995
        %1997 = vst [vmem:[%s515 + $0x68] sm:$0xff] %v1996
        %v1998 = vld [vmem:[%s515 + $0x78] sm:$0xff]
        %v1999 = vsel %vm697, %v1944, %v1998
        %2000 = vst [vmem:[%s515 + $0x78] sm:$0xff] %v1999
        %v2001 = vld [vmem:[%s515 + $0x88] sm:$0xff]
        %v2002 = vsel %vm697, %v1946, %v2001
        %2003 = vst [vmem:[%s515 + $0x88] sm:$0xff] %v2002
        %v2004 = vld [vmem:[%s515 + $0x98] sm:$0xff]
        %v2005 = vsel %vm697, %v1948, %v2004
        %2006 = vst [vmem:[%s515 + $0x98] sm:$0xff] %v2005
        %v2007 = vld [vmem:[%s515 + $0xa8] sm:$0xff]
        %v2008 = vsel %vm697, %v1950, %v2007
        %2009 = vst [vmem:[%s515 + $0xa8] sm:$0xff] %v2008
        %v2010 = vld [vmem:[%s515 + $0xb8] sm:$0xff]
        %v2011 = vsel %vm697, %v1952, %v2010
        %2012 = vst [vmem:[%s515 + $0xb8] sm:$0xff] %v2011
        %v2013 = vld [vmem:[%s515 + $0xc8] sm:$0xff]
        %v2014 = vsel %vm697, %v1954, %v2013
        %2015 = vst [vmem:[%s515 + $0xc8] sm:$0xff] %v2014
        %v2016 = vld [vmem:[%s515 + $0xd8] sm:$0xff]
        %v2017 = vsel %vm697, %v1956, %v2016
        %2018 = vst [vmem:[%s515 + $0xd8] sm:$0xff] %v2017
        %v2019 = vld [vmem:[%s515 + $0xe8] sm:$0xff]
        %v2020 = vsel %vm697, %v1958, %v2019
        %2021 = vst [vmem:[%s515 + $0xe8] sm:$0xff] %v2020
        %v2022 = vld [vmem:[%s515 + $0xf8] sm:$0xff]
        %v2023 = vsel %vm697, %v1960, %v2022
        %2024 = vst [vmem:[%s515 + $0xf8] sm:$0xff] %v2023
        %v2025 = vld [vmem:[#allocation9] sm:$0xff]
        %v2026 = vld [vmem:[#allocation9 + $0x8] sm:$0xff]
        %v2027 = vld [vmem:[#allocation9 + $0x10] sm:$0xff]
        %v2028 = vld [vmem:[#allocation9 + $0x18] sm:$0xff]
        %v2029 = vld [vmem:[#allocation9 + $0x20] sm:$0xff]
        %v2030 = vld [vmem:[#allocation9 + $0x28] sm:$0xff]
        %v2031 = vld [vmem:[#allocation9 + $0x30] sm:$0xff]
        %v2032 = vld [vmem:[#allocation9 + $0x38] sm:$0xff]
        %v2033 = vld [vmem:[#allocation9 + $0x40] sm:$0xff]
        %v2034 = vld [vmem:[#allocation9 + $0x48] sm:$0xff]
        %v2035 = vld [vmem:[#allocation9 + $0x50] sm:$0xff]
        %v2036 = vld [vmem:[#allocation9 + $0x58] sm:$0xff]
        %v2037 = vld [vmem:[#allocation9 + $0x60] sm:$0xff]
        %v2038 = vld [vmem:[#allocation9 + $0x68] sm:$0xff]
        %v2039 = vld [vmem:[#allocation9 + $0x70] sm:$0xff]
        %v2040 = vld [vmem:[#allocation9 + $0x78] sm:$0xff]
        %v2041 = vld [vmem:[#allocation9 + $0x80] sm:$0xff]
        %v2042 = vld [vmem:[#allocation9 + $0x88] sm:$0xff]
        %v2043 = vld [vmem:[#allocation9 + $0x90] sm:$0xff]
        %v2044 = vld [vmem:[#allocation9 + $0x98] sm:$0xff]
        %v2045 = vld [vmem:[#allocation9 + $0xa0] sm:$0xff]
        %v2046 = vld [vmem:[#allocation9 + $0xa8] sm:$0xff]
        %v2047 = vld [vmem:[#allocation9 + $0xb0] sm:$0xff]
        %v2048 = vld [vmem:[#allocation9 + $0xb8] sm:$0xff]
        %v2049 = vld [vmem:[#allocation2] sm:$0xff]
        %v2050 = vld [vmem:[#allocation2 + $0x8] sm:$0xff]
        %v2051 = vld [vmem:[#allocation2 + $0x10] sm:$0xff]
        %v2052 = vld [vmem:[#allocation2 + $0x18] sm:$0xff]
        %v2053 = vld [vmem:[#allocation2 + $0x20] sm:$0xff]
        %v2054 = vld [vmem:[#allocation2 + $0x28] sm:$0xff]
        %v2055 = vld [vmem:[#allocation2 + $0x30] sm:$0xff]
        %v2056 = vld [vmem:[#allocation2 + $0x38] sm:$0xff]
        %v2057 = vld [vmem:[#allocation2 + $0x40] sm:$0xff]
        %v2058 = vld [vmem:[#allocation2 + $0x48] sm:$0xff]
        %v2059 = vld [vmem:[#allocation2 + $0x50] sm:$0xff]
        %v2060 = vld [vmem:[#allocation2 + $0x58] sm:$0xff]
        %v2061 = vld [vmem:[#allocation2 + $0x60] sm:$0xff]
        %v2062 = vld [vmem:[#allocation2 + $0x68] sm:$0xff]
        %v2063 = vld [vmem:[#allocation2 + $0x70] sm:$0xff]
        %v2064 = vld [vmem:[#allocation2 + $0x78] sm:$0xff]
        %v2089 = vunpack.c.l.b16 %v2025
        %v2090 = vunpack.c.h.b16 %v2025
        %v2091 = vunpack.c.l.b16 %v2026
        %v2092 = vunpack.c.h.b16 %v2026
        %v2093 = vunpack.c.l.b16 %v2027
        %v2094 = vunpack.c.h.b16 %v2027
        %v2095 = vunpack.c.l.b16 %v2028
        %v2096 = vunpack.c.h.b16 %v2028
        %v2097 = vunpack.c.l.b16 %v2029
        %v2098 = vunpack.c.h.b16 %v2029
        %v2099 = vunpack.c.l.b16 %v2030
        %v2100 = vunpack.c.h.b16 %v2030
        %v2101 = vunpack.c.l.b16 %v2031
        %v2102 = vunpack.c.h.b16 %v2031
        %v2103 = vunpack.c.l.b16 %v2032
        %v2104 = vunpack.c.h.b16 %v2032
        %v2105 = vunpack.c.l.b16 %v2033
        %v2106 = vunpack.c.h.b16 %v2033
        %v2107 = vunpack.c.l.b16 %v2034
        %v2108 = vunpack.c.h.b16 %v2034
        %v2109 = vunpack.c.l.b16 %v2035
        %v2110 = vunpack.c.h.b16 %v2035
        %v2111 = vunpack.c.l.b16 %v2036
        %v2112 = vunpack.c.h.b16 %v2036
        %v2113 = vunpack.c.l.b16 %v2037
        %v2114 = vunpack.c.h.b16 %v2037
        %v2115 = vunpack.c.l.b16 %v2038
        %v2116 = vunpack.c.h.b16 %v2038
        %v2117 = vunpack.c.l.b16 %v2039
        %v2118 = vunpack.c.h.b16 %v2039
        %v2119 = vunpack.c.l.b16 %v2040
        %v2120 = vunpack.c.h.b16 %v2040
        %v2121 = vunpack.c.l.b16 %v2041
        %v2122 = vunpack.c.h.b16 %v2041
        %v2123 = vunpack.c.l.b16 %v2042
        %v2124 = vunpack.c.h.b16 %v2042
        %v2125 = vunpack.c.l.b16 %v2043
        %v2126 = vunpack.c.h.b16 %v2043
        %v2127 = vunpack.c.l.b16 %v2044
        %v2128 = vunpack.c.h.b16 %v2044
        %v2129 = vunpack.c.l.b16 %v2045
        %v2130 = vunpack.c.h.b16 %v2045
        %v2131 = vunpack.c.l.b16 %v2046
        %v2132 = vunpack.c.h.b16 %v2046
        %v2133 = vunpack.c.l.b16 %v2047
        %v2134 = vunpack.c.h.b16 %v2047
        %v2135 = vunpack.c.l.b16 %v2048
        %v2136 = vunpack.c.h.b16 %v2048
        %v2137 = vpack.c.b16 %v2091, %v2089
        %v2138 = vpack.c.b16 %v2092, %v2090
        %v2139 = vpack.c.b16 %v2095, %v2093
        %v2140 = vpack.c.b16 %v2096, %v2094
        %v2141 = vpack.c.b16 %v2099, %v2097
        %v2142 = vpack.c.b16 %v2100, %v2098
        %v2143 = vpack.c.b16 %v2103, %v2101
        %v2144 = vpack.c.b16 %v2104, %v2102
        %v2145 = vpack.c.b16 %v2107, %v2105
        %v2146 = vpack.c.b16 %v2108, %v2106
        %v2147 = vpack.c.b16 %v2111, %v2109
        %v2148 = vpack.c.b16 %v2112, %v2110
        %v2149 = vpack.c.b16 %v2115, %v2113
        %v2150 = vpack.c.b16 %v2116, %v2114
        %v2151 = vpack.c.b16 %v2119, %v2117
        %v2152 = vpack.c.b16 %v2120, %v2118
        %v2153 = vpack.c.b16 %v2123, %v2121
        %v2154 = vpack.c.b16 %v2124, %v2122
        %v2155 = vpack.c.b16 %v2127, %v2125
        %v2156 = vpack.c.b16 %v2128, %v2126
        %v2157 = vpack.c.b16 %v2131, %v2129
        %v2158 = vpack.c.b16 %v2132, %v2130
        %v2159 = vpack.c.b16 %v2135, %v2133
        %v2160 = vpack.c.b16 %v2136, %v2134
        %v2186 = vsel %vm220, %v2050, 0
        %v2189 = vsel %vm220, %v2052, 0
        %v2192 = vsel %vm220, %v2054, 0
        %v2195 = vsel %vm220, %v2056, 0
        %v2198 = vsel %vm220, %v2058, 0
        %v2201 = vsel %vm220, %v2060, 0
        %v2204 = vsel %vm220, %v2062, 0
        %v2207 = vsel %vm220, %v2064, 0
        %2209 = vmatprep.subr.bf16.mxu0 %v2138
        %2210 = vmatpush1.bf16.msra.mxu0 %v2137
        %2211 = vmatprep.subr.bf16.mxu0 %v2140
        %2212 = vmatpush1.bf16.msra.mxu0 %v2139
        %2213 = vmatprep.subr.bf16.mxu0 %v2142
        %2214 = vmatpush1.bf16.msra.mxu0 %v2141
        %2215 = vmatprep.subr.bf16.mxu0 %v2144
        %2216 = vmatpush1.bf16.msra.mxu0 %v2143
        %2217 = vmatprep.subr.bf16.mxu0 %v2146
        %2218 = vmatpush1.bf16.msra.mxu0 %v2145
        %2219 = vmatprep.subr.bf16.mxu0 %v2148
        %2220 = vmatpush1.bf16.msra.mxu0 %v2147
        %2221 = vmatprep.subr.bf16.mxu0 %v2150
        %2222 = vmatpush1.bf16.msra.mxu0 %v2149
        %2223 = vmatprep.subr.bf16.mxu0 %v2152
        %2224 = vmatpush1.bf16.msra.mxu0 %v2151
        %2225 = vmatprep.subr.bf16.mxu0 %v2154
        %2226 = vmatpush1.bf16.msra.mxu0 %v2153
        %2227 = vmatprep.subr.bf16.mxu0 %v2156
        %2228 = vmatpush1.bf16.msra.mxu0 %v2155
        %2229 = vmatprep.subr.bf16.mxu0 %v2158
        %2230 = vmatpush1.bf16.msra.mxu0 %v2157
        %2231 = vmatprep.subr.bf16.mxu0 %v2160
        %2232 = vmatpush1.bf16.msra.mxu0 %v2159
        %2233 = vmatprep.subr.bf16.mxu0 0
        %2234 = vmatpush1.bf16.msra.mxu0 0
        %2235 = vmatprep.subr.bf16.mxu0 0
        %2236 = vmatpush1.bf16.msra.mxu0 0
        %2237 = vmatprep.subr.bf16.mxu0 0
        %2238 = vmatpush1.bf16.msra.mxu0 0
        %2239 = vmatprep.subr.bf16.mxu0 0
        %2240 = vmatpush1.bf16.msra.mxu0 0
        %2241 = vmatprep.mubr.bf16.mxu0 %v2186
        %2242 = vmatmul.mubr.bf16.gmra.mrb[0].mxu0 %v2049
        %v2243 = vpop.f32.mrb[0].mxu0
        %v2244 = vadd.f32 0.0, %v2243
        %v2245 = vpop.f32.mrb[0].mxu0
        %v2246 = vadd.f32 0.0, %v2245
        %v2247 = vpop.f32.mrb[0].mxu0
        %v2248 = vadd.f32 0.0, %v2247
        %v2249 = vpop.f32.mrb[0].mxu0
        %v2250 = vadd.f32 0.0, %v2249
        %2251 = vmatprep.mubr.bf16.mxu0 %v2189
        %2252 = vmatmul.mubr.bf16.gmra.mrb[0].mxu0 %v2051
        %v2253 = vpop.f32.mrb[0].mxu0
        %v2254 = vadd.f32 0.0, %v2253
        %v2255 = vpop.f32.mrb[0].mxu0
        %v2256 = vadd.f32 0.0, %v2255
        %v2257 = vpop.f32.mrb[0].mxu0
        %v2258 = vadd.f32 0.0, %v2257
        %v2259 = vpop.f32.mrb[0].mxu0
        %v2260 = vadd.f32 0.0, %v2259
        %2261 = vmatprep.mubr.bf16.mxu0 %v2192
        %2262 = vmatmul.mubr.bf16.gmra.mrb[0].mxu0 %v2053
        %v2263 = vpop.f32.mrb[0].mxu0
        %v2264 = vadd.f32 0.0, %v2263
        %v2265 = vpop.f32.mrb[0].mxu0
        %v2266 = vadd.f32 0.0, %v2265
        %v2267 = vpop.f32.mrb[0].mxu0
        %v2268 = vadd.f32 0.0, %v2267
        %v2269 = vpop.f32.mrb[0].mxu0
        %v2270 = vadd.f32 0.0, %v2269
        %2271 = vmatprep.mubr.bf16.mxu0 %v2195
        %2272 = vmatmul.mubr.bf16.gmra.mrb[0].mxu0 %v2055
        %v2273 = vpop.f32.mrb[0].mxu0
        %v2274 = vadd.f32 0.0, %v2273
        %v2275 = vpop.f32.mrb[0].mxu0
        %v2276 = vadd.f32 0.0, %v2275
        %v2277 = vpop.f32.mrb[0].mxu0
        %v2278 = vadd.f32 0.0, %v2277
        %v2279 = vpop.f32.mrb[0].mxu0
        %v2280 = vadd.f32 0.0, %v2279
        %2281 = vmatprep.mubr.bf16.mxu0 %v2198
        %2282 = vmatmul.mubr.bf16.gmra.mrb[0].mxu0 %v2057
        %v2283 = vpop.f32.mrb[0].mxu0
        %v2284 = vadd.f32 0.0, %v2283
        %v2285 = vpop.f32.mrb[0].mxu0
        %v2286 = vadd.f32 0.0, %v2285
        %v2287 = vpop.f32.mrb[0].mxu0
        %v2288 = vadd.f32 0.0, %v2287
        %v2289 = vpop.f32.mrb[0].mxu0
        %v2290 = vadd.f32 0.0, %v2289
        %2291 = vmatprep.mubr.bf16.mxu0 %v2201
        %2292 = vmatmul.mubr.bf16.gmra.mrb[0].mxu0 %v2059
        %v2293 = vpop.f32.mrb[0].mxu0
        %v2294 = vadd.f32 0.0, %v2293
        %v2295 = vpop.f32.mrb[0].mxu0
        %v2296 = vadd.f32 0.0, %v2295
        %v2297 = vpop.f32.mrb[0].mxu0
        %v2298 = vadd.f32 0.0, %v2297
        %v2299 = vpop.f32.mrb[0].mxu0
        %v2300 = vadd.f32 0.0, %v2299
        %2301 = vmatprep.mubr.bf16.mxu0 %v2204
        %2302 = vmatmul.mubr.bf16.gmra.mrb[0].mxu0 %v2061
        %v2303 = vpop.f32.mrb[0].mxu0
        %v2304 = vadd.f32 0.0, %v2303
        %v2305 = vpop.f32.mrb[0].mxu0
        %v2306 = vadd.f32 0.0, %v2305
        %v2307 = vpop.f32.mrb[0].mxu0
        %v2308 = vadd.f32 0.0, %v2307
        %v2309 = vpop.f32.mrb[0].mxu0
        %v2310 = vadd.f32 0.0, %v2309
        %2311 = vmatprep.mubr.bf16.mxu0 %v2207
        %2312 = vmatmul.mubr.bf16.gmra.mrb[0].mxu0 %v2063
        %v2313 = vpop.f32.mrb[0].mxu0
        %v2314 = vadd.f32 0.0, %v2313
        %v2315 = vpop.f32.mrb[0].mxu0
        %v2316 = vadd.f32 0.0, %v2315
        %v2317 = vpop.f32.mrb[0].mxu0
        %v2318 = vadd.f32 0.0, %v2317
        %v2319 = vpop.f32.mrb[0].mxu0
        %v2320 = vadd.f32 0.0, %v2319
        %2321 = vdwg.mxu0
        %2322 = vst [vmem:[#allocation3] sm:$0xff] %v2244
        %2323 = vst.msk [vmem:[#allocation3 + $0x8] sm:$0xff] %vm220, %v2246
        %2324 = vst [vmem:[#allocation3 + $0x10] sm:$0xff] %v2248
        %2325 = vst.msk [vmem:[#allocation3 + $0x18] sm:$0xff] %vm220, %v2250
        %2326 = vst [vmem:[#allocation3 + $0x20] sm:$0xff] %v2254
        %2327 = vst.msk [vmem:[#allocation3 + $0x28] sm:$0xff] %vm220, %v2256
        %2328 = vst [vmem:[#allocation3 + $0x30] sm:$0xff] %v2258
        %2329 = vst.msk [vmem:[#allocation3 + $0x38] sm:$0xff] %vm220, %v2260
        %2330 = vst [vmem:[#allocation3 + $0x40] sm:$0xff] %v2264
        %2331 = vst.msk [vmem:[#allocation3 + $0x48] sm:$0xff] %vm220, %v2266
        %2332 = vst [vmem:[#allocation3 + $0x50] sm:$0xff] %v2268
        %2333 = vst.msk [vmem:[#allocation3 + $0x58] sm:$0xff] %vm220, %v2270
        %2334 = vst [vmem:[#allocation3 + $0x60] sm:$0xff] %v2274
        %2335 = vst.msk [vmem:[#allocation3 + $0x68] sm:$0xff] %vm220, %v2276
        %2336 = vst [vmem:[#allocation3 + $0x70] sm:$0xff] %v2278
        %2337 = vst.msk [vmem:[#allocation3 + $0x78] sm:$0xff] %vm220, %v2280
        %2338 = vst [vmem:[#allocation3 + $0x80] sm:$0xff] %v2284
        %2339 = vst.msk [vmem:[#allocation3 + $0x88] sm:$0xff] %vm220, %v2286
        %2340 = vst [vmem:[#allocation3 + $0x90] sm:$0xff] %v2288
        %2341 = vst.msk [vmem:[#allocation3 + $0x98] sm:$0xff] %vm220, %v2290
        %2342 = vst [vmem:[#allocation3 + $0xa0] sm:$0xff] %v2294
        %2343 = vst.msk [vmem:[#allocation3 + $0xa8] sm:$0xff] %vm220, %v2296
        %2344 = vst [vmem:[#allocation3 + $0xb0] sm:$0xff] %v2298
        %2345 = vst.msk [vmem:[#allocation3 + $0xb8] sm:$0xff] %vm220, %v2300
        %2346 = vst [vmem:[#allocation3 + $0xc0] sm:$0xff] %v2304
        %2347 = vst.msk [vmem:[#allocation3 + $0xc8] sm:$0xff] %vm220, %v2306
        %2348 = vst [vmem:[#allocation3 + $0xd0] sm:$0xff] %v2308
        %2349 = vst.msk [vmem:[#allocation3 + $0xd8] sm:$0xff] %vm220, %v2310
        %2350 = vst [vmem:[#allocation3 + $0xe0] sm:$0xff] %v2314
        %2351 = vst.msk [vmem:[#allocation3 + $0xe8] sm:$0xff] %vm220, %v2316
        %2352 = vst [vmem:[#allocation3 + $0xf0] sm:$0xff] %v2318
        %2353 = vst.msk [vmem:[#allocation3 + $0xf8] sm:$0xff] %vm220, %v2320
        %v2354 = vld [vmem:[%s1075] sm:$0xff]
        %v2355 = vld [vmem:[%s1075 + $0x8] sm:$0xff]
        %v2356 = vld [vmem:[%s1075 + $0x10] sm:$0xff]
        %v2357 = vld [vmem:[%s1075 + $0x18] sm:$0xff]
        %v2358 = vld [vmem:[%s1075 + $0x20] sm:$0xff]
        %v2359 = vld [vmem:[%s1075 + $0x28] sm:$0xff]
        %v2360 = vld [vmem:[%s1075 + $0x30] sm:$0xff]
        %v2361 = vld [vmem:[%s1075 + $0x38] sm:$0xff]
        %v2362 = vld [vmem:[%s1075 + $0x40] sm:$0xff]
        %v2363 = vld [vmem:[%s1075 + $0x48] sm:$0xff]
        %v2364 = vld [vmem:[%s1075 + $0x50] sm:$0xff]
        %v2365 = vld [vmem:[%s1075 + $0x58] sm:$0xff]
        %v2366 = vld [vmem:[%s1075 + $0x60] sm:$0xff]
        %v2367 = vld [vmem:[%s1075 + $0x68] sm:$0xff]
        %v2368 = vld [vmem:[%s1075 + $0x70] sm:$0xff]
        %v2369 = vld [vmem:[%s1075 + $0x78] sm:$0xff]
        %v2371 = vsel %vm220, %v2355, 0
        %v2374 = vsel %vm220, %v2357, 0
        %v2377 = vsel %vm220, %v2359, 0
        %v2380 = vsel %vm220, %v2361, 0
        %v2383 = vsel %vm220, %v2363, 0
        %v2386 = vsel %vm220, %v2365, 0
        %v2389 = vsel %vm220, %v2367, 0
        %v2392 = vsel %vm220, %v2369, 0
        %2394 = vmatprep.subr.bf16.mxu0 %v2138
        %2395 = vmatpush1.bf16.msra.mxu0 %v2137
        %2396 = vmatprep.subr.bf16.mxu0 %v2140
        %2397 = vmatpush1.bf16.msra.mxu0 %v2139
        %2398 = vmatprep.subr.bf16.mxu0 %v2142
        %2399 = vmatpush1.bf16.msra.mxu0 %v2141
        %2400 = vmatprep.subr.bf16.mxu0 %v2144
        %2401 = vmatpush1.bf16.msra.mxu0 %v2143
        %2402 = vmatprep.subr.bf16.mxu0 %v2146
        %2403 = vmatpush1.bf16.msra.mxu0 %v2145
        %2404 = vmatprep.subr.bf16.mxu0 %v2148
        %2405 = vmatpush1.bf16.msra.mxu0 %v2147
        %2406 = vmatprep.subr.bf16.mxu0 %v2150
        %2407 = vmatpush1.bf16.msra.mxu0 %v2149
        %2408 = vmatprep.subr.bf16.mxu0 %v2152
        %2409 = vmatpush1.bf16.msra.mxu0 %v2151
        %2410 = vmatprep.subr.bf16.mxu0 %v2154
        %2411 = vmatpush1.bf16.msra.mxu0 %v2153
        %2412 = vmatprep.subr.bf16.mxu0 %v2156
        %2413 = vmatpush1.bf16.msra.mxu0 %v2155
        %2414 = vmatprep.subr.bf16.mxu0 %v2158
        %2415 = vmatpush1.bf16.msra.mxu0 %v2157
        %2416 = vmatprep.subr.bf16.mxu0 %v2160
        %2417 = vmatpush1.bf16.msra.mxu0 %v2159
        %2418 = vmatprep.subr.bf16.mxu0 0
        %2419 = vmatpush1.bf16.msra.mxu0 0
        %2420 = vmatprep.subr.bf16.mxu0 0
        %2421 = vmatpush1.bf16.msra.mxu0 0
        %2422 = vmatprep.subr.bf16.mxu0 0
        %2423 = vmatpush1.bf16.msra.mxu0 0
        %2424 = vmatprep.subr.bf16.mxu0 0
        %2425 = vmatpush1.bf16.msra.mxu0 0
        %2426 = vmatprep.mubr.bf16.mxu0 %v2371
        %2427 = vmatmul.mubr.bf16.gmra.mrb[0].mxu0 %v2354
        %v2428 = vpop.f32.mrb[0].mxu0
        %v2429 = vadd.f32 0.0, %v2428
        %v2430 = vpop.f32.mrb[0].mxu0
        %v2431 = vadd.f32 0.0, %v2430
        %v2432 = vpop.f32.mrb[0].mxu0
        %v2433 = vadd.f32 0.0, %v2432
        %v2434 = vpop.f32.mrb[0].mxu0
        %v2435 = vadd.f32 0.0, %v2434
        %2436 = vmatprep.mubr.bf16.mxu0 %v2374
        %2437 = vmatmul.mubr.bf16.gmra.mrb[0].mxu0 %v2356
        %v2438 = vpop.f32.mrb[0].mxu0
        %v2439 = vadd.f32 0.0, %v2438
        %v2440 = vpop.f32.mrb[0].mxu0
        %v2441 = vadd.f32 0.0, %v2440
        %v2442 = vpop.f32.mrb[0].mxu0
        %v2443 = vadd.f32 0.0, %v2442
        %v2444 = vpop.f32.mrb[0].mxu0
        %v2445 = vadd.f32 0.0, %v2444
        %2446 = vmatprep.mubr.bf16.mxu0 %v2377
        %2447 = vmatmul.mubr.bf16.gmra.mrb[0].mxu0 %v2358
        %v2448 = vpop.f32.mrb[0].mxu0
        %v2449 = vadd.f32 0.0, %v2448
        %v2450 = vpop.f32.mrb[0].mxu0
        %v2451 = vadd.f32 0.0, %v2450
        %v2452 = vpop.f32.mrb[0].mxu0
        %v2453 = vadd.f32 0.0, %v2452
        %v2454 = vpop.f32.mrb[0].mxu0
        %v2455 = vadd.f32 0.0, %v2454
        %2456 = vmatprep.mubr.bf16.mxu0 %v2380
        %2457 = vmatmul.mubr.bf16.gmra.mrb[0].mxu0 %v2360
        %v2458 = vpop.f32.mrb[0].mxu0
        %v2459 = vadd.f32 0.0, %v2458
        %v2460 = vpop.f32.mrb[0].mxu0
        %v2461 = vadd.f32 0.0, %v2460
        %v2462 = vpop.f32.mrb[0].mxu0
        %v2463 = vadd.f32 0.0, %v2462
        %v2464 = vpop.f32.mrb[0].mxu0
        %v2465 = vadd.f32 0.0, %v2464
        %2466 = vmatprep.mubr.bf16.mxu0 %v2383
        %2467 = vmatmul.mubr.bf16.gmra.mrb[0].mxu0 %v2362
        %v2468 = vpop.f32.mrb[0].mxu0
        %v2469 = vadd.f32 0.0, %v2468
        %v2470 = vpop.f32.mrb[0].mxu0
        %v2471 = vadd.f32 0.0, %v2470
        %v2472 = vpop.f32.mrb[0].mxu0
        %v2473 = vadd.f32 0.0, %v2472
        %v2474 = vpop.f32.mrb[0].mxu0
        %v2475 = vadd.f32 0.0, %v2474
        %2476 = vmatprep.mubr.bf16.mxu0 %v2386
        %2477 = vmatmul.mubr.bf16.gmra.mrb[0].mxu0 %v2364
        %v2478 = vpop.f32.mrb[0].mxu0
        %v2479 = vadd.f32 0.0, %v2478
        %v2480 = vpop.f32.mrb[0].mxu0
        %v2481 = vadd.f32 0.0, %v2480
        %v2482 = vpop.f32.mrb[0].mxu0
        %v2483 = vadd.f32 0.0, %v2482
        %v2484 = vpop.f32.mrb[0].mxu0
        %v2485 = vadd.f32 0.0, %v2484
        %2486 = vmatprep.mubr.bf16.mxu0 %v2389
        %2487 = vmatmul.mubr.bf16.gmra.mrb[0].mxu0 %v2366
        %v2488 = vpop.f32.mrb[0].mxu0
        %v2489 = vadd.f32 0.0, %v2488
        %v2490 = vpop.f32.mrb[0].mxu0
        %v2491 = vadd.f32 0.0, %v2490
        %v2492 = vpop.f32.mrb[0].mxu0
        %v2493 = vadd.f32 0.0, %v2492
        %v2494 = vpop.f32.mrb[0].mxu0
        %v2495 = vadd.f32 0.0, %v2494
        %2496 = vmatprep.mubr.bf16.mxu0 %v2392
        %2497 = vmatmul.mubr.bf16.gmra.mrb[0].mxu0 %v2368
        %v2498 = vpop.f32.mrb[0].mxu0
        %v2499 = vadd.f32 0.0, %v2498
        %v2500 = vpop.f32.mrb[0].mxu0
        %v2501 = vadd.f32 0.0, %v2500
        %v2502 = vpop.f32.mrb[0].mxu0
        %v2503 = vadd.f32 0.0, %v2502
        %v2504 = vpop.f32.mrb[0].mxu0
        %v2505 = vadd.f32 0.0, %v2504
        %2506 = vdwg.mxu0
        %2507 = vst [vmem:[%s1229] sm:$0xff] %v2429
        %2508 = vst.msk [vmem:[%s1229 + $0x8] sm:$0xff] %vm220, %v2431
        %2509 = vst [vmem:[%s1229 + $0x10] sm:$0xff] %v2433
        %2510 = vst.msk [vmem:[%s1229 + $0x18] sm:$0xff] %vm220, %v2435
        %2511 = vst [vmem:[%s1229 + $0x20] sm:$0xff] %v2439
        %2512 = vst.msk [vmem:[%s1229 + $0x28] sm:$0xff] %vm220, %v2441
        %2513 = vst [vmem:[%s1229 + $0x30] sm:$0xff] %v2443
        %2514 = vst.msk [vmem:[%s1229 + $0x38] sm:$0xff] %vm220, %v2445
        %2515 = vst [vmem:[%s1229 + $0x40] sm:$0xff] %v2449
        %2516 = vst.msk [vmem:[%s1229 + $0x48] sm:$0xff] %vm220, %v2451
        %2517 = vst [vmem:[%s1229 + $0x50] sm:$0xff] %v2453
        %2518 = vst.msk [vmem:[%s1229 + $0x58] sm:$0xff] %vm220, %v2455
        %2519 = vst [vmem:[%s1229 + $0x60] sm:$0xff] %v2459
        %2520 = vst.msk [vmem:[%s1229 + $0x68] sm:$0xff] %vm220, %v2461
        %2521 = vst [vmem:[%s1229 + $0x70] sm:$0xff] %v2463
        %2522 = vst.msk [vmem:[%s1229 + $0x78] sm:$0xff] %vm220, %v2465
        %2523 = vst [vmem:[%s1229 + $0x80] sm:$0xff] %v2469
        %2524 = vst.msk [vmem:[%s1229 + $0x88] sm:$0xff] %vm220, %v2471
        %2525 = vst [vmem:[%s1229 + $0x90] sm:$0xff] %v2473
        %2526 = vst.msk [vmem:[%s1229 + $0x98] sm:$0xff] %vm220, %v2475
        %2527 = vst [vmem:[%s1229 + $0xa0] sm:$0xff] %v2479
        %2528 = vst.msk [vmem:[%s1229 + $0xa8] sm:$0xff] %vm220, %v2481
        %2529 = vst [vmem:[%s1229 + $0xb0] sm:$0xff] %v2483
        %2530 = vst.msk [vmem:[%s1229 + $0xb8] sm:$0xff] %vm220, %v2485
        %2531 = vst [vmem:[%s1229 + $0xc0] sm:$0xff] %v2489
        %2532 = vst.msk [vmem:[%s1229 + $0xc8] sm:$0xff] %vm220, %v2491
        %2533 = vst [vmem:[%s1229 + $0xd0] sm:$0xff] %v2493
        %2534 = vst.msk [vmem:[%s1229 + $0xd8] sm:$0xff] %vm220, %v2495
        %2535 = vst [vmem:[%s1229 + $0xe0] sm:$0xff] %v2499
        %2536 = vst.msk [vmem:[%s1229 + $0xe8] sm:$0xff] %vm220, %v2501
        %2537 = vst [vmem:[%s1229 + $0xf0] sm:$0xff] %v2503
        %2538 = vst.msk [vmem:[%s1229 + $0xf8] sm:$0xff] %vm220, %v2505
        %v2539 = vld [vmem:[%s1262] sm:$0xff]
        %v2540 = vld [vmem:[%s1262 + $0x8] sm:$0xff]
        %v2541 = vld [vmem:[%s1262 + $0x10] sm:$0xff]
        %v2542 = vld [vmem:[%s1262 + $0x18] sm:$0xff]
        %v2544 = vsel %vm220, %v2540, 0
        %v2547 = vsel %vm220, %v2542, 0
        %2549 = vmatprep.subr.bf16.mxu0 %v2138
        %2550 = vmatpush1.bf16.msra.mxu0 %v2137
        %2551 = vmatprep.subr.bf16.mxu0 %v2140
        %2552 = vmatpush1.bf16.msra.mxu0 %v2139
        %2553 = vmatprep.subr.bf16.mxu0 %v2142
        %2554 = vmatpush1.bf16.msra.mxu0 %v2141
        %2555 = vmatprep.subr.bf16.mxu0 %v2144
        %2556 = vmatpush1.bf16.msra.mxu0 %v2143
        %2557 = vmatprep.subr.bf16.mxu0 %v2146
        %2558 = vmatpush1.bf16.msra.mxu0 %v2145
        %2559 = vmatprep.subr.bf16.mxu0 %v2148
        %2560 = vmatpush1.bf16.msra.mxu0 %v2147
        %2561 = vmatprep.subr.bf16.mxu0 %v2150
        %2562 = vmatpush1.bf16.msra.mxu0 %v2149
        %2563 = vmatprep.subr.bf16.mxu0 %v2152
        %2564 = vmatpush1.bf16.msra.mxu0 %v2151
        %2565 = vmatprep.subr.bf16.mxu0 %v2154
        %2566 = vmatpush1.bf16.msra.mxu0 %v2153
        %2567 = vmatprep.subr.bf16.mxu0 %v2156
        %2568 = vmatpush1.bf16.msra.mxu0 %v2155
        %2569 = vmatprep.subr.bf16.mxu0 %v2158
        %2570 = vmatpush1.bf16.msra.mxu0 %v2157
        %2571 = vmatprep.subr.bf16.mxu0 %v2160
        %2572 = vmatpush1.bf16.msra.mxu0 %v2159
        %2573 = vmatprep.subr.bf16.mxu0 0
        %2574 = vmatpush1.bf16.msra.mxu0 0
        %2575 = vmatprep.subr.bf16.mxu0 0
        %2576 = vmatpush1.bf16.msra.mxu0 0
        %2577 = vmatprep.subr.bf16.mxu0 0
        %2578 = vmatpush1.bf16.msra.mxu0 0
        %2579 = vmatprep.subr.bf16.mxu0 0
        %2580 = vmatpush1.bf16.msra.mxu0 0
        %2581 = vmatprep.mubr.bf16.mxu0 %v2544
        %2582 = vmatmul.mubr.bf16.gmra.mrb[0].mxu0 %v2539
        %v2583 = vpop.f32.mrb[0].mxu0
        %v2584 = vadd.f32 0.0, %v2583
        %v2585 = vpop.f32.mrb[0].mxu0
        %v2586 = vadd.f32 0.0, %v2585
        %v2587 = vpop.f32.mrb[0].mxu0
        %v2588 = vadd.f32 0.0, %v2587
        %v2589 = vpop.f32.mrb[0].mxu0
        %v2590 = vadd.f32 0.0, %v2589
        %2591 = vmatprep.mubr.bf16.mxu0 %v2547
        %2592 = vmatmul.mubr.bf16.gmra.mrb[0].mxu0 %v2541
        %v2593 = vpop.f32.mrb[0].mxu0
        %v2594 = vadd.f32 0.0, %v2593
        %v2595 = vpop.f32.mrb[0].mxu0
        %v2596 = vadd.f32 0.0, %v2595
        %v2597 = vpop.f32.mrb[0].mxu0
        %v2598 = vadd.f32 0.0, %v2597
        %v2599 = vpop.f32.mrb[0].mxu0
        %v2600 = vadd.f32 0.0, %v2599
        %2601 = vdwg.mxu0
        %2602 = vst [vmem:[%s1326] sm:$0xff] %v2584
        %2603 = vst.msk [vmem:[%s1326 + $0x8] sm:$0xff] %vm220, %v2586
        %2604 = vst [vmem:[%s1326 + $0x10] sm:$0xff] %v2588
        %2605 = vst.msk [vmem:[%s1326 + $0x18] sm:$0xff] %vm220, %v2590
        %2606 = vst [vmem:[%s1326 + $0x20] sm:$0xff] %v2594
        %2607 = vst.msk [vmem:[%s1326 + $0x28] sm:$0xff] %vm220, %v2596
        %2608 = vst [vmem:[%s1326 + $0x30] sm:$0xff] %v2598
        %2609 = vst.msk [vmem:[%s1326 + $0x38] sm:$0xff] %vm220, %v2600
        %v2610 = vld [vmem:[#allocation3] sm:$0xff]
        %v2611 = vld [vmem:[#allocation3 + $0x10] sm:$0xff]
        %v2612 = vld [vmem:[#allocation3 + $0x20] sm:$0xff]
        %v2613 = vld [vmem:[#allocation3 + $0x30] sm:$0xff]
        %v2614 = vld [vmem:[#allocation3 + $0x40] sm:$0xff]
        %v2615 = vld [vmem:[#allocation3 + $0x50] sm:$0xff]
        %v2616 = vld [vmem:[#allocation3 + $0x60] sm:$0xff]
        %v2617 = vld [vmem:[#allocation3 + $0x70] sm:$0xff]
        %v2618 = vld [vmem:[#allocation3 + $0x80] sm:$0xff]
        %v2619 = vld [vmem:[#allocation3 + $0x90] sm:$0xff]
        %v2620 = vld [vmem:[#allocation3 + $0xa0] sm:$0xff]
        %v2621 = vld [vmem:[#allocation3 + $0xb0] sm:$0xff]
        %v2622 = vld [vmem:[#allocation3 + $0xc0] sm:$0xff]
        %v2623 = vld [vmem:[#allocation3 + $0xd0] sm:$0xff]
        %v2624 = vld [vmem:[#allocation3 + $0xe0] sm:$0xff]
        %v2625 = vld [vmem:[#allocation3 + $0xf0] sm:$0xff]
        %v2626 = vld [vmem:[#allocation3 + $0x100] sm:$0xff]
        %v2627 = vld [vmem:[#allocation3 + $0x110] sm:$0xff]
        %v2628 = vld [vmem:[#allocation3 + $0x120] sm:$0xff]
        %v2629 = vld [vmem:[#allocation3 + $0x130] sm:$0xff]
        %v2630 = vld [vmem:[#allocation3 + $0x140] sm:$0xff]
        %v2631 = vld [vmem:[#allocation3 + $0x150] sm:$0xff]
        %v2632 = vld [vmem:[#allocation3 + $0x160] sm:$0xff]
        %v2633 = vld [vmem:[#allocation3 + $0x170] sm:$0xff]
        %v2634 = vld [vmem:[#allocation3 + $0x180] sm:$0xff]
        %v2635 = vld [vmem:[#allocation3 + $0x190] sm:$0xff]
        %v2636 = vld [vmem:[#allocation3 + $0x1a0] sm:$0xff]
        %v2637 = vld [vmem:[#allocation3 + $0x1b0] sm:$0xff]
        %v2638 = vld [vmem:[#allocation3 + $0x1c0] sm:$0xff]
        %v2639 = vld [vmem:[#allocation3 + $0x1d0] sm:$0xff]
        %v2640 = vld [vmem:[#allocation3 + $0x1e0] sm:$0xff]
        %v2641 = vld [vmem:[#allocation3 + $0x1f0] sm:$0xff]
        %v2642 = vld [vmem:[%s1367] sm:$0xff]
        %v2643 = vld [vmem:[%s1367 + $0x10] sm:$0xff]
        %v2644 = vld [vmem:[%s1367 + $0x20] sm:$0xff]
        %v2645 = vld [vmem:[%s1367 + $0x30] sm:$0xff]
        %v2646 = vld [vmem:[%s1367 + $0x40] sm:$0xff]
        %v2647 = vld [vmem:[%s1367 + $0x50] sm:$0xff]
        %v2648 = vld [vmem:[%s1367 + $0x60] sm:$0xff]
        %v2649 = vld [vmem:[%s1367 + $0x70] sm:$0xff]
        %v2650 = vld [vmem:[%s1367 + $0x80] sm:$0xff]
        %v2651 = vld [vmem:[%s1367 + $0x90] sm:$0xff]
        %v2652 = vld [vmem:[%s1367 + $0xa0] sm:$0xff]
        %v2653 = vld [vmem:[%s1367 + $0xb0] sm:$0xff]
        %v2654 = vld [vmem:[%s1367 + $0xc0] sm:$0xff]
        %v2655 = vld [vmem:[%s1367 + $0xd0] sm:$0xff]
        %v2656 = vld [vmem:[%s1367 + $0xe0] sm:$0xff]
        %v2657 = vld [vmem:[%s1367 + $0xf0] sm:$0xff]
        %v2658 = vld [vmem:[%s1367 + $0x100] sm:$0xff]
        %v2659 = vld [vmem:[%s1367 + $0x110] sm:$0xff]
        %v2660 = vld [vmem:[%s1367 + $0x120] sm:$0xff]
        %v2661 = vld [vmem:[%s1367 + $0x130] sm:$0xff]
        %v2662 = vld [vmem:[%s1367 + $0x140] sm:$0xff]
        %v2663 = vld [vmem:[%s1367 + $0x150] sm:$0xff]
        %v2664 = vld [vmem:[%s1367 + $0x160] sm:$0xff]
        %v2665 = vld [vmem:[%s1367 + $0x170] sm:$0xff]
        %v2666 = vld [vmem:[%s1367 + $0x180] sm:$0xff]
        %v2667 = vld [vmem:[%s1367 + $0x190] sm:$0xff]
        %v2668 = vld [vmem:[%s1367 + $0x1a0] sm:$0xff]
        %v2669 = vld [vmem:[%s1367 + $0x1b0] sm:$0xff]
        %v2670 = vld [vmem:[%s1367 + $0x1c0] sm:$0xff]
        %v2671 = vld [vmem:[%s1367 + $0x1d0] sm:$0xff]
        %v2672 = vld [vmem:[%s1367 + $0x1e0] sm:$0xff]
        %v2673 = vld [vmem:[%s1367 + $0x1f0] sm:$0xff]
        %2706 = vrot.lane.b32.xlu0 %v2642, 64
        %v2707 = vpop.permute.xlu0 %2706
        %2708 = vrot.lane.b32.xlu0 %v2643, 64
        %v2709 = vpop.permute.xlu0 %2708
        %2710 = vrot.lane.b32.xlu0 %v2644, 64
        %v2711 = vpop.permute.xlu0 %2710
        %2712 = vrot.lane.b32.xlu0 %v2645, 64
        %v2713 = vpop.permute.xlu0 %2712
        %2714 = vrot.lane.b32.xlu0 %v2646, 64
        %v2715 = vpop.permute.xlu0 %2714
        %2716 = vrot.lane.b32.xlu0 %v2647, 64
        %v2717 = vpop.permute.xlu0 %2716
        %2718 = vrot.lane.b32.xlu0 %v2648, 64
        %v2719 = vpop.permute.xlu0 %2718
        %2720 = vrot.lane.b32.xlu0 %v2649, 64
        %v2721 = vpop.permute.xlu0 %2720
        %2722 = vrot.lane.b32.xlu0 %v2650, 64
        %v2723 = vpop.permute.xlu0 %2722
        %2724 = vrot.lane.b32.xlu0 %v2651, 64
        %v2725 = vpop.permute.xlu0 %2724
        %2726 = vrot.lane.b32.xlu0 %v2652, 64
        %v2727 = vpop.permute.xlu0 %2726
        %2728 = vrot.lane.b32.xlu0 %v2653, 64
        %v2729 = vpop.permute.xlu0 %2728
        %2730 = vrot.lane.b32.xlu0 %v2654, 64
        %v2731 = vpop.permute.xlu0 %2730
        %2732 = vrot.lane.b32.xlu0 %v2655, 64
        %v2733 = vpop.permute.xlu0 %2732
        %2734 = vrot.lane.b32.xlu0 %v2656, 64
        %v2735 = vpop.permute.xlu0 %2734
        %2736 = vrot.lane.b32.xlu0 %v2657, 64
        %v2737 = vpop.permute.xlu0 %2736
        %2738 = vrot.lane.b32.xlu0 %v2658, 64
        %v2739 = vpop.permute.xlu0 %2738
        %2740 = vrot.lane.b32.xlu0 %v2659, 64
        %v2741 = vpop.permute.xlu0 %2740
        %2742 = vrot.lane.b32.xlu0 %v2660, 64
        %v2743 = vpop.permute.xlu0 %2742
        %2744 = vrot.lane.b32.xlu0 %v2661, 64
        %v2745 = vpop.permute.xlu0 %2744
        %2746 = vrot.lane.b32.xlu0 %v2662, 64
        %v2747 = vpop.permute.xlu0 %2746
        %2748 = vrot.lane.b32.xlu0 %v2663, 64
        %v2749 = vpop.permute.xlu0 %2748
        %2750 = vrot.lane.b32.xlu0 %v2664, 64
        %v2751 = vpop.permute.xlu0 %2750
        %2752 = vrot.lane.b32.xlu0 %v2665, 64
        %v2753 = vpop.permute.xlu0 %2752
        %2754 = vrot.lane.b32.xlu0 %v2666, 64
        %v2755 = vpop.permute.xlu0 %2754
        %2756 = vrot.lane.b32.xlu0 %v2667, 64
        %v2757 = vpop.permute.xlu0 %2756
        %2758 = vrot.lane.b32.xlu0 %v2668, 64
        %v2759 = vpop.permute.xlu0 %2758
        %2760 = vrot.lane.b32.xlu0 %v2669, 64
        %v2761 = vpop.permute.xlu0 %2760
        %2762 = vrot.lane.b32.xlu0 %v2670, 64
        %v2763 = vpop.permute.xlu0 %2762
        %2764 = vrot.lane.b32.xlu0 %v2671, 64
        %v2765 = vpop.permute.xlu0 %2764
        %2766 = vrot.lane.b32.xlu0 %v2672, 64
        %v2767 = vpop.permute.xlu0 %2766
        %2768 = vrot.lane.b32.xlu0 %v2673, 64
        %v2769 = vpop.permute.xlu0 %2768
        %v2802 = vadd.f32 %v2610, %v2707
        %v2803 = vadd.f32 %v2611, %v2709
        %v2804 = vadd.f32 %v2612, %v2711
        %v2805 = vadd.f32 %v2613, %v2713
        %v2806 = vadd.f32 %v2614, %v2715
        %v2807 = vadd.f32 %v2615, %v2717
        %v2808 = vadd.f32 %v2616, %v2719
        %v2809 = vadd.f32 %v2617, %v2721
        %v2810 = vadd.f32 %v2618, %v2723
        %v2811 = vadd.f32 %v2619, %v2725
        %v2812 = vadd.f32 %v2620, %v2727
        %v2813 = vadd.f32 %v2621, %v2729
        %v2814 = vadd.f32 %v2622, %v2731
        %v2815 = vadd.f32 %v2623, %v2733
        %v2816 = vadd.f32 %v2624, %v2735
        %v2817 = vadd.f32 %v2625, %v2737
        %v2818 = vadd.f32 %v2626, %v2739
        %v2819 = vadd.f32 %v2627, %v2741
        %v2820 = vadd.f32 %v2628, %v2743
        %v2821 = vadd.f32 %v2629, %v2745
        %v2822 = vadd.f32 %v2630, %v2747
        %v2823 = vadd.f32 %v2631, %v2749
        %v2824 = vadd.f32 %v2632, %v2751
        %v2825 = vadd.f32 %v2633, %v2753
        %v2826 = vadd.f32 %v2634, %v2755
        %v2827 = vadd.f32 %v2635, %v2757
        %v2828 = vadd.f32 %v2636, %v2759
        %v2829 = vadd.f32 %v2637, %v2761
        %v2830 = vadd.f32 %v2638, %v2763
        %v2831 = vadd.f32 %v2639, %v2765
        %v2832 = vadd.f32 %v2640, %v2767
        %v2833 = vadd.f32 %v2641, %v2769
        %v2834 = vld [vmem:[%s1560 + $0x8] sm:$0xff]
        %v2835 = vld [vmem:[%s1560 + $0x18] sm:$0xff]
        %v2836 = vld [vmem:[%s1560 + $0x28] sm:$0xff]
        %v2837 = vld [vmem:[%s1560 + $0x38] sm:$0xff]
        %v2838 = vld [vmem:[%s1560 + $0x48] sm:$0xff]
        %v2839 = vld [vmem:[%s1560 + $0x58] sm:$0xff]
        %v2840 = vld [vmem:[%s1560 + $0x68] sm:$0xff]
        %v2841 = vld [vmem:[%s1560 + $0x78] sm:$0xff]
        %v2842 = vld [vmem:[%s1560 + $0x88] sm:$0xff]
        %v2843 = vld [vmem:[%s1560 + $0x98] sm:$0xff]
        %v2844 = vld [vmem:[%s1560 + $0xa8] sm:$0xff]
        %v2845 = vld [vmem:[%s1560 + $0xb8] sm:$0xff]
        %v2846 = vld [vmem:[%s1560 + $0xc8] sm:$0xff]
        %v2847 = vld [vmem:[%s1560 + $0xd8] sm:$0xff]
        %v2848 = vld [vmem:[%s1560 + $0xe8] sm:$0xff]
        %v2849 = vld [vmem:[%s1560 + $0xf8] sm:$0xff]
        %v2850 = vld [vmem:[%s1560 + $0x108] sm:$0xff]
        %v2851 = vld [vmem:[%s1560 + $0x118] sm:$0xff]
        %v2852 = vld [vmem:[%s1560 + $0x128] sm:$0xff]
        %v2853 = vld [vmem:[%s1560 + $0x138] sm:$0xff]
        %v2854 = vld [vmem:[%s1560 + $0x148] sm:$0xff]
        %v2855 = vld [vmem:[%s1560 + $0x158] sm:$0xff]
        %v2856 = vld [vmem:[%s1560 + $0x168] sm:$0xff]
        %v2857 = vld [vmem:[%s1560 + $0x178] sm:$0xff]
        %v2858 = vld [vmem:[%s1560 + $0x188] sm:$0xff]
        %v2859 = vld [vmem:[%s1560 + $0x198] sm:$0xff]
        %v2860 = vld [vmem:[%s1560 + $0x1a8] sm:$0xff]
        %v2861 = vld [vmem:[%s1560 + $0x1b8] sm:$0xff]
        %v2862 = vld [vmem:[%s1560 + $0x1c8] sm:$0xff]
        %v2863 = vld [vmem:[%s1560 + $0x1d8] sm:$0xff]
        %v2864 = vld [vmem:[%s1560 + $0x1e8] sm:$0xff]
        %v2865 = vld [vmem:[%s1560 + $0x1f8] sm:$0xff]
        %v2866 = vadd.f32 %v2802, %v2834
        %v2867 = vadd.f32 %v2803, %v2835
        %v2868 = vadd.f32 %v2804, %v2836
        %v2869 = vadd.f32 %v2805, %v2837
        %v2870 = vadd.f32 %v2806, %v2838
        %v2871 = vadd.f32 %v2807, %v2839
        %v2872 = vadd.f32 %v2808, %v2840
        %v2873 = vadd.f32 %v2809, %v2841
        %v2874 = vadd.f32 %v2810, %v2842
        %v2875 = vadd.f32 %v2811, %v2843
        %v2876 = vadd.f32 %v2812, %v2844
        %v2877 = vadd.f32 %v2813, %v2845
        %v2878 = vadd.f32 %v2814, %v2846
        %v2879 = vadd.f32 %v2815, %v2847
        %v2880 = vadd.f32 %v2816, %v2848
        %v2881 = vadd.f32 %v2817, %v2849
        %v2882 = vadd.f32 %v2818, %v2850
        %v2883 = vadd.f32 %v2819, %v2851
        %v2884 = vadd.f32 %v2820, %v2852
        %v2885 = vadd.f32 %v2821, %v2853
        %v2886 = vadd.f32 %v2822, %v2854
        %v2887 = vadd.f32 %v2823, %v2855
        %v2888 = vadd.f32 %v2824, %v2856
        %v2889 = vadd.f32 %v2825, %v2857
        %v2890 = vadd.f32 %v2826, %v2858
        %v2891 = vadd.f32 %v2827, %v2859
        %v2892 = vadd.f32 %v2828, %v2860
        %v2893 = vadd.f32 %v2829, %v2861
        %v2894 = vadd.f32 %v2830, %v2862
        %v2895 = vadd.f32 %v2831, %v2863
        %v2896 = vadd.f32 %v2832, %v2864
        %v2897 = vadd.f32 %v2833, %v2865
        %v2898 = vld [vmem:[%s187] sm:$0xff]
        %v2899 = vld [vmem:[%s187 + $0x8] sm:$0xff]
        %v2900 = vld [vmem:[%s187 + $0x10] sm:$0xff]
        %v2901 = vld [vmem:[%s187 + $0x18] sm:$0xff]
        %v2902 = vld [vmem:[%s187 + $0x20] sm:$0xff]
        %v2903 = vld [vmem:[%s187 + $0x28] sm:$0xff]
        %v2904 = vld [vmem:[%s187 + $0x30] sm:$0xff]
        %v2905 = vld [vmem:[%s187 + $0x38] sm:$0xff]
        %v2906 = vld [vmem:[%s187 + $0x40] sm:$0xff]
        %v2907 = vld [vmem:[%s187 + $0x48] sm:$0xff]
        %v2908 = vld [vmem:[%s187 + $0x50] sm:$0xff]
        %v2909 = vld [vmem:[%s187 + $0x58] sm:$0xff]
        %v2910 = vld [vmem:[%s187 + $0x60] sm:$0xff]
        %v2911 = vld [vmem:[%s187 + $0x68] sm:$0xff]
        %v2912 = vld [vmem:[%s187 + $0x70] sm:$0xff]
        %v2913 = vld [vmem:[%s187 + $0x78] sm:$0xff]
        %v2914 = vld [vmem:[%s187 + $0x80] sm:$0xff]
        %v2915 = vld [vmem:[%s187 + $0x88] sm:$0xff]
        %v2916 = vld [vmem:[%s187 + $0x90] sm:$0xff]
        %v2917 = vld [vmem:[%s187 + $0x98] sm:$0xff]
        %v2918 = vld [vmem:[%s187 + $0xa0] sm:$0xff]
        %v2919 = vld [vmem:[%s187 + $0xa8] sm:$0xff]
        %v2920 = vld [vmem:[%s187 + $0xb0] sm:$0xff]
        %v2921 = vld [vmem:[%s187 + $0xb8] sm:$0xff]
        %v2922 = vld [vmem:[%s187 + $0xc0] sm:$0xff]
        %v2923 = vld [vmem:[%s187 + $0xc8] sm:$0xff]
        %v2924 = vld [vmem:[%s187 + $0xd0] sm:$0xff]
        %v2925 = vld [vmem:[%s187 + $0xd8] sm:$0xff]
        %v2926 = vld [vmem:[%s187 + $0xe0] sm:$0xff]
        %v2927 = vld [vmem:[%s187 + $0xe8] sm:$0xff]
        %v2928 = vld [vmem:[%s187 + $0xf0] sm:$0xff]
        %v2929 = vld [vmem:[%s187 + $0xf8] sm:$0xff]
        %v2930 = vadd.f32 %v2866, %v2898
        %v2931 = vadd.f32 %v2867, %v2899
        %v2932 = vadd.f32 %v2868, %v2900
        %v2933 = vadd.f32 %v2869, %v2901
        %v2934 = vadd.f32 %v2870, %v2902
        %v2935 = vadd.f32 %v2871, %v2903
        %v2936 = vadd.f32 %v2872, %v2904
        %v2937 = vadd.f32 %v2873, %v2905
        %v2938 = vadd.f32 %v2874, %v2906
        %v2939 = vadd.f32 %v2875, %v2907
        %v2940 = vadd.f32 %v2876, %v2908
        %v2941 = vadd.f32 %v2877, %v2909
        %v2942 = vadd.f32 %v2878, %v2910
        %v2943 = vadd.f32 %v2879, %v2911
        %v2944 = vadd.f32 %v2880, %v2912
        %v2945 = vadd.f32 %v2881, %v2913
        %v2946 = vadd.f32 %v2882, %v2914
        %v2947 = vadd.f32 %v2883, %v2915
        %v2948 = vadd.f32 %v2884, %v2916
        %v2949 = vadd.f32 %v2885, %v2917
        %v2950 = vadd.f32 %v2886, %v2918
        %v2951 = vadd.f32 %v2887, %v2919
        %v2952 = vadd.f32 %v2888, %v2920
        %v2953 = vadd.f32 %v2889, %v2921
        %v2954 = vadd.f32 %v2890, %v2922
        %v2955 = vadd.f32 %v2891, %v2923
        %v2956 = vadd.f32 %v2892, %v2924
        %v2957 = vadd.f32 %v2893, %v2925
        %v2958 = vadd.f32 %v2894, %v2926
        %v2959 = vadd.f32 %v2895, %v2927
        %v2960 = vadd.f32 %v2896, %v2928
        %v2961 = vadd.f32 %v2897, %v2929
        %2962 = vst.msk [vmem:[%s217] sm:$0xff] %vm220, %v2930
        %2963 = vst.msk [vmem:[%s217 + $0x8] sm:$0xff] %vm220, %v2931
        %2964 = vst.msk [vmem:[%s217 + $0x10] sm:$0xff] %vm220, %v2932
        %2965 = vst.msk [vmem:[%s217 + $0x18] sm:$0xff] %vm220, %v2933
        %2966 = vst.msk [vmem:[%s217 + $0x20] sm:$0xff] %vm220, %v2934
        %2967 = vst.msk [vmem:[%s217 + $0x28] sm:$0xff] %vm220, %v2935
        %2968 = vst.msk [vmem:[%s217 + $0x30] sm:$0xff] %vm220, %v2936
        %2969 = vst.msk [vmem:[%s217 + $0x38] sm:$0xff] %vm220, %v2937
        %2970 = vst.msk [vmem:[%s217 + $0x40] sm:$0xff] %vm220, %v2938
        %2971 = vst.msk [vmem:[%s217 + $0x48] sm:$0xff] %vm220, %v2939
        %2972 = vst.msk [vmem:[%s217 + $0x50] sm:$0xff] %vm220, %v2940
        %2973 = vst.msk [vmem:[%s217 + $0x58] sm:$0xff] %vm220, %v2941
        %2974 = vst.msk [vmem:[%s217 + $0x60] sm:$0xff] %vm220, %v2942
        %2975 = vst.msk [vmem:[%s217 + $0x68] sm:$0xff] %vm220, %v2943
        %2976 = vst.msk [vmem:[%s217 + $0x70] sm:$0xff] %vm220, %v2944
        %2977 = vst.msk [vmem:[%s217 + $0x78] sm:$0xff] %vm220, %v2945
        %2978 = vst.msk [vmem:[%s217 + $0x80] sm:$0xff] %vm220, %v2946
        %2979 = vst.msk [vmem:[%s217 + $0x88] sm:$0xff] %vm220, %v2947
        %2980 = vst.msk [vmem:[%s217 + $0x90] sm:$0xff] %vm220, %v2948
        %2981 = vst.msk [vmem:[%s217 + $0x98] sm:$0xff] %vm220, %v2949
        %2982 = vst.msk [vmem:[%s217 + $0xa0] sm:$0xff] %vm220, %v2950
        %2983 = vst.msk [vmem:[%s217 + $0xa8] sm:$0xff] %vm220, %v2951
        %2984 = vst.msk [vmem:[%s217 + $0xb0] sm:$0xff] %vm220, %v2952
        %2985 = vst.msk [vmem:[%s217 + $0xb8] sm:$0xff] %vm220, %v2953
        %2986 = vst.msk [vmem:[%s217 + $0xc0] sm:$0xff] %vm220, %v2954
        %2987 = vst.msk [vmem:[%s217 + $0xc8] sm:$0xff] %vm220, %v2955
        %2988 = vst.msk [vmem:[%s217 + $0xd0] sm:$0xff] %vm220, %v2956
        %2989 = vst.msk [vmem:[%s217 + $0xd8] sm:$0xff] %vm220, %v2957
        %2990 = vst.msk [vmem:[%s217 + $0xe0] sm:$0xff] %vm220, %v2958
        %2991 = vst.msk [vmem:[%s217 + $0xe8] sm:$0xff] %vm220, %v2959
        %2992 = vst.msk [vmem:[%s217 + $0xf0] sm:$0xff] %vm220, %v2960
        %2993 = vst.msk [vmem:[%s217 + $0xf8] sm:$0xff] %vm220, %v2961
        %s2994 = sand.u32 %s97, 1
        %s2995 = scalar_lea.sflag [#allocation6], %s2994
        %s2996 = sand.u32 %s97, 1
        %s2997 = smul.addr %s2996, 256
        %s2998 = scalar_lea.vmem [#allocation10], %s2997
        // Predicated region
        $region45: #{tpu_custom_call.1} parent=31 // pred_check
          %p2999 = pneg %p107
        $region46: #{tpu_custom_call.1} parent=31 // pred_check_branch
          %3001 = sbr.rel (%p2999) target = $region48
        $region47: #{tpu_custom_call.1} parent=31 // pred_region
          %s3003 = ssub.s32 4096, 4096
          %3004 = vsyncadd %s2995, %s3003
          %s3005 = smul.addr %s21, 32
          %s3006 = smul.addr %s3005, 128
          %s3007 = scalar_lea.hbm %s3, %s3006
          %s3008 = sshll.u32 %s2998, 4
          %s3009 = int_to_ptr.vmem [resolvable:$true] %s3008
          %3014 = dma.vmem_to_hbm [thread:$0]  %s3009, 4096, %s3007, %s2995, 128, 128, 8
        $region48: #{tpu_custom_call.1} parent=31 // pred_fallthru
          _
      $region32: #{tpu_custom_call.1} parent=5 // pred_fallthru
        _
      %p3015 = scmp.le.s32.totalorder 2, %s16
      // Predicated region
      $region49: #{tpu_custom_call.1} parent=5 // pred_check
        %p3016 = pneg %p3015
      $region50: #{tpu_custom_call.1} parent=5 // pred_check_branch
        %3018 = sbr.rel (%p3016) target = $region52
      $region51: #{tpu_custom_call.1} parent=5 // pred_region
        %s3019 = ssub.s32 %s16, 2
        // Predicated region
        $region53: #{tpu_custom_call.1} parent=51 // pred_check
          %p3020 = pneg %p113
        $region54: #{tpu_custom_call.1} parent=51 // pred_check_branch
          %3022 = sbr.rel (%p3020) target = $region56
        $region55: #{tpu_custom_call.1} parent=51 // pred_region
          %s3023 = sand.u32 %s98, 1
          %s3024 = scalar_lea.sflag [#allocation6], %s3023
          %s3025 = sand.u32 %s98, 1
          %s3026 = smul.addr %s3025, 256
          %s3027 = scalar_lea.vmem [#allocation10], %s3026
          %3028 = dma.done %s3024, 4096
        $region56: #{tpu_custom_call.1} parent=51 // pred_fallthru
          _
      $region52: #{tpu_custom_call.1} parent=5 // pred_fallthru
        _
    $region6: #{tpu_custom_call.1} parent=1 // loop_footer
      %s20 = sadd.s32 1, %s16
    $region7: #{tpu_custom_call.1} parent=1 // loop_footer_branch
      %15 = sbr.rel target = $region3
    $region8: #{tpu_custom_call.1} parent=1 // loop_exit
      _
    %3029 = vsyncpa [#allocation5], 1
    %s3030 = scalar_lea.sflag [#allocation5], 1
    %3031 = vsyncpa %s3030, 1
    %3032 = vsyncpa [#allocation8], 1
    %3033 = vsyncpa [#allocation6], 1
    %s3034 = scalar_lea.sflag [#allocation6], 1
    %3035 = vsyncpa %s3034, 1

</llo_original>
